<compile_context>
chip_gen: v5e
topology: v5e:2x2
jax: 0.10.0
libtpu: 0.0.40
codegen_flags: <defaults>
</compile_context>

<pallas_src>
import functools

import jax
import jax.numpy as jnp
from jax.experimental import pallas as pl
from jax.experimental.pallas import tpu as pltpu

_TD = 128  # dst/src row tile (sublane dim); all lane dims are padded to 128 below.


def _vmem():
    return pl.BlockSpec(memory_space=pltpu.MemorySpace.VMEM)


def _round_up(x, m):
    return (x + m - 1) // m * m


def _pad2(x, rows, cols, dtype=None):
    """Zero-pad a 2-D array to (rows, cols), optionally casting dtype."""
    r, c = x.shape
    out = jnp.zeros((rows, cols), x.dtype if dtype is None else dtype)
    return out.at[:r, :c].set(x.astype(out.dtype))


# --------------------------- fused forward kernel -----------------------------------
def _fused_forward_kernel(n_layers, src_pad, dst_pad, e_pad, *refs):
    """
    refs layout:
      inputs : feat(bf16), proj_wt(bf16), emb+bias(f32),
               [adj(bf16, HBM/ANY), qt(bf16), qb(f32), w1(bf16), w2(bf16), wb(f32)] * L,
               sel(4*E_pad, B_pad bf16 one-hot), bias_delta(1, E_pad f32)
      output : loss(1, E_pad f32)
      scratch: h(bf16), h_dst(bf16), n_src(bf16), per-layer adj double buffers (bf16),
               DMA semaphores (L, 2)
    """
    n_in = 3 + 6 * n_layers + 2
    feat_ref, wt_ref, emb_ref = refs[0:3]
    layer_refs = refs[3:3 + 6 * n_layers]
    sel_ref = refs[3 + 6 * n_layers]
    bdelta_ref = refs[4 + 6 * n_layers]
    out_ref = refs[n_in]
    h_ref, hdst_ref, nsrc_ref = refs[n_in + 1:n_in + 4]
    adj_bufs = refs[n_in + 4:n_in + 4 + n_layers]
    sem = refs[n_in + 4 + n_layers]

    n0_pad = src_pad[0]
    b_pad = dst_pad[-1]

    # ---- LinearProjector: h0 = feat @ Wp + (emb + proj_b), tiled over source rows.
    # proj bias is folded into emb on host so padded rows of h0 are exactly zero.
    for t in range(n0_pad // _TD):
        r = slice(t * _TD, (t + 1) * _TD)
        h0 = jnp.dot(feat_ref[r, :], wt_ref[...],
                     preferred_element_type=jnp.float32) + emb_ref[r, :]
        h_ref[r, :] = h0.astype(jnp.bfloat16)
    # dst (batch) nodes are the FIRST |dst| src nodes -> projection of dstdata == prefix rows.
    hdst_ref[...] = h_ref[:b_pad, :]

    # ---- SAGENet: n_layers of WeightedSAGEConv, h resident (bf16) in VMEM ----
    for l in range(n_layers):
        adj_hbm, qt_ref, qb_ref, w1_ref, w2_ref, wb_ref = layer_refs[6 * l:6 * l + 6]
        ns, nd = src_pad[l], dst_pad[l]
        abuf = adj_bufs[l]
        nt = nd // _TD

        def adj_copy(t, slot, _adj=adj_hbm, _abuf=abuf, _l=l):
            return pltpu.make_async_copy(
                _adj.at[pl.ds(t * _TD, _TD), :],   # (TD, ns) dst-row tile in HBM
                _abuf.at[slot],
                sem.at[_l, slot])

        adj_copy(0, 0).start()   # overlap the first adj tile DMA with the Qh matmuls

        # n_src = relu(Q h_src + qb), tiled over src rows, kept bf16 in VMEM.
        for t in range(ns // _TD):
            r = slice(t * _TD, (t + 1) * _TD)
            v = jnp.dot(h_ref[r, :], qt_ref[...],
                        preferred_element_type=jnp.float32) + qb_ref[...]
            nsrc_ref[r, :] = jnp.maximum(v, 0.0).astype(jnp.bfloat16)

        # Aggregate + combine, streaming row-normalized adj tiles from HBM
        # (double-buffered manual DMA).
        for t in range(nt):
            slot = t & 1
            adj_copy(t, slot).wait()
            if t + 1 < nt:
                adj_copy(t + 1, 1 - slot).start()
            r = slice(t * _TD, (t + 1) * _TD)
            # adj rows were pre-divided by clamp(rowsum,1) on host -> plain matmul here.
            n_all = jnp.dot(abuf[slot], nsrc_ref[:ns, :],
                            preferred_element_type=jnp.float32)          # (TD, D) f32
            z = (jnp.dot(n_all.astype(jnp.bfloat16), w1_ref[...],
                         preferred_element_type=jnp.float32)
                 + jnp.dot(h_ref[r, :], w2_ref[...],
                           preferred_element_type=jnp.float32)
                 + wb_ref[...])
            z = jnp.maximum(z, 0.0)
            # L2 normalize (EUP rsqrt); ||z|| <= 1 so bf16 writeback is safe.
            z = z * jax.lax.rsqrt(jnp.sum(z * z, axis=-1, keepdims=True) + 1e-12)
            h_ref[r, :] = z.astype(jnp.bfloat16)

    # ---- ItemToItemScorer on pos/neg graphs + margin hinge ----
    hf = hdst_ref[...].astype(jnp.float32) + h_ref[:b_pad, :].astype(jnp.float32)
    hh = jnp.dot(sel_ref[...], hf.astype(jnp.bfloat16),
                 preferred_element_type=jnp.float32)                     # (4*E_pad, D)
    h_pu = hh[0 * e_pad:1 * e_pad, :]
    h_pv = hh[1 * e_pad:2 * e_pad, :]
    h_nu = hh[2 * e_pad:3 * e_pad, :]
    h_nv = hh[3 * e_pad:4 * e_pad, :]
    diff = h_nu * h_nv - h_pu * h_pv                                     # (E_pad, D) f32

    # Lane reduction on the MXU -> lane-dense (1, E_pad) result (no (E,1) masked stores).
    ones_row = jnp.ones((1, diff.shape[1]), jnp.float32)
    delta = jax.lax.dot_general(ones_row, diff,
                                dimension_numbers=(((1,), (1,)), ((), ())),
                                preferred_element_type=jnp.float32)      # (1, E_pad)

    out_ref[...] = jnp.maximum(delta + bdelta_ref[...] + 1.0, 0.0)


# --------------------------- parameters + forward wrapper ---------------------------
def init_params(key, feat_dim, hidden_dims, n_layers, n_nodes):
    ks = jax.random.split(key, 3 + 2 * n_layers)
    params = {
        # LinearProjector: nn.Linear(feat_dim, hidden) stored transposed + id Embedding
        "proj_wt": 0.1 * jax.random.normal(ks[0], (feat_dim, hidden_dims), jnp.float32),
        "proj_b": 0.1 * jax.random.normal(ks[1], (1, hidden_dims), jnp.float32),
        "emb": 0.1 * jax.random.normal(ks[2], (n_nodes, hidden_dims), jnp.float32),
        # ItemToItemScorer bias = zeros(n_nodes)  (matches nn.Parameter(torch.zeros(...)))
        "scorer_bias": jnp.zeros((n_nodes,), jnp.float32),
        "sage": [],
    }
    for l in range(n_layers):
        kq, kw = ks[3 + 2 * l], ks[4 + 2 * l]
        w_full = 0.1 * jax.random.normal(kw, (2 * hidden_dims, hidden_dims), jnp.float32)
        params["sage"].append({
            "qt": 0.1 * jax.random.normal(kq, (hidden_dims, hidden_dims), jnp.float32),
            "qb": jnp.zeros((1, hidden_dims), jnp.float32),
            "w1": w_full[:hidden_dims],        # acts on n/ws
            "w2": w_full[hidden_dims:],        # acts on h_dst
            "wb": jnp.zeros((1, hidden_dims), jnp.float32),
        })
    return params


def pinsage_forward(params, feat0, ids0, adjs, pos_edges, neg_edges, n_items):
    """Equivalent of PinSAGEModel.forward(pos_graph, neg_graph, blocks)."""
    n0, f_real = feat0.shape
    d_real = params["proj_wt"].shape[1]
    n_layers = len(params["sage"])
    assert n0 == adjs[0].shape[1]

    # Lane-dense padding: all lane dims (and sublane node counts) to 128.
    f_pad = _round_up(max(f_real, 1), 128)
    d_pad = _round_up(d_real, 128)             # no reserved ones-lane anymore
    e = pos_edges[0].shape[0]
    e_pad = _round_up(e, 128)

    src_pad = tuple(_round_up(a.shape[1], _TD) for a in adjs)
    dst_pad = tuple(_round_up(a.shape[0], _TD) for a in adjs)
    n0_pad, b_pad = src_pad[0], dst_pad[-1]

    # ---- projector inputs (bf16 MXU operands; proj bias folded into embedding rows) ----
    feat_p = _pad2(feat0, n0_pad, f_pad, jnp.bfloat16)
    wt_p = _pad2(params["proj_wt"], f_pad, d_pad, jnp.bfloat16)
    emb_rows = params["emb"][ids0] + params["proj_b"]          # gather (small table, host glue)
    emb_p = _pad2(emb_rows, n0_pad, d_pad)

    # ---- per-layer inputs: row-normalized adj (stays in HBM, streamed) + weights ----
    layer_args = []
    for lp, adj, ns_p, nd_p in zip(params["sage"], adjs, src_pad, dst_pad):
        ws = jnp.maximum(jnp.sum(adj, axis=1, keepdims=True), 1.0)
        layer_args += [
            _pad2(adj / ws, nd_p, ns_p, jnp.bfloat16),   # (A/ws)@n == (A@n)/ws exactly
            _pad2(lp["qt"], d_pad, d_pad, jnp.bfloat16),
            _pad2(lp["qb"], 1, d_pad),
            _pad2(lp["w1"], d_pad, d_pad, jnp.bfloat16),
            _pad2(lp["w2"], d_pad, d_pad, jnp.bfloat16),
            _pad2(lp["wb"], 1, d_pad),
        ]

    # ---- scorer inputs: stacked one-hot edge selectors + bias delta ----
    pu, pv = pos_edges
    nu, nv = neg_edges

    def sel_mat(idx):
        return _pad2(jax.nn.one_hot(idx, b_pad, dtype=jnp.bfloat16), e_pad, b_pad,
                     jnp.bfloat16)

    sel = jnp.concatenate([sel_mat(pu), sel_mat(pv), sel_mat(nu), sel_mat(nv)], axis=0)

    nid = ids0[:n_items]
    bias = params["scorer_bias"]
    bd = (bias[nid[nu]] + bias[nid[nv]]) - (bias[nid[pu]] + bias[nid[pv]])   # (E,)
    bd_p = jnp.zeros((1, e_pad), jnp.float32).at[0, :e].set(bd)

    # ---- specs / scratch ----
    in_specs = [_vmem(), _vmem(), _vmem()]
    for _ in range(n_layers):
        in_specs += [pl.BlockSpec(memory_space=pl.ANY)] + [_vmem()] * 5
    in_specs += [_vmem(), _vmem()]

    scratch_shapes = [
        pltpu.VMEM((n0_pad, d_pad), jnp.bfloat16),   # h, resident across layers
        pltpu.VMEM((b_pad, d_pad), jnp.bfloat16),    # h_item_dst
        pltpu.VMEM((n0_pad, d_pad), jnp.bfloat16),   # n_src = relu(Q h)
    ]
    for ns_p in src_pad:
        scratch_shapes.append(pltpu.VMEM((2, _TD, ns_p), jnp.bfloat16))  # adj double buffer
    scratch_shapes.append(pltpu.SemaphoreType.DMA((n_layers, 2)))

    # Explicit scoped-VMEM budget: resident inputs + scratch, 2x margin, clamped to 64 MiB.
    def _nbytes(a):
        return int(a.size) * a.dtype.itemsize
    resident = ([feat_p, wt_p, emb_p, sel, bd_p]
                + [x for i, x in enumerate(layer_args) if i % 6 != 0])
    scratch_bytes = (2 * n0_pad * d_pad + b_pad * d_pad) * 2 \
        + sum(2 * _TD * ns_p * 2 for ns_p in src_pad)
    vmem_bytes = int(min(max(2 * (sum(_nbytes(a) for a in resident) + scratch_bytes)
                             + (4 << 20), 32 << 20), 64 << 20))

    kernel = functools.partial(_fused_forward_kernel, n_layers, src_pad, dst_pad, e_pad)
    loss_row = pl.pallas_call(
        kernel,
        out_shape=jax.ShapeDtypeStruct((1, e_pad), jnp.float32),
        in_specs=in_specs,
        out_specs=_vmem(),
        scratch_shapes=scratch_shapes,
        compiler_params=pltpu.CompilerParams(vmem_limit_bytes=vmem_bytes),
    )(feat_p, wt_p, emb_p, *layer_args, sel, bd_p)

    return loss_row[0, :e]                                 # (E,) per-edge hinge loss


if __name__ == "__main__":
    # small synthetic "batch": 2 PinSAGE blocks, 8 target items
    HIDDEN = 32      # hidden_dims
    N_LAYERS = 2
    FEAT = 16        # raw item feature dim handled by LinearProjector
    N0, N1, B = 32, 16, 8   # block0 src, block0 dst (= block1 src), block1 dst (= batch items)
    N_NODES = 100    # nodes in the full item graph (id-embedding / scorer bias)
    E = 8            # edges in pos_graph / neg_graph

    key = jax.random.PRNGKey(0)
    kparam, kfeat, kid, ka0, ka1, kpe, kne = jax.random.split(key, 7)

    params = init_params(kparam, FEAT, HIDDEN, N_LAYERS, N_NODES)

    feat0 = jax.random.normal(kfeat, (N0, FEAT), jnp.float32)         # blocks[0].srcdata feature
    ids0 = jax.random.randint(kid, (N0,), 0, N_NODES)                 # blocks[0].srcdata[dgl.NID]
    # dense weighted adjacency per block (0 = no edge; weights = random-walk counts)
    adj0 = jax.random.randint(ka0, (N1, N0), 0, 4).astype(jnp.float32)
    adj1 = jax.random.randint(ka1, (B, N1), 0, 4).astype(jnp.float32)

    pos_src = jax.random.randint(kpe, (E,), 0, B)
    pos_dst = (pos_src + 1) % B
    neg_src = pos_src
    neg_dst = jax.random.randint(kne, (E,), 0, B)

    out = pinsage_forward(params, feat0, ids0, [adj0, adj1],
                          (pos_src, pos_dst), (neg_src, neg_dst), B)
    out = jax.block_until_ready(out)
    assert out.shape == (E,) and bool(jnp.all(out >= 0.0))
    print("KERNEL_OK")
</pallas_src>

<mosaic_0001>
module attributes {stable_mosaic.version = 11 : i64} {
  func.func @_fused_forward_kernel(%arg0: memref<128x128xbf16, #tpu.memory_space<vmem>>, %arg1: memref<128x128xbf16, #tpu.memory_space<vmem>>, %arg2: memref<128x128xf32, #tpu.memory_space<vmem>>, %arg3: memref<128x128xbf16, #tpu.memory_space<any>>, %arg4: memref<128x128xbf16, #tpu.memory_space<vmem>>, %arg5: memref<1x128xf32, #tpu.memory_space<vmem>>, %arg6: memref<128x128xbf16, #tpu.memory_space<vmem>>, %arg7: memref<128x128xbf16, #tpu.memory_space<vmem>>, %arg8: memref<1x128xf32, #tpu.memory_space<vmem>>, %arg9: memref<128x128xbf16, #tpu.memory_space<any>>, %arg10: memref<128x128xbf16, #tpu.memory_space<vmem>>, %arg11: memref<1x128xf32, #tpu.memory_space<vmem>>, %arg12: memref<128x128xbf16, #tpu.memory_space<vmem>>, %arg13: memref<128x128xbf16, #tpu.memory_space<vmem>>, %arg14: memref<1x128xf32, #tpu.memory_space<vmem>>, %arg15: memref<512x128xbf16, #tpu.memory_space<vmem>>, %arg16: memref<1x128xf32, #tpu.memory_space<vmem>>, %arg17: memref<1x128xf32, #tpu.memory_space<vmem>>, %arg18: memref<128x128xbf16, #tpu.memory_space<vmem>>, %arg19: memref<128x128xbf16, #tpu.memory_space<vmem>>, %arg20: memref<128x128xbf16, #tpu.memory_space<vmem>>, %arg21: memref<2x128x128xbf16, #tpu.memory_space<vmem>>, %arg22: memref<2x128x128xbf16, #tpu.memory_space<vmem>>, %arg23: memref<2x2x!tpu.dma_semaphore, #tpu.memory_space<semaphore_mem>>) attributes {dimension_semantics = [], scalar_prefetch = 0 : i64, scratch_operands = 6 : i64, tpu.core_type = #tpu.core_type<tc>} {
    %c0 = arith.constant 0 : index
    %c0_0 = arith.constant 0 : index
    %0 = vector.load %arg0[%c0, %c0_0] : memref<128x128xbf16, #tpu.memory_space<vmem>>, vector<128x128xbf16>
    %c0_1 = arith.constant 0 : index
    %c0_2 = arith.constant 0 : index
    %1 = vector.load %arg1[%c0_1, %c0_2] : memref<128x128xbf16, #tpu.memory_space<vmem>>, vector<128x128xbf16>
    %cst = arith.constant dense<0.000000e+00> : vector<128x128xf32>
    %2 = tpu.matmul %0, %1, %cst {dimension_numbers = #tpu.dot_dimension_numbers<[1], [0], [0], [1], [0, 0, 1, 1], [], []>} : vector<128x128xbf16>, vector<128x128xbf16>, vector<128x128xf32> -> vector<128x128xf32>
    %c0_3 = arith.constant 0 : index
    %c0_4 = arith.constant 0 : index
    %3 = vector.load %arg2[%c0_3, %c0_4] : memref<128x128xf32, #tpu.memory_space<vmem>>, vector<128x128xf32>
    %4 = arith.addf %2, %3 : vector<128x128xf32>
    %5 = arith.truncf %4 : vector<128x128xf32> to vector<128x128xbf16>
    %c0_5 = arith.constant 0 : index
    %c0_6 = arith.constant 0 : index
    %6 = vector.load %arg18[%c0_5, %c0_6] : memref<128x128xbf16, #tpu.memory_space<vmem>>, vector<128x128xbf16>
    tpu.vector_store %arg18[%c0_5, %c0_6], %5 {strides = array<i32>} : memref<128x128xbf16, #tpu.memory_space<vmem>>, vector<128x128xbf16>,
    %c0_7 = arith.constant 0 : index
    %c0_8 = arith.constant 0 : index
    %7 = vector.load %arg18[%c0_7, %c0_8] : memref<128x128xbf16, #tpu.memory_space<vmem>>, vector<128x128xbf16>
    %c0_9 = arith.constant 0 : index
    %c0_10 = arith.constant 0 : index
    %8 = vector.load %arg19[%c0_9, %c0_10] : memref<128x128xbf16, #tpu.memory_space<vmem>>, vector<128x128xbf16>
    tpu.vector_store %arg19[%c0_9, %c0_10], %7 {strides = array<i32>} : memref<128x128xbf16, #tpu.memory_space<vmem>>, vector<128x128xbf16>,
    %c0_i32 = arith.constant 0 : i32
    %c0_i32_11 = arith.constant 0 : i32
    %c0_i32_12 = arith.constant 0 : i32
    %c0_i32_13 = arith.constant 0 : i32
    %c0_i32_14 = arith.constant 0 : i32
    %9 = tpu.memref_slice %arg3[%c0_i32_13, %c0_i32_14] : memref<128x128xbf16, #tpu.memory_space<any>> -> memref<128x128xbf16, #tpu.memory_space<any>>
    %c0_i32_15 = arith.constant 0 : i32
    %c0_i32_16 = arith.constant 0 : i32
    %10 = tpu.memref_slice %arg21[%c0_i32, %c0_i32_15, %c0_i32_16] : memref<2x128x128xbf16, #tpu.memory_space<vmem>> -> memref<1x128x128xbf16, #tpu.memory_space<vmem>>
    %11 = tpu.memref_squeeze %10 : memref<1x128x128xbf16, #tpu.memory_space<vmem>> -> memref<128x128xbf16, #tpu.memory_space<vmem>>
    %12 = tpu.memref_slice %arg23[%c0_i32_11, %c0_i32_12] : memref<2x2x!tpu.dma_semaphore, #tpu.memory_space<semaphore_mem>> -> memref<1x1x!tpu.dma_semaphore, #tpu.memory_space<semaphore_mem>>
    %13 = tpu.memref_squeeze %12 : memref<1x1x!tpu.dma_semaphore, #tpu.memory_space<semaphore_mem>> -> memref<!tpu.dma_semaphore, #tpu.memory_space<semaphore_mem>>
    tpu.enqueue_dma source(%9 : memref<128x128xbf16, #tpu.memory_space<any>>) target(%11 : memref<128x128xbf16, #tpu.memory_space<vmem>>) target_semaphore(%13 : memref<!tpu.dma_semaphore, #tpu.memory_space<semaphore_mem>>)
    %c0_17 = arith.constant 0 : index
    %c0_18 = arith.constant 0 : index
    %14 = vector.load %arg18[%c0_17, %c0_18] : memref<128x128xbf16, #tpu.memory_space<vmem>>, vector<128x128xbf16>
    %c0_19 = arith.constant 0 : index
    %c0_20 = arith.constant 0 : index
    %15 = vector.load %arg4[%c0_19, %c0_20] : memref<128x128xbf16, #tpu.memory_space<vmem>>, vector<128x128xbf16>
    %cst_21 = arith.constant dense<0.000000e+00> : vector<128x128xf32>
    %16 = tpu.matmul %14, %15, %cst_21 {dimension_numbers = #tpu.dot_dimension_numbers<[1], [0], [0], [1], [0, 0, 1, 1], [], []>} : vector<128x128xbf16>, vector<128x128xbf16>, vector<128x128xf32> -> vector<128x128xf32>
    %c0_22 = arith.constant 0 : index
    %c0_23 = arith.constant 0 : index
    %17 = vector.load %arg5[%c0_22, %c0_23] : memref<1x128xf32, #tpu.memory_space<vmem>>, vector<1x128xf32>
    %18 = vector.broadcast %17 : vector<1x128xf32> to vector<128x128xf32>
    %19 = arith.addf %16, %18 : vector<128x128xf32>
    %cst_24 = arith.constant 0.000000e+00 : f32
    %20 = vector.broadcast %cst_24 : f32 to vector<128x128xf32>
    %21 = arith.maximumf %19, %20 : vector<128x128xf32>
    %22 = arith.truncf %21 : vector<128x128xf32> to vector<128x128xbf16>
    %c0_25 = arith.constant 0 : index
    %c0_26 = arith.constant 0 : index
    %23 = vector.load %arg20[%c0_25, %c0_26] : memref<128x128xbf16, #tpu.memory_space<vmem>>, vector<128x128xbf16>
    tpu.vector_store %arg20[%c0_25, %c0_26], %22 {strides = array<i32>} : memref<128x128xbf16, #tpu.memory_space<vmem>>, vector<128x128xbf16>,
    %c0_i32_27 = arith.constant 0 : i32
    %c0_i32_28 = arith.constant 0 : i32
    %c0_i32_29 = arith.constant 0 : i32
    %c0_i32_30 = arith.constant 0 : i32
    %c0_i32_31 = arith.constant 0 : i32
    %24 = tpu.memref_slice %arg3[%c0_i32_30, %c0_i32_31] : memref<128x128xbf16, #tpu.memory_space<any>> -> memref<128x128xbf16, #tpu.memory_space<any>>
    %c0_i32_32 = arith.constant 0 : i32
    %c0_i32_33 = arith.constant 0 : i32
    %25 = tpu.memref_slice %arg21[%c0_i32_27, %c0_i32_32, %c0_i32_33] : memref<2x128x128xbf16, #tpu.memory_space<vmem>> -> memref<1x128x128xbf16, #tpu.memory_space<vmem>>
    %26 = tpu.memref_squeeze %25 : memref<1x128x128xbf16, #tpu.memory_space<vmem>> -> memref<128x128xbf16, #tpu.memory_space<vmem>>
    %27 = tpu.memref_slice %arg23[%c0_i32_28, %c0_i32_29] : memref<2x2x!tpu.dma_semaphore, #tpu.memory_space<semaphore_mem>> -> memref<1x1x!tpu.dma_semaphore, #tpu.memory_space<semaphore_mem>>
    %28 = tpu.memref_squeeze %27 : memref<1x1x!tpu.dma_semaphore, #tpu.memory_space<semaphore_mem>> -> memref<!tpu.dma_semaphore, #tpu.memory_space<semaphore_mem>>
    tpu.wait_dma2 semaphore(%28 : memref<!tpu.dma_semaphore, #tpu.memory_space<semaphore_mem>>) src(%24 : memref<128x128xbf16, #tpu.memory_space<any>>) dst(%26 : memref<128x128xbf16, #tpu.memory_space<vmem>>)
    %c0_34 = arith.constant 0 : index
    %c0_35 = arith.constant 0 : index
    %c0_36 = arith.constant 0 : index
    %29 = vector.load %arg21[%c0_34, %c0_35, %c0_36] : memref<2x128x128xbf16, #tpu.memory_space<vmem>>, vector<1x128x128xbf16>
    %30 = vector.shape_cast %29 : vector<1x128x128xbf16> to vector<128x128xbf16>
    %c0_37 = arith.constant 0 : index
    %c0_38 = arith.constant 0 : index
    %31 = vector.load %arg20[%c0_37, %c0_38] : memref<128x128xbf16, #tpu.memory_space<vmem>>, vector<128x128xbf16>
    %cst_39 = arith.constant dense<0.000000e+00> : vector<128x128xf32>
    %32 = tpu.matmul %30, %31, %cst_39 {dimension_numbers = #tpu.dot_dimension_numbers<[1], [0], [0], [1], [0, 0, 1, 1], [], []>} : vector<128x128xbf16>, vector<128x128xbf16>, vector<128x128xf32> -> vector<128x128xf32>
    %33 = arith.truncf %32 : vector<128x128xf32> to vector<128x128xbf16>
    %c0_40 = arith.constant 0 : index
    %c0_41 = arith.constant 0 : index
    %34 = vector.load %arg6[%c0_40, %c0_41] : memref<128x128xbf16, #tpu.memory_space<vmem>>, vector<128x128xbf16>
    %cst_42 = arith.constant dense<0.000000e+00> : vector<128x128xf32>
    %35 = tpu.matmul %33, %34, %cst_42 {dimension_numbers = #tpu.dot_dimension_numbers<[1], [0], [0], [1], [0, 0, 1, 1], [], []>} : vector<128x128xbf16>, vector<128x128xbf16>, vector<128x128xf32> -> vector<128x128xf32>
    %c0_43 = arith.constant 0 : index
    %c0_44 = arith.constant 0 : index
    %36 = vector.load %arg18[%c0_43, %c0_44] : memref<128x128xbf16, #tpu.memory_space<vmem>>, vector<128x128xbf16>
    %c0_45 = arith.constant 0 : index
    %c0_46 = arith.constant 0 : index
    %37 = vector.load %arg7[%c0_45, %c0_46] : memref<128x128xbf16, #tpu.memory_space<vmem>>, vector<128x128xbf16>
    %cst_47 = arith.constant dense<0.000000e+00> : vector<128x128xf32>
    %38 = tpu.matmul %36, %37, %cst_47 {dimension_numbers = #tpu.dot_dimension_numbers<[1], [0], [0], [1], [0, 0, 1, 1], [], []>} : vector<128x128xbf16>, vector<128x128xbf16>, vector<128x128xf32> -> vector<128x128xf32>
    %39 = arith.addf %35, %38 : vector<128x128xf32>
    %c0_48 = arith.constant 0 : index
    %c0_49 = arith.constant 0 : index
    %40 = vector.load %arg8[%c0_48, %c0_49] : memref<1x128xf32, #tpu.memory_space<vmem>>, vector<1x128xf32>
    %41 = vector.broadcast %40 : vector<1x128xf32> to vector<128x128xf32>
    %42 = arith.addf %39, %41 : vector<128x128xf32>
    %cst_50 = arith.constant 0.000000e+00 : f32
    %43 = vector.broadcast %cst_50 : f32 to vector<128x128xf32>
    %44 = arith.maximumf %42, %43 : vector<128x128xf32>
    %45 = arith.mulf %44, %44 : vector<128x128xf32>
    %cst_51 = arith.constant dense<0.000000e+00> : vector<128xf32>
    %46 = vector.multi_reduction <add>, %45, %cst_51 [1] : vector<128x128xf32> to vector<128xf32>
    %47 = vector.shape_cast %46 : vector<128xf32> to vector<128x1xf32>
    %cst_52 = arith.constant 9.99999996E-13 : f32
    %48 = vector.broadcast %cst_52 : f32 to vector<128x1xf32>
    %49 = arith.addf %47, %48 : vector<128x1xf32>
    %50 = math.rsqrt %49 : vector<128x1xf32>
    %51 = vector.broadcast %50 : vector<128x1xf32> to vector<128x128xf32>
    %52 = arith.mulf %44, %51 : vector<128x128xf32>
    %53 = arith.truncf %52 : vector<128x128xf32> to vector<128x128xbf16>
    %c0_53 = arith.constant 0 : index
    %c0_54 = arith.constant 0 : index
    %54 = vector.load %arg18[%c0_53, %c0_54] : memref<128x128xbf16, #tpu.memory_space<vmem>>, vector<128x128xbf16>
    tpu.vector_store %arg18[%c0_53, %c0_54], %53 {strides = array<i32>} : memref<128x128xbf16, #tpu.memory_space<vmem>>, vector<128x128xbf16>,
    %c0_i32_55 = arith.constant 0 : i32
    %c1_i32 = arith.constant 1 : i32
    %c0_i32_56 = arith.constant 0 : i32
    %c0_i32_57 = arith.constant 0 : i32
    %c0_i32_58 = arith.constant 0 : i32
    %55 = tpu.memref_slice %arg9[%c0_i32_57, %c0_i32_58] : memref<128x128xbf16, #tpu.memory_space<any>> -> memref<128x128xbf16, #tpu.memory_space<any>>
    %c0_i32_59 = arith.constant 0 : i32
    %c0_i32_60 = arith.constant 0 : i32
    %56 = tpu.memref_slice %arg22[%c0_i32_55, %c0_i32_59, %c0_i32_60] : memref<2x128x128xbf16, #tpu.memory_space<vmem>> -> memref<1x128x128xbf16, #tpu.memory_space<vmem>>
    %57 = tpu.memref_squeeze %56 : memref<1x128x128xbf16, #tpu.memory_space<vmem>> -> memref<128x128xbf16, #tpu.memory_space<vmem>>
    %58 = tpu.memref_slice %arg23[%c1_i32, %c0_i32_56] : memref<2x2x!tpu.dma_semaphore, #tpu.memory_space<semaphore_mem>> -> memref<1x1x!tpu.dma_semaphore, #tpu.memory_space<semaphore_mem>>
    %59 = tpu.memref_squeeze %58 : memref<1x1x!tpu.dma_semaphore, #tpu.memory_space<semaphore_mem>> -> memref<!tpu.dma_semaphore, #tpu.memory_space<semaphore_mem>>
    tpu.enqueue_dma source(%55 : memref<128x128xbf16, #tpu.memory_space<any>>) target(%57 : memref<128x128xbf16, #tpu.memory_space<vmem>>) target_semaphore(%59 : memref<!tpu.dma_semaphore, #tpu.memory_space<semaphore_mem>>)
    %c0_61 = arith.constant 0 : index
    %c0_62 = arith.constant 0 : index
    %60 = vector.load %arg18[%c0_61, %c0_62] : memref<128x128xbf16, #tpu.memory_space<vmem>>, vector<128x128xbf16>
    %c0_63 = arith.constant 0 : index
    %c0_64 = arith.constant 0 : index
    %61 = vector.load %arg10[%c0_63, %c0_64] : memref<128x128xbf16, #tpu.memory_space<vmem>>, vector<128x128xbf16>
    %cst_65 = arith.constant dense<0.000000e+00> : vector<128x128xf32>
    %62 = tpu.matmul %60, %61, %cst_65 {dimension_numbers = #tpu.dot_dimension_numbers<[1], [0], [0], [1], [0, 0, 1, 1], [], []>} : vector<128x128xbf16>, vector<128x128xbf16>, vector<128x128xf32> -> vector<128x128xf32>
    %c0_66 = arith.constant 0 : index
    %c0_67 = arith.constant 0 : index
    %63 = vector.load %arg11[%c0_66, %c0_67] : memref<1x128xf32, #tpu.memory_space<vmem>>, vector<1x128xf32>
    %64 = vector.broadcast %63 : vector<1x128xf32> to vector<128x128xf32>
    %65 = arith.addf %62, %64 : vector<128x128xf32>
    %cst_68 = arith.constant 0.000000e+00 : f32
    %66 = vector.broadcast %cst_68 : f32 to vector<128x128xf32>
    %67 = arith.maximumf %65, %66 : vector<128x128xf32>
    %68 = arith.truncf %67 : vector<128x128xf32> to vector<128x128xbf16>
    %c0_69 = arith.constant 0 : index
    %c0_70 = arith.constant 0 : index
    %69 = vector.load %arg20[%c0_69, %c0_70] : memref<128x128xbf16, #tpu.memory_space<vmem>>, vector<128x128xbf16>
    tpu.vector_store %arg20[%c0_69, %c0_70], %68 {strides = array<i32>} : memref<128x128xbf16, #tpu.memory_space<vmem>>, vector<128x128xbf16>,
    %c0_i32_71 = arith.constant 0 : i32
    %c1_i32_72 = arith.constant 1 : i32
    %c0_i32_73 = arith.constant 0 : i32
    %c0_i32_74 = arith.constant 0 : i32
    %c0_i32_75 = arith.constant 0 : i32
    %70 = tpu.memref_slice %arg9[%c0_i32_74, %c0_i32_75] : memref<128x128xbf16, #tpu.memory_space<any>> -> memref<128x128xbf16, #tpu.memory_space<any>>
    %c0_i32_76 = arith.constant 0 : i32
    %c0_i32_77 = arith.constant 0 : i32
    %71 = tpu.memref_slice %arg22[%c0_i32_71, %c0_i32_76, %c0_i32_77] : memref<2x128x128xbf16, #tpu.memory_space<vmem>> -> memref<1x128x128xbf16, #tpu.memory_space<vmem>>
    %72 = tpu.memref_squeeze %71 : memref<1x128x128xbf16, #tpu.memory_space<vmem>> -> memref<128x128xbf16, #tpu.memory_space<vmem>>
    %73 = tpu.memref_slice %arg23[%c1_i32_72, %c0_i32_73] : memref<2x2x!tpu.dma_semaphore, #tpu.memory_space<semaphore_mem>> -> memref<1x1x!tpu.dma_semaphore, #tpu.memory_space<semaphore_mem>>
    %74 = tpu.memref_squeeze %73 : memref<1x1x!tpu.dma_semaphore, #tpu.memory_space<semaphore_mem>> -> memref<!tpu.dma_semaphore, #tpu.memory_space<semaphore_mem>>
    tpu.wait_dma2 semaphore(%74 : memref<!tpu.dma_semaphore, #tpu.memory_space<semaphore_mem>>) src(%70 : memref<128x128xbf16, #tpu.memory_space<any>>) dst(%72 : memref<128x128xbf16, #tpu.memory_space<vmem>>)
    %c0_78 = arith.constant 0 : index
    %c0_79 = arith.constant 0 : index
    %c0_80 = arith.constant 0 : index
    %75 = vector.load %arg22[%c0_78, %c0_79, %c0_80] : memref<2x128x128xbf16, #tpu.memory_space<vmem>>, vector<1x128x128xbf16>
    %76 = vector.shape_cast %75 : vector<1x128x128xbf16> to vector<128x128xbf16>
    %c0_81 = arith.constant 0 : index
    %c0_82 = arith.constant 0 : index
    %77 = vector.load %arg20[%c0_81, %c0_82] : memref<128x128xbf16, #tpu.memory_space<vmem>>, vector<128x128xbf16>
    %cst_83 = arith.constant dense<0.000000e+00> : vector<128x128xf32>
    %78 = tpu.matmul %76, %77, %cst_83 {dimension_numbers = #tpu.dot_dimension_numbers<[1], [0], [0], [1], [0, 0, 1, 1], [], []>} : vector<128x128xbf16>, vector<128x128xbf16>, vector<128x128xf32> -> vector<128x128xf32>
    %79 = arith.truncf %78 : vector<128x128xf32> to vector<128x128xbf16>
    %c0_84 = arith.constant 0 : index
    %c0_85 = arith.constant 0 : index
    %80 = vector.load %arg12[%c0_84, %c0_85] : memref<128x128xbf16, #tpu.memory_space<vmem>>, vector<128x128xbf16>
    %cst_86 = arith.constant dense<0.000000e+00> : vector<128x128xf32>
    %81 = tpu.matmul %79, %80, %cst_86 {dimension_numbers = #tpu.dot_dimension_numbers<[1], [0], [0], [1], [0, 0, 1, 1], [], []>} : vector<128x128xbf16>, vector<128x128xbf16>, vector<128x128xf32> -> vector<128x128xf32>
    %c0_87 = arith.constant 0 : index
    %c0_88 = arith.constant 0 : index
    %82 = vector.load %arg18[%c0_87, %c0_88] : memref<128x128xbf16, #tpu.memory_space<vmem>>, vector<128x128xbf16>
    %c0_89 = arith.constant 0 : index
    %c0_90 = arith.constant 0 : index
    %83 = vector.load %arg13[%c0_89, %c0_90] : memref<128x128xbf16, #tpu.memory_space<vmem>>, vector<128x128xbf16>
    %cst_91 = arith.constant dense<0.000000e+00> : vector<128x128xf32>
    %84 = tpu.matmul %82, %83, %cst_91 {dimension_numbers = #tpu.dot_dimension_numbers<[1], [0], [0], [1], [0, 0, 1, 1], [], []>} : vector<128x128xbf16>, vector<128x128xbf16>, vector<128x128xf32> -> vector<128x128xf32>
    %85 = arith.addf %81, %84 : vector<128x128xf32>
    %c0_92 = arith.constant 0 : index
    %c0_93 = arith.constant 0 : index
    %86 = vector.load %arg14[%c0_92, %c0_93] : memref<1x128xf32, #tpu.memory_space<vmem>>, vector<1x128xf32>
    %87 = vector.broadcast %86 : vector<1x128xf32> to vector<128x128xf32>
    %88 = arith.addf %85, %87 : vector<128x128xf32>
    %cst_94 = arith.constant 0.000000e+00 : f32
    %89 = vector.broadcast %cst_94 : f32 to vector<128x128xf32>
    %90 = arith.maximumf %88, %89 : vector<128x128xf32>
    %91 = arith.mulf %90, %90 : vector<128x128xf32>
    %cst_95 = arith.constant dense<0.000000e+00> : vector<128xf32>
    %92 = vector.multi_reduction <add>, %91, %cst_95 [1] : vector<128x128xf32> to vector<128xf32>
    %93 = vector.shape_cast %92 : vector<128xf32> to vector<128x1xf32>
    %cst_96 = arith.constant 9.99999996E-13 : f32
    %94 = vector.broadcast %cst_96 : f32 to vector<128x1xf32>
    %95 = arith.addf %93, %94 : vector<128x1xf32>
    %96 = math.rsqrt %95 : vector<128x1xf32>
    %97 = vector.broadcast %96 : vector<128x1xf32> to vector<128x128xf32>
    %98 = arith.mulf %90, %97 : vector<128x128xf32>
    %99 = arith.truncf %98 : vector<128x128xf32> to vector<128x128xbf16>
    %c0_97 = arith.constant 0 : index
    %c0_98 = arith.constant 0 : index
    %100 = vector.load %arg18[%c0_97, %c0_98] : memref<128x128xbf16, #tpu.memory_space<vmem>>, vector<128x128xbf16>
    tpu.vector_store %arg18[%c0_97, %c0_98], %99 {strides = array<i32>} : memref<128x128xbf16, #tpu.memory_space<vmem>>, vector<128x128xbf16>,
    %c0_99 = arith.constant 0 : index
    %c0_100 = arith.constant 0 : index
    %101 = vector.load %arg19[%c0_99, %c0_100] : memref<128x128xbf16, #tpu.memory_space<vmem>>, vector<128x128xbf16>
    %102 = arith.extf %101 : vector<128x128xbf16> to vector<128x128xf32>
    %c0_101 = arith.constant 0 : index
    %c0_102 = arith.constant 0 : index
    %103 = vector.load %arg18[%c0_101, %c0_102] : memref<128x128xbf16, #tpu.memory_space<vmem>>, vector<128x128xbf16>
    %104 = arith.extf %103 : vector<128x128xbf16> to vector<128x128xf32>
    %105 = arith.addf %102, %104 : vector<128x128xf32>
    %c0_103 = arith.constant 0 : index
    %c0_104 = arith.constant 0 : index
    %106 = vector.load %arg15[%c0_103, %c0_104] : memref<512x128xbf16, #tpu.memory_space<vmem>>, vector<512x128xbf16>
    %107 = arith.truncf %105 : vector<128x128xf32> to vector<128x128xbf16>
    %cst_105 = arith.constant dense<0.000000e+00> : vector<512x128xf32>
    %108 = tpu.matmul %106, %107, %cst_105 {dimension_numbers = #tpu.dot_dimension_numbers<[1], [0], [0], [1], [0, 0, 1, 1], [], []>} : vector<512x128xbf16>, vector<128x128xbf16>, vector<512x128xf32> -> vector<512x128xf32>
    %109 = vector.extract_strided_slice %108 {offsets = [0, 0], sizes = [128, 128], strides = [1, 1]} : vector<512x128xf32> to vector<128x128xf32>
    %110 = vector.extract_strided_slice %108 {offsets = [128, 0], sizes = [128, 128], strides = [1, 1]} : vector<512x128xf32> to vector<128x128xf32>
    %111 = vector.extract_strided_slice %108 {offsets = [256, 0], sizes = [128, 128], strides = [1, 1]} : vector<512x128xf32> to vector<128x128xf32>
    %112 = vector.extract_strided_slice %108 {offsets = [384, 0], sizes = [128, 128], strides = [1, 1]} : vector<512x128xf32> to vector<128x128xf32>
    %113 = arith.mulf %111, %112 : vector<128x128xf32>
    %114 = arith.mulf %109, %110 : vector<128x128xf32>
    %115 = arith.subf %113, %114 : vector<128x128xf32>
    %cst_106 = arith.constant 1.000000e+00 : f32
    %116 = vector.broadcast %cst_106 : f32 to vector<1x128xf32>
    %cst_107 = arith.constant dense<0.000000e+00> : vector<1x128xf32>
    %117 = tpu.matmul %116, %115, %cst_107 {dimension_numbers = #tpu.dot_dimension_numbers<[1], [1], [0], [0], [0, 0, 1, 0], [], []>} : vector<1x128xf32>, vector<128x128xf32>, vector<1x128xf32> -> vector<1x128xf32>
    %c0_108 = arith.constant 0 : index
    %c0_109 = arith.constant 0 : index
    %118 = vector.load %arg16[%c0_108, %c0_109] : memref<1x128xf32, #tpu.memory_space<vmem>>, vector<1x128xf32>
    %119 = arith.addf %117, %118 : vector<1x128xf32>
    %cst_110 = arith.constant 1.000000e+00 : f32
    %120 = vector.broadcast %cst_110 : f32 to vector<1x128xf32>
    %121 = arith.addf %119, %120 : vector<1x128xf32>
    %cst_111 = arith.constant 0.000000e+00 : f32
    %122 = vector.broadcast %cst_111 : f32 to vector<1x128xf32>
    %123 = arith.maximumf %121, %122 : vector<1x128xf32>
    %c0_112 = arith.constant 0 : index
    %c0_113 = arith.constant 0 : index
    %124 = vector.load %arg17[%c0_112, %c0_113] : memref<1x128xf32, #tpu.memory_space<vmem>>, vector<1x128xf32>
    tpu.vector_store %arg17[%c0_112, %c0_113], %123 {strides = array<i32>} : memref<1x128xf32, #tpu.memory_space<vmem>>, vector<1x128xf32>,
    return
  }
}

</mosaic_0001>

<llo_original>
// kernel: tpu_custom_call.1
$region0: #{tpu_custom_call.1}
  #allocation0 [shape = 'u32[]', space=smem, size = 0x4, offset = 0x4, fixed_abs, tag = 'smem constant byte address 0x4 - core index']
  #allocation1 [shape = 'u32[72,128]{1,0:T(1,128)}', space=vmem, size = 0x9000, scoped, tag = 'internal scratch']
  #allocation2 [shape = 'bf16[128,128]{1,0:T(8,128)(2,1)}', space=vmem, size = 0x8000, scoped, tag = 'scratch operand']
  #allocation3 [shape = 'bf16[128,128]{1,0:T(8,128)(2,1)}', space=vmem, size = 0x8000, scoped, tag = 'scratch operand']
  #allocation4 [shape = 'bf16[128,128]{1,0:T(8,128)(2,1)}', space=vmem, size = 0x8000, scoped, tag = 'scratch operand']
  #allocation5 [shape = 'bf16[2,128,128]{2,1,0:T(8,128)(2,1)}', space=vmem, size = 0x10000, scoped, tag = 'scratch operand']
  #allocation6 [shape = 'bf16[2,128,128]{2,1,0:T(8,128)(2,1)}', space=vmem, size = 0x10000, scoped, tag = 'scratch operand']
  #allocation7 [shape = 's32[4]{0}', space=sflag, size = 0x10, scoped, tag = 'scratch operand']
  #allocation26 [shape = 's32[]', space=sflag, size = 0x4, offset = 0, fixed_abs, tag = 'sflag constant byte address 0x0 - dummy sync flag']
  #allocation27 [shape = 's32[]', space=sflag, size = 0x4, offset = 0, fixed_abs, tag = 'sflag constant byte address 0x0 - dummy sync flag']
  #allocation28 [shape = 'u32[]', space=smem, size = 0x4, offset = 0x44, fixed_abs, tag = 'smem constant byte address 0x44 - assertion arg 0']
  #allocation29 [shape = 'u32[]', space=smem, size = 0x4, offset = 0x48, fixed_abs, tag = 'smem constant byte address 0x48 - assertion arg 1']
  #allocation30 [shape = 's32[]', space=sflag, size = 0x4, offset = 0, fixed_abs, tag = 'sflag constant byte address 0x0 - dummy sync flag']
  #allocation31 [shape = 's32[]', space=sflag, size = 0x4, offset = 0, fixed_abs, tag = 'sflag constant byte address 0x0 - dummy sync flag']
  %s0 = inlined_call_operand.hbm [shape: bf16[128,128], index: 0, kind: input, shape index: {}]
  %s1 = inlined_call_operand.hbm [shape: bf16[128,128], index: 1, kind: input, shape index: {}]
  %s2 = inlined_call_operand.hbm [shape: f32[128,128], index: 2, kind: input, shape index: {}]
  %s3 = inlined_call_operand.hbm [shape: bf16[128,128], index: 3, kind: input, shape index: {}]
  %s4 = inlined_call_operand.hbm [shape: bf16[128,128], index: 4, kind: input, shape index: {}]
  %s5 = inlined_call_operand.vmem [shape: f32[1,128], index: 5, kind: input, shape index: {}]
  %s6 = inlined_call_operand.hbm [shape: bf16[128,128], index: 6, kind: input, shape index: {}]
  %s7 = inlined_call_operand.hbm [shape: bf16[128,128], index: 7, kind: input, shape index: {}]
  %s8 = inlined_call_operand.vmem [shape: f32[1,128], index: 8, kind: input, shape index: {}]
  %s9 = inlined_call_operand.hbm [shape: bf16[128,128], index: 9, kind: input, shape index: {}]
  %s10 = inlined_call_operand.hbm [shape: bf16[128,128], index: 10, kind: input, shape index: {}]
  %s11 = inlined_call_operand.vmem [shape: f32[1,128], index: 11, kind: input, shape index: {}]
  %s12 = inlined_call_operand.hbm [shape: bf16[128,128], index: 12, kind: input, shape index: {}]
  %s13 = inlined_call_operand.hbm [shape: bf16[128,128], index: 13, kind: input, shape index: {}]
  %s14 = inlined_call_operand.vmem [shape: f32[1,128], index: 14, kind: input, shape index: {}]
  %s15 = inlined_call_operand.hbm [shape: bf16[512,128], index: 15, kind: input, shape index: {}]
  %s16 = inlined_call_operand.vmem [shape: f32[1,128], index: 16, kind: input, shape index: {}]
  %s17 = inlined_call_operand.hbm [shape: f32[1,128], index: 17, kind: output, shape index: {}]
  %s18 = sld [smem:[#allocation0]]
  $region118: #{tpu_custom_call.1} parent=0
    _
  %s20 = ssub.s32 1, %s18
  %s21 = scalar_select 0, %s20, %s18
  $region1: #{tpu_custom_call.1} parent=0
    #allocation8 [shape = 'u8[32768]{0}', space=vmem, size = 0x8000, scoped, tag = 'input window, operand 0, single buffered']
    #allocation9 [shape = 's32[1]{0}', space=sflag, size = 0x4, scoped, tag = 'scoped memory for tpu_custom_call.1']
    #allocation10 [shape = 's32[1]{0}', space=sflag, size = 0x4, scoped, tag = 'scoped memory for tpu_custom_call.1']
    #allocation11 [shape = 'u8[32768]{0}', space=vmem, size = 0x8000, scoped, tag = 'input window, operand 1, single buffered']
    #allocation12 [shape = 's32[1]{0}', space=sflag, size = 0x4, scoped, tag = 'scoped memory for tpu_custom_call.1']
    #allocation13 [shape = 'u8[65536]{0}', space=vmem, size = 0x10000, scoped, tag = 'input window, operand 2, single buffered']
    #allocation14 [shape = 'u8[32768]{0}', space=vmem, size = 0x8000, scoped, tag = 'input window, operand 4, single buffered']
    #allocation15 [shape = 's32[1]{0}', space=sflag, size = 0x4, scoped, tag = 'scoped memory for tpu_custom_call.1']
    #allocation16 [shape = 'u8[32768]{0}', space=vmem, size = 0x8000, scoped, tag = 'input window, operand 6, single buffered']
    #allocation17 [shape = 'u8[32768]{0}', space=vmem, size = 0x8000, scoped, tag = 'input window, operand 7, single buffered']
    #allocation18 [shape = 's32[1]{0}', space=sflag, size = 0x4, scoped, tag = 'scoped memory for tpu_custom_call.1']
    #allocation19 [shape = 'u8[32768]{0}', space=vmem, size = 0x8000, scoped, tag = 'input window, operand 10, single buffered']
    #allocation20 [shape = 'u8[32768]{0}', space=vmem, size = 0x8000, scoped, tag = 'input window, operand 12, single buffered']
    #allocation21 [shape = 's32[1]{0}', space=sflag, size = 0x4, scoped, tag = 'scoped memory for tpu_custom_call.1']
    #allocation22 [shape = 'u8[32768]{0}', space=vmem, size = 0x8000, scoped, tag = 'input window, operand 13, single buffered']
    #allocation23 [shape = 'u8[131072]{0}', space=vmem, size = 0x20000, scoped, tag = 'input window, operand 15, single buffered']
    #allocation24 [shape = 's32[1]{0}', space=sflag, size = 0x4, scoped, tag = 'scoped memory for tpu_custom_call.1']
    #allocation25 [shape = 'u8[512]{0}', space=vmem, size = 0x400, scoped, tag = 'output window, operand 0, single buffered']
    %22 = vsyncpa [#allocation9], 0
    %23 = vsyncpa [#allocation12], 0
    %24 = vsyncpa [#allocation15], 0
    %25 = vsyncpa [#allocation18], 0
    %26 = vsyncpa [#allocation21], 0
    %27 = vsyncpa [#allocation24], 0
    %28 = vsyncpa [#allocation10], 0
    // Predicated region
    $region2: #{tpu_custom_call.1} parent=1 // pred_check
      _
    $region3: #{tpu_custom_call.1} parent=1 // pred_check_branch
      %30 = sbr.rel (0) target = $region5
    $region4: #{tpu_custom_call.1} parent=1 // pred_region
      %32 = vsyncadd [#allocation9], 0
      %s33 = sshll.u32 %s0, 4
      %s34 = int_to_ptr.hbm [resolvable:$true] %s33
      %s35 = sshll.u32 [#allocation8], 4
      %s36 = int_to_ptr.vmem [resolvable:$true] %s35
      %41 = dma.hbm_to_vmem [thread:$0]  %s34, 1024, %s36, [#allocation9], 64, 64, 4
    $region5: #{tpu_custom_call.1} parent=1 // pred_fallthru
      _
    // Predicated region
    $region6: #{tpu_custom_call.1} parent=1 // pred_check
      _
    $region7: #{tpu_custom_call.1} parent=1 // pred_check_branch
      %43 = sbr.rel (0) target = $region9
    $region8: #{tpu_custom_call.1} parent=1 // pred_region
      %45 = vsyncadd [#allocation12], 0
      %s46 = sshll.u32 %s1, 4
      %s47 = int_to_ptr.hbm [resolvable:$true] %s46
      %s48 = sshll.u32 [#allocation11], 4
      %s49 = int_to_ptr.vmem [resolvable:$true] %s48
      %54 = dma.hbm_to_vmem [thread:$0]  %s47, 1024, %s49, [#allocation12], 64, 64, 4
    $region9: #{tpu_custom_call.1} parent=1 // pred_fallthru
      _
    // Predicated region
    $region10: #{tpu_custom_call.1} parent=1 // pred_check
      _
    $region11: #{tpu_custom_call.1} parent=1 // pred_check_branch
      %56 = sbr.rel (0) target = $region13
    $region12: #{tpu_custom_call.1} parent=1 // pred_region
      %58 = vsyncadd [#allocation12], 0
      %s59 = sshll.u32 %s2, 4
      %s60 = int_to_ptr.hbm [resolvable:$true] %s59
      %s61 = sshll.u32 [#allocation13], 4
      %s62 = int_to_ptr.vmem [resolvable:$true] %s61
      %67 = dma.hbm_to_vmem [thread:$0]  %s60, 2048, %s62, [#allocation12], 128, 128, 8
    $region13: #{tpu_custom_call.1} parent=1 // pred_fallthru
      _
    // Predicated region
    $region14: #{tpu_custom_call.1} parent=1 // pred_check
      _
    $region15: #{tpu_custom_call.1} parent=1 // pred_check_branch
      %69 = sbr.rel (0) target = $region17
    $region16: #{tpu_custom_call.1} parent=1 // pred_region
      %71 = vsyncadd [#allocation15], 0
      %s72 = sshll.u32 %s4, 4
      %s73 = int_to_ptr.hbm [resolvable:$true] %s72
      %s74 = sshll.u32 [#allocation14], 4
      %s75 = int_to_ptr.vmem [resolvable:$true] %s74
      %80 = dma.hbm_to_vmem [thread:$0]  %s73, 1024, %s75, [#allocation15], 64, 64, 4
    $region17: #{tpu_custom_call.1} parent=1 // pred_fallthru
      _
    // Predicated region
    $region18: #{tpu_custom_call.1} parent=1 // pred_check
      _
    $region19: #{tpu_custom_call.1} parent=1 // pred_check_branch
      %82 = sbr.rel (0) target = $region21
    $region20: #{tpu_custom_call.1} parent=1 // pred_region
      _
    $region21: #{tpu_custom_call.1} parent=1 // pred_fallthru
      _
    // Predicated region
    $region22: #{tpu_custom_call.1} parent=1 // pred_check
      _
    $region23: #{tpu_custom_call.1} parent=1 // pred_check_branch
      %84 = sbr.rel (0) target = $region25
    $region24: #{tpu_custom_call.1} parent=1 // pred_region
      %86 = vsyncadd [#allocation15], 0
      %s87 = sshll.u32 %s6, 4
      %s88 = int_to_ptr.hbm [resolvable:$true] %s87
      %s89 = sshll.u32 [#allocation16], 4
      %s90 = int_to_ptr.vmem [resolvable:$true] %s89
      %95 = dma.hbm_to_vmem [thread:$0]  %s88, 1024, %s90, [#allocation15], 64, 64, 4
    $region25: #{tpu_custom_call.1} parent=1 // pred_fallthru
      _
    // Predicated region
    $region26: #{tpu_custom_call.1} parent=1 // pred_check
      _
    $region27: #{tpu_custom_call.1} parent=1 // pred_check_branch
      %97 = sbr.rel (0) target = $region29
    $region28: #{tpu_custom_call.1} parent=1 // pred_region
      %99 = vsyncadd [#allocation18], 0
      %s100 = sshll.u32 %s7, 4
      %s101 = int_to_ptr.hbm [resolvable:$true] %s100
      %s102 = sshll.u32 [#allocation17], 4
      %s103 = int_to_ptr.vmem [resolvable:$true] %s102
      %108 = dma.hbm_to_vmem [thread:$0]  %s101, 1024, %s103, [#allocation18], 64, 64, 4
    $region29: #{tpu_custom_call.1} parent=1 // pred_fallthru
      _
    // Predicated region
    $region30: #{tpu_custom_call.1} parent=1 // pred_check
      _
    $region31: #{tpu_custom_call.1} parent=1 // pred_check_branch
      %110 = sbr.rel (0) target = $region33
    $region32: #{tpu_custom_call.1} parent=1 // pred_region
      _
    $region33: #{tpu_custom_call.1} parent=1 // pred_fallthru
      _
    // Predicated region
    $region34: #{tpu_custom_call.1} parent=1 // pred_check
      _
    $region35: #{tpu_custom_call.1} parent=1 // pred_check_branch
      %112 = sbr.rel (0) target = $region37
    $region36: #{tpu_custom_call.1} parent=1 // pred_region
      %114 = vsyncadd [#allocation18], 0
      %s115 = sshll.u32 %s10, 4
      %s116 = int_to_ptr.hbm [resolvable:$true] %s115
      %s117 = sshll.u32 [#allocation19], 4
      %s118 = int_to_ptr.vmem [resolvable:$true] %s117
      %123 = dma.hbm_to_vmem [thread:$0]  %s116, 1024, %s118, [#allocation18], 64, 64, 4
    $region37: #{tpu_custom_call.1} parent=1 // pred_fallthru
      _
    // Predicated region
    $region38: #{tpu_custom_call.1} parent=1 // pred_check
      _
    $region39: #{tpu_custom_call.1} parent=1 // pred_check_branch
      %125 = sbr.rel (0) target = $region41
    $region40: #{tpu_custom_call.1} parent=1 // pred_region
      _
    $region41: #{tpu_custom_call.1} parent=1 // pred_fallthru
      _
    // Predicated region
    $region42: #{tpu_custom_call.1} parent=1 // pred_check
      _
    $region43: #{tpu_custom_call.1} parent=1 // pred_check_branch
      %127 = sbr.rel (0) target = $region45
    $region44: #{tpu_custom_call.1} parent=1 // pred_region
      %129 = vsyncadd [#allocation21], 0
      %s130 = sshll.u32 %s12, 4
      %s131 = int_to_ptr.hbm [resolvable:$true] %s130
      %s132 = sshll.u32 [#allocation20], 4
      %s133 = int_to_ptr.vmem [resolvable:$true] %s132
      %138 = dma.hbm_to_vmem [thread:$0]  %s131, 1024, %s133, [#allocation21], 64, 64, 4
    $region45: #{tpu_custom_call.1} parent=1 // pred_fallthru
      _
    // Predicated region
    $region46: #{tpu_custom_call.1} parent=1 // pred_check
      _
    $region47: #{tpu_custom_call.1} parent=1 // pred_check_branch
      %140 = sbr.rel (0) target = $region49
    $region48: #{tpu_custom_call.1} parent=1 // pred_region
      %142 = vsyncadd [#allocation21], 0
      %s143 = sshll.u32 %s13, 4
      %s144 = int_to_ptr.hbm [resolvable:$true] %s143
      %s145 = sshll.u32 [#allocation22], 4
      %s146 = int_to_ptr.vmem [resolvable:$true] %s145
      %151 = dma.hbm_to_vmem [thread:$0]  %s144, 1024, %s146, [#allocation21], 64, 64, 4
    $region49: #{tpu_custom_call.1} parent=1 // pred_fallthru
      _
    // Predicated region
    $region50: #{tpu_custom_call.1} parent=1 // pred_check
      _
    $region51: #{tpu_custom_call.1} parent=1 // pred_check_branch
      %153 = sbr.rel (0) target = $region53
    $region52: #{tpu_custom_call.1} parent=1 // pred_region
      _
    $region53: #{tpu_custom_call.1} parent=1 // pred_fallthru
      _
    // Predicated region
    $region54: #{tpu_custom_call.1} parent=1 // pred_check
      _
    $region55: #{tpu_custom_call.1} parent=1 // pred_check_branch
      %155 = sbr.rel (0) target = $region57
    $region56: #{tpu_custom_call.1} parent=1 // pred_region
      %157 = vsyncadd [#allocation24], 0
      %s158 = sshll.u32 %s15, 4
      %s159 = int_to_ptr.hbm [resolvable:$true] %s158
      %s160 = sshll.u32 [#allocation23], 4
      %s161 = int_to_ptr.vmem [resolvable:$true] %s160
      %166 = dma.hbm_to_vmem [thread:$0]  %s159, 4096, %s161, [#allocation24], 64, 64, 4
    $region57: #{tpu_custom_call.1} parent=1 // pred_fallthru
      _
    // Predicated region
    $region58: #{tpu_custom_call.1} parent=1 // pred_check
      _
    $region59: #{tpu_custom_call.1} parent=1 // pred_check_branch
      %168 = sbr.rel (0) target = $region61
    $region60: #{tpu_custom_call.1} parent=1 // pred_region
      _
    $region61: #{tpu_custom_call.1} parent=1 // pred_fallthru
      _
    // Predicated region
    $region62: #{tpu_custom_call.1} parent=1 // pred_check
      _
    $region63: #{tpu_custom_call.1} parent=1 // pred_check_branch
      %170 = sbr.rel (0) target = $region65
    $region64: #{tpu_custom_call.1} parent=1 // pred_region
      %172 = dma.done [#allocation9], 1024
    $region65: #{tpu_custom_call.1} parent=1 // pred_fallthru
      _
    // Predicated region
    $region66: #{tpu_custom_call.1} parent=1 // pred_check
      _
    $region67: #{tpu_custom_call.1} parent=1 // pred_check_branch
      %174 = sbr.rel (0) target = $region69
    $region68: #{tpu_custom_call.1} parent=1 // pred_region
      %176 = dma.done [#allocation12], 1024
    $region69: #{tpu_custom_call.1} parent=1 // pred_fallthru
      _
    // Predicated region
    $region70: #{tpu_custom_call.1} parent=1 // pred_check
      _
    $region71: #{tpu_custom_call.1} parent=1 // pred_check_branch
      %178 = sbr.rel (0) target = $region73
    $region72: #{tpu_custom_call.1} parent=1 // pred_region
      %180 = dma.done [#allocation12], 2048
    $region73: #{tpu_custom_call.1} parent=1 // pred_fallthru
      _
    // Predicated region
    $region74: #{tpu_custom_call.1} parent=1 // pred_check
      _
    $region75: #{tpu_custom_call.1} parent=1 // pred_check_branch
      %182 = sbr.rel (0) target = $region77
    $region76: #{tpu_custom_call.1} parent=1 // pred_region
      %184 = dma.done [#allocation15], 1024
    $region77: #{tpu_custom_call.1} parent=1 // pred_fallthru
      _
    // Predicated region
    $region78: #{tpu_custom_call.1} parent=1 // pred_check
      _
    $region79: #{tpu_custom_call.1} parent=1 // pred_check_branch
      %186 = sbr.rel (0) target = $region81
    $region80: #{tpu_custom_call.1} parent=1 // pred_region
      %188 = dma.done [#allocation15], 1024
    $region81: #{tpu_custom_call.1} parent=1 // pred_fallthru
      _
    // Predicated region
    $region82: #{tpu_custom_call.1} parent=1 // pred_check
      _
    $region83: #{tpu_custom_call.1} parent=1 // pred_check_branch
      %190 = sbr.rel (0) target = $region85
    $region84: #{tpu_custom_call.1} parent=1 // pred_region
      %192 = dma.done [#allocation18], 1024
    $region85: #{tpu_custom_call.1} parent=1 // pred_fallthru
      _
    // Predicated region
    $region86: #{tpu_custom_call.1} parent=1 // pred_check
      _
    $region87: #{tpu_custom_call.1} parent=1 // pred_check_branch
      %194 = sbr.rel (0) target = $region89
    $region88: #{tpu_custom_call.1} parent=1 // pred_region
      %196 = dma.done [#allocation18], 1024
    $region89: #{tpu_custom_call.1} parent=1 // pred_fallthru
      _
    // Predicated region
    $region90: #{tpu_custom_call.1} parent=1 // pred_check
      _
    $region91: #{tpu_custom_call.1} parent=1 // pred_check_branch
      %198 = sbr.rel (0) target = $region93
    $region92: #{tpu_custom_call.1} parent=1 // pred_region
      %200 = dma.done [#allocation21], 1024
    $region93: #{tpu_custom_call.1} parent=1 // pred_fallthru
      _
    // Predicated region
    $region94: #{tpu_custom_call.1} parent=1 // pred_check
      _
    $region95: #{tpu_custom_call.1} parent=1 // pred_check_branch
      %202 = sbr.rel (0) target = $region97
    $region96: #{tpu_custom_call.1} parent=1 // pred_region
      %204 = dma.done [#allocation21], 1024
    $region97: #{tpu_custom_call.1} parent=1 // pred_fallthru
      _
    // Predicated region
    $region98: #{tpu_custom_call.1} parent=1 // pred_check
      _
    $region99: #{tpu_custom_call.1} parent=1 // pred_check_branch
      %206 = sbr.rel (0) target = $region101
    $region100: #{tpu_custom_call.1} parent=1 // pred_region
      %208 = dma.done [#allocation24], 4096
    $region101: #{tpu_custom_call.1} parent=1 // pred_fallthru
      _
    %v209 = vld [vmem:[#allocation8] sm:$0xf]
    %v210 = vld [vmem:[#allocation8 + $0x4] sm:$0xf]
    %v211 = vld [vmem:[#allocation8 + $0x8] sm:$0xf]
    %v212 = vld [vmem:[#allocation8 + $0xc] sm:$0xf]
    %v213 = vld [vmem:[#allocation8 + $0x10] sm:$0xf]
    %v214 = vld [vmem:[#allocation8 + $0x14] sm:$0xf]
    %v215 = vld [vmem:[#allocation8 + $0x18] sm:$0xf]
    %v216 = vld [vmem:[#allocation8 + $0x1c] sm:$0xf]
    %v217 = vld [vmem:[#allocation8 + $0x20] sm:$0xf]
    %v218 = vld [vmem:[#allocation8 + $0x24] sm:$0xf]
    %v219 = vld [vmem:[#allocation8 + $0x28] sm:$0xf]
    %v220 = vld [vmem:[#allocation8 + $0x2c] sm:$0xf]
    %v221 = vld [vmem:[#allocation8 + $0x30] sm:$0xf]
    %v222 = vld [vmem:[#allocation8 + $0x34] sm:$0xf]
    %v223 = vld [vmem:[#allocation8 + $0x38] sm:$0xf]
    %v224 = vld [vmem:[#allocation8 + $0x3c] sm:$0xf]
    %v225 = vld [vmem:[#allocation11] sm:$0xf]
    %v226 = vld [vmem:[#allocation11 + $0x4] sm:$0xf]
    %v227 = vld [vmem:[#allocation11 + $0x8] sm:$0xf]
    %v228 = vld [vmem:[#allocation11 + $0xc] sm:$0xf]
    %v229 = vld [vmem:[#allocation11 + $0x10] sm:$0xf]
    %v230 = vld [vmem:[#allocation11 + $0x14] sm:$0xf]
    %v231 = vld [vmem:[#allocation11 + $0x18] sm:$0xf]
    %v232 = vld [vmem:[#allocation11 + $0x1c] sm:$0xf]
    %v233 = vld [vmem:[#allocation11 + $0x20] sm:$0xf]
    %v234 = vld [vmem:[#allocation11 + $0x24] sm:$0xf]
    %v235 = vld [vmem:[#allocation11 + $0x28] sm:$0xf]
    %v236 = vld [vmem:[#allocation11 + $0x2c] sm:$0xf]
    %v237 = vld [vmem:[#allocation11 + $0x30] sm:$0xf]
    %v238 = vld [vmem:[#allocation11 + $0x34] sm:$0xf]
    %v239 = vld [vmem:[#allocation11 + $0x38] sm:$0xf]
    %v240 = vld [vmem:[#allocation11 + $0x3c] sm:$0xf]
    %v241 = vld [vmem:[#allocation13] sm:$0xff]
    %v242 = vld [vmem:[#allocation13 + $0x8] sm:$0xff]
    %v243 = vld [vmem:[#allocation13 + $0x10] sm:$0xff]
    %v244 = vld [vmem:[#allocation13 + $0x18] sm:$0xff]
    %v245 = vld [vmem:[#allocation13 + $0x20] sm:$0xff]
    %v246 = vld [vmem:[#allocation13 + $0x28] sm:$0xff]
    %v247 = vld [vmem:[#allocation13 + $0x30] sm:$0xff]
    %v248 = vld [vmem:[#allocation13 + $0x38] sm:$0xff]
    %v249 = vld [vmem:[#allocation13 + $0x40] sm:$0xff]
    %v250 = vld [vmem:[#allocation13 + $0x48] sm:$0xff]
    %v251 = vld [vmem:[#allocation13 + $0x50] sm:$0xff]
    %v252 = vld [vmem:[#allocation13 + $0x58] sm:$0xff]
    %v253 = vld [vmem:[#allocation13 + $0x60] sm:$0xff]
    %v254 = vld [vmem:[#allocation13 + $0x68] sm:$0xff]
    %v255 = vld [vmem:[#allocation13 + $0x70] sm:$0xff]
    %v256 = vld [vmem:[#allocation13 + $0x78] sm:$0xff]
    %v273 = vunpack.c.l.b16 %v209
    %v274 = vunpack.c.l.b16 %v210
    %v275 = vunpack.c.l.b16 %v211
    %v276 = vunpack.c.l.b16 %v212
    %v277 = vunpack.c.l.b16 %v213
    %v278 = vunpack.c.l.b16 %v214
    %v279 = vunpack.c.l.b16 %v215
    %v280 = vunpack.c.l.b16 %v216
    %v281 = vunpack.c.l.b16 %v217
    %v282 = vunpack.c.l.b16 %v218
    %v283 = vunpack.c.l.b16 %v219
    %v284 = vunpack.c.l.b16 %v220
    %v285 = vunpack.c.l.b16 %v221
    %v286 = vunpack.c.l.b16 %v222
    %v287 = vunpack.c.l.b16 %v223
    %v288 = vunpack.c.l.b16 %v224
    %v289 = vpack.c.b16 %v274, %v273
    %v290 = vpack.c.b16 %v276, %v275
    %v291 = vpack.c.b16 %v278, %v277
    %v292 = vpack.c.b16 %v280, %v279
    %v293 = vpack.c.b16 %v282, %v281
    %v294 = vpack.c.b16 %v284, %v283
    %v295 = vpack.c.b16 %v286, %v285
    %v296 = vpack.c.b16 %v288, %v287
    %v321 = vunpack.c.l.b16 %v225
    %v322 = vunpack.c.l.b16 %v226
    %v323 = vunpack.c.l.b16 %v227
    %v324 = vunpack.c.l.b16 %v228
    %v325 = vunpack.c.l.b16 %v229
    %v326 = vunpack.c.l.b16 %v230
    %v327 = vunpack.c.l.b16 %v231
    %v328 = vunpack.c.l.b16 %v232
    %v329 = vunpack.c.l.b16 %v233
    %v330 = vunpack.c.l.b16 %v234
    %v331 = vunpack.c.l.b16 %v235
    %v332 = vunpack.c.l.b16 %v236
    %v333 = vunpack.c.l.b16 %v237
    %v334 = vunpack.c.l.b16 %v238
    %v335 = vunpack.c.l.b16 %v239
    %v336 = vunpack.c.l.b16 %v240
    %v337 = vpack.c.b16 %v322, %v321
    %v338 = vpack.c.b16 %v324, %v323
    %v339 = vpack.c.b16 %v326, %v325
    %v340 = vpack.c.b16 %v328, %v327
    %v341 = vpack.c.b16 %v330, %v329
    %v342 = vpack.c.b16 %v332, %v331
    %v343 = vpack.c.b16 %v334, %v333
    %v344 = vpack.c.b16 %v336, %v335
    %353 = vmatpush.bf16.msra.mxu0 %v344
    %354 = vmatpush.bf16.msra.mxu0 %v343
    %355 = vmatpush.bf16.msra.mxu0 %v342
    %356 = vmatpush.bf16.msra.mxu0 %v341
    %357 = vmatpush.bf16.msra.mxu0 %v340
    %358 = vmatpush.bf16.msra.mxu0 %v339
    %359 = vmatpush.bf16.msra.mxu0 %v338
    %360 = vmatpush.bf16.msra.mxu0 %v337
    %361 = vmatmul.bf16.gmra.mxu0 %v289
    %v362 = vpop.f32.mrf.mxu0
    %v363 = vadd.f32 %v241, %v362
    %v364 = vpop.f32.mrf.mxu0
    %v365 = vadd.f32 %v242, %v364
    %366 = vmatmul.bf16.gmra.mxu0 %v290
    %v367 = vpop.f32.mrf.mxu0
    %v368 = vadd.f32 %v243, %v367
    %v369 = vpop.f32.mrf.mxu0
    %v370 = vadd.f32 %v244, %v369
    %371 = vmatmul.bf16.gmra.mxu0 %v291
    %v372 = vpop.f32.mrf.mxu0
    %v373 = vadd.f32 %v245, %v372
    %v374 = vpop.f32.mrf.mxu0
    %v375 = vadd.f32 %v246, %v374
    %376 = vmatmul.bf16.gmra.mxu0 %v292
    %v377 = vpop.f32.mrf.mxu0
    %v378 = vadd.f32 %v247, %v377
    %v379 = vpop.f32.mrf.mxu0
    %v380 = vadd.f32 %v248, %v379
    %381 = vmatmul.bf16.gmra.mxu0 %v293
    %v382 = vpop.f32.mrf.mxu0
    %v383 = vadd.f32 %v249, %v382
    %v384 = vpop.f32.mrf.mxu0
    %v385 = vadd.f32 %v250, %v384
    %386 = vmatmul.bf16.gmra.mxu0 %v294
    %v387 = vpop.f32.mrf.mxu0
    %v388 = vadd.f32 %v251, %v387
    %v389 = vpop.f32.mrf.mxu0
    %v390 = vadd.f32 %v252, %v389
    %391 = vmatmul.bf16.gmra.mxu0 %v295
    %v392 = vpop.f32.mrf.mxu0
    %v393 = vadd.f32 %v253, %v392
    %v394 = vpop.f32.mrf.mxu0
    %v395 = vadd.f32 %v254, %v394
    %396 = vmatmul.bf16.gmra.mxu0 %v296
    %v397 = vpop.f32.mrf.mxu0
    %v398 = vadd.f32 %v255, %v397
    %v399 = vpop.f32.mrf.mxu0
    %v400 = vadd.f32 %v256, %v399
    %401 = vdwg.mxu0
    %v402 = vpack.c.bf16 %v363, %v363
    %v403 = vpack.c.bf16 %v365, %v365
    %v404 = vpack.c.bf16 %v368, %v368
    %v405 = vpack.c.bf16 %v370, %v370
    %v406 = vpack.c.bf16 %v373, %v373
    %v407 = vpack.c.bf16 %v375, %v375
    %v408 = vpack.c.bf16 %v378, %v378
    %v409 = vpack.c.bf16 %v380, %v380
    %v410 = vpack.c.bf16 %v383, %v383
    %v411 = vpack.c.bf16 %v385, %v385
    %v412 = vpack.c.bf16 %v388, %v388
    %v413 = vpack.c.bf16 %v390, %v390
    %v414 = vpack.c.bf16 %v393, %v393
    %v415 = vpack.c.bf16 %v395, %v395
    %v416 = vpack.c.bf16 %v398, %v398
    %v417 = vpack.c.bf16 %v400, %v400
    %418 = vst [vmem:[#allocation2] sm:$0xf] %v402
    %419 = vst [vmem:[#allocation2 + $0x4] sm:$0xf] %v403
    %420 = vst [vmem:[#allocation2 + $0x8] sm:$0xf] %v404
    %421 = vst [vmem:[#allocation2 + $0xc] sm:$0xf] %v405
    %422 = vst [vmem:[#allocation2 + $0x10] sm:$0xf] %v406
    %423 = vst [vmem:[#allocation2 + $0x14] sm:$0xf] %v407
    %424 = vst [vmem:[#allocation2 + $0x18] sm:$0xf] %v408
    %425 = vst [vmem:[#allocation2 + $0x1c] sm:$0xf] %v409
    %426 = vst [vmem:[#allocation2 + $0x20] sm:$0xf] %v410
    %427 = vst [vmem:[#allocation2 + $0x24] sm:$0xf] %v411
    %428 = vst [vmem:[#allocation2 + $0x28] sm:$0xf] %v412
    %429 = vst [vmem:[#allocation2 + $0x2c] sm:$0xf] %v413
    %430 = vst [vmem:[#allocation2 + $0x30] sm:$0xf] %v414
    %431 = vst [vmem:[#allocation2 + $0x34] sm:$0xf] %v415
    %432 = vst [vmem:[#allocation2 + $0x38] sm:$0xf] %v416
    %433 = vst [vmem:[#allocation2 + $0x3c] sm:$0xf] %v417
    %v434 = vld [vmem:[#allocation2] sm:$0xf]
    %v435 = vld [vmem:[#allocation2 + $0x4] sm:$0xf]
    %v436 = vld [vmem:[#allocation2 + $0x8] sm:$0xf]
    %v437 = vld [vmem:[#allocation2 + $0xc] sm:$0xf]
    %v438 = vld [vmem:[#allocation2 + $0x10] sm:$0xf]
    %v439 = vld [vmem:[#allocation2 + $0x14] sm:$0xf]
    %v440 = vld [vmem:[#allocation2 + $0x18] sm:$0xf]
    %v441 = vld [vmem:[#allocation2 + $0x1c] sm:$0xf]
    %v442 = vld [vmem:[#allocation2 + $0x20] sm:$0xf]
    %v443 = vld [vmem:[#allocation2 + $0x24] sm:$0xf]
    %v444 = vld [vmem:[#allocation2 + $0x28] sm:$0xf]
    %v445 = vld [vmem:[#allocation2 + $0x2c] sm:$0xf]
    %v446 = vld [vmem:[#allocation2 + $0x30] sm:$0xf]
    %v447 = vld [vmem:[#allocation2 + $0x34] sm:$0xf]
    %v448 = vld [vmem:[#allocation2 + $0x38] sm:$0xf]
    %v449 = vld [vmem:[#allocation2 + $0x3c] sm:$0xf]
    %450 = vst [vmem:[#allocation3] sm:$0xf] %v434
    %451 = vst [vmem:[#allocation3 + $0x4] sm:$0xf] %v435
    %452 = vst [vmem:[#allocation3 + $0x8] sm:$0xf] %v436
    %453 = vst [vmem:[#allocation3 + $0xc] sm:$0xf] %v437
    %454 = vst [vmem:[#allocation3 + $0x10] sm:$0xf] %v438
    %455 = vst [vmem:[#allocation3 + $0x14] sm:$0xf] %v439
    %456 = vst [vmem:[#allocation3 + $0x18] sm:$0xf] %v440
    %457 = vst [vmem:[#allocation3 + $0x1c] sm:$0xf] %v441
    %458 = vst [vmem:[#allocation3 + $0x20] sm:$0xf] %v442
    %459 = vst [vmem:[#allocation3 + $0x24] sm:$0xf] %v443
    %460 = vst [vmem:[#allocation3 + $0x28] sm:$0xf] %v444
    %461 = vst [vmem:[#allocation3 + $0x2c] sm:$0xf] %v445
    %462 = vst [vmem:[#allocation3 + $0x30] sm:$0xf] %v446
    %463 = vst [vmem:[#allocation3 + $0x34] sm:$0xf] %v447
    %464 = vst [vmem:[#allocation3 + $0x38] sm:$0xf] %v448
    %465 = vst [vmem:[#allocation3 + $0x3c] sm:$0xf] %v449
    // Predicated region
    $region102: #{tpu_custom_call.1} parent=1 // pred_check
      _
    $region103: #{tpu_custom_call.1} parent=1 // pred_check_branch
      %467 = sbr.rel target = $region105
    $region104: #{tpu_custom_call.1} parent=1 // pred_region
      %468 = sst [smem:[#allocation28]] [#allocation27]
      %469 = sst [smem:[#allocation29]] [#allocation26]
    $region105: #{tpu_custom_call.1} parent=1 // pred_fallthru
      _
    %471 = shalt.err (0)
    %s473 = sshll.u32 %s3, 4
    %s474 = int_to_ptr.hbm [resolvable:$true] %s473
    %s475 = sshll.u32 [#allocation5], 4
    %s476 = int_to_ptr.vmem [resolvable:$true] %s475
    %478 = dma.hbm_to_vmem [thread:$0]  %s474, 1024, %s476, [#allocation7]
    %v479 = vld [vmem:[#allocation2] sm:$0xf]
    %v480 = vld [vmem:[#allocation2 + $0x4] sm:$0xf]
    %v481 = vld [vmem:[#allocation2 + $0x8] sm:$0xf]
    %v482 = vld [vmem:[#allocation2 + $0xc] sm:$0xf]
    %v483 = vld [vmem:[#allocation2 + $0x10] sm:$0xf]
    %v484 = vld [vmem:[#allocation2 + $0x14] sm:$0xf]
    %v485 = vld [vmem:[#allocation2 + $0x18] sm:$0xf]
    %v486 = vld [vmem:[#allocation2 + $0x1c] sm:$0xf]
    %v487 = vld [vmem:[#allocation2 + $0x20] sm:$0xf]
    %v488 = vld [vmem:[#allocation2 + $0x24] sm:$0xf]
    %v489 = vld [vmem:[#allocation2 + $0x28] sm:$0xf]
    %v490 = vld [vmem:[#allocation2 + $0x2c] sm:$0xf]
    %v491 = vld [vmem:[#allocation2 + $0x30] sm:$0xf]
    %v492 = vld [vmem:[#allocation2 + $0x34] sm:$0xf]
    %v493 = vld [vmem:[#allocation2 + $0x38] sm:$0xf]
    %v494 = vld [vmem:[#allocation2 + $0x3c] sm:$0xf]
    %v495 = vld [vmem:[#allocation14] sm:$0xf]
    %v496 = vld [vmem:[#allocation14 + $0x4] sm:$0xf]
    %v497 = vld [vmem:[#allocation14 + $0x8] sm:$0xf]
    %v498 = vld [vmem:[#allocation14 + $0xc] sm:$0xf]
    %v499 = vld [vmem:[#allocation14 + $0x10] sm:$0xf]
    %v500 = vld [vmem:[#allocation14 + $0x14] sm:$0xf]
    %v501 = vld [vmem:[#allocation14 + $0x18] sm:$0xf]
    %v502 = vld [vmem:[#allocation14 + $0x1c] sm:$0xf]
    %v503 = vld [vmem:[#allocation14 + $0x20] sm:$0xf]
    %v504 = vld [vmem:[#allocation14 + $0x24] sm:$0xf]
    %v505 = vld [vmem:[#allocation14 + $0x28] sm:$0xf]
    %v506 = vld [vmem:[#allocation14 + $0x2c] sm:$0xf]
    %v507 = vld [vmem:[#allocation14 + $0x30] sm:$0xf]
    %v508 = vld [vmem:[#allocation14 + $0x34] sm:$0xf]
    %v509 = vld [vmem:[#allocation14 + $0x38] sm:$0xf]
    %v510 = vld [vmem:[#allocation14 + $0x3c] sm:$0xf]
    %v511 = vld [vmem:[%s5] sm:$0x1]
    %v513 = vperm.slane %v511, 0
    %v531 = vunpack.c.l.b16 %v479
    %v532 = vunpack.c.l.b16 %v480
    %v533 = vunpack.c.l.b16 %v481
    %v534 = vunpack.c.l.b16 %v482
    %v535 = vunpack.c.l.b16 %v483
    %v536 = vunpack.c.l.b16 %v484
    %v537 = vunpack.c.l.b16 %v485
    %v538 = vunpack.c.l.b16 %v486
    %v539 = vunpack.c.l.b16 %v487
    %v540 = vunpack.c.l.b16 %v488
    %v541 = vunpack.c.l.b16 %v489
    %v542 = vunpack.c.l.b16 %v490
    %v543 = vunpack.c.l.b16 %v491
    %v544 = vunpack.c.l.b16 %v492
    %v545 = vunpack.c.l.b16 %v493
    %v546 = vunpack.c.l.b16 %v494
    %v547 = vpack.c.b16 %v532, %v531
    %v548 = vpack.c.b16 %v534, %v533
    %v549 = vpack.c.b16 %v536, %v535
    %v550 = vpack.c.b16 %v538, %v537
    %v551 = vpack.c.b16 %v540, %v539
    %v552 = vpack.c.b16 %v542, %v541
    %v553 = vpack.c.b16 %v544, %v543
    %v554 = vpack.c.b16 %v546, %v545
    %v579 = vunpack.c.l.b16 %v495
    %v580 = vunpack.c.l.b16 %v496
    %v581 = vunpack.c.l.b16 %v497
    %v582 = vunpack.c.l.b16 %v498
    %v583 = vunpack.c.l.b16 %v499
    %v584 = vunpack.c.l.b16 %v500
    %v585 = vunpack.c.l.b16 %v501
    %v586 = vunpack.c.l.b16 %v502
    %v587 = vunpack.c.l.b16 %v503
    %v588 = vunpack.c.l.b16 %v504
    %v589 = vunpack.c.l.b16 %v505
    %v590 = vunpack.c.l.b16 %v506
    %v591 = vunpack.c.l.b16 %v507
    %v592 = vunpack.c.l.b16 %v508
    %v593 = vunpack.c.l.b16 %v509
    %v594 = vunpack.c.l.b16 %v510
    %v595 = vpack.c.b16 %v580, %v579
    %v596 = vpack.c.b16 %v582, %v581
    %v597 = vpack.c.b16 %v584, %v583
    %v598 = vpack.c.b16 %v586, %v585
    %v599 = vpack.c.b16 %v588, %v587
    %v600 = vpack.c.b16 %v590, %v589
    %v601 = vpack.c.b16 %v592, %v591
    %v602 = vpack.c.b16 %v594, %v593
    %611 = vmatpush.bf16.msra.mxu0 %v602
    %612 = vmatpush.bf16.msra.mxu0 %v601
    %613 = vmatpush.bf16.msra.mxu0 %v600
    %614 = vmatpush.bf16.msra.mxu0 %v599
    %615 = vmatpush.bf16.msra.mxu0 %v598
    %616 = vmatpush.bf16.msra.mxu0 %v597
    %617 = vmatpush.bf16.msra.mxu0 %v596
    %618 = vmatpush.bf16.msra.mxu0 %v595
    %619 = vmatmul.bf16.gmra.mxu0 %v547
    %v620 = vpop.f32.mrf.mxu0
    %v621 = vadd.f32 %v513, %v620
    %v622 = vpop.f32.mrf.mxu0
    %v623 = vadd.f32 %v513, %v622
    %624 = vmatmul.bf16.gmra.mxu0 %v548
    %v625 = vpop.f32.mrf.mxu0
    %v626 = vadd.f32 %v513, %v625
    %v627 = vpop.f32.mrf.mxu0
    %v628 = vadd.f32 %v513, %v627
    %629 = vmatmul.bf16.gmra.mxu0 %v549
    %v630 = vpop.f32.mrf.mxu0
    %v631 = vadd.f32 %v513, %v630
    %v632 = vpop.f32.mrf.mxu0
    %v633 = vadd.f32 %v513, %v632
    %634 = vmatmul.bf16.gmra.mxu0 %v550
    %v635 = vpop.f32.mrf.mxu0
    %v636 = vadd.f32 %v513, %v635
    %v637 = vpop.f32.mrf.mxu0
    %v638 = vadd.f32 %v513, %v637
    %639 = vmatmul.bf16.gmra.mxu0 %v551
    %v640 = vpop.f32.mrf.mxu0
    %v641 = vadd.f32 %v513, %v640
    %v642 = vpop.f32.mrf.mxu0
    %v643 = vadd.f32 %v513, %v642
    %644 = vmatmul.bf16.gmra.mxu0 %v552
    %v645 = vpop.f32.mrf.mxu0
    %v646 = vadd.f32 %v513, %v645
    %v647 = vpop.f32.mrf.mxu0
    %v648 = vadd.f32 %v513, %v647
    %649 = vmatmul.bf16.gmra.mxu0 %v553
    %v650 = vpop.f32.mrf.mxu0
    %v651 = vadd.f32 %v513, %v650
    %v652 = vpop.f32.mrf.mxu0
    %v653 = vadd.f32 %v513, %v652
    %654 = vmatmul.bf16.gmra.mxu0 %v554
    %v655 = vpop.f32.mrf.mxu0
    %v656 = vadd.f32 %v513, %v655
    %v657 = vpop.f32.mrf.mxu0
    %v658 = vadd.f32 %v513, %v657
    %659 = vdwg.mxu0
    %v660 = vmax.f32 %v621, 0.0
    %v661 = vmax.f32 %v623, 0.0
    %v662 = vmax.f32 %v626, 0.0
    %v663 = vmax.f32 %v628, 0.0
    %v664 = vmax.f32 %v631, 0.0
    %v665 = vmax.f32 %v633, 0.0
    %v666 = vmax.f32 %v636, 0.0
    %v667 = vmax.f32 %v638, 0.0
    %v668 = vmax.f32 %v641, 0.0
    %v669 = vmax.f32 %v643, 0.0
    %v670 = vmax.f32 %v646, 0.0
    %v671 = vmax.f32 %v648, 0.0
    %v672 = vmax.f32 %v651, 0.0
    %v673 = vmax.f32 %v653, 0.0
    %v674 = vmax.f32 %v656, 0.0
    %v675 = vmax.f32 %v658, 0.0
    %v676 = vpack.c.bf16 %v660, %v660
    %v677 = vpack.c.bf16 %v661, %v661
    %v678 = vpack.c.bf16 %v662, %v662
    %v679 = vpack.c.bf16 %v663, %v663
    %v680 = vpack.c.bf16 %v664, %v664
    %v681 = vpack.c.bf16 %v665, %v665
    %v682 = vpack.c.bf16 %v666, %v666
    %v683 = vpack.c.bf16 %v667, %v667
    %v684 = vpack.c.bf16 %v668, %v668
    %v685 = vpack.c.bf16 %v669, %v669
    %v686 = vpack.c.bf16 %v670, %v670
    %v687 = vpack.c.bf16 %v671, %v671
    %v688 = vpack.c.bf16 %v672, %v672
    %v689 = vpack.c.bf16 %v673, %v673
    %v690 = vpack.c.bf16 %v674, %v674
    %v691 = vpack.c.bf16 %v675, %v675
    %692 = vst [vmem:[#allocation4] sm:$0xf] %v676
    %693 = vst [vmem:[#allocation4 + $0x4] sm:$0xf] %v677
    %694 = vst [vmem:[#allocation4 + $0x8] sm:$0xf] %v678
    %695 = vst [vmem:[#allocation4 + $0xc] sm:$0xf] %v679
    %696 = vst [vmem:[#allocation4 + $0x10] sm:$0xf] %v680
    %697 = vst [vmem:[#allocation4 + $0x14] sm:$0xf] %v681
    %698 = vst [vmem:[#allocation4 + $0x18] sm:$0xf] %v682
    %699 = vst [vmem:[#allocation4 + $0x1c] sm:$0xf] %v683
    %700 = vst [vmem:[#allocation4 + $0x20] sm:$0xf] %v684
    %701 = vst [vmem:[#allocation4 + $0x24] sm:$0xf] %v685
    %702 = vst [vmem:[#allocation4 + $0x28] sm:$0xf] %v686
    %703 = vst [vmem:[#allocation4 + $0x2c] sm:$0xf] %v687
    %704 = vst [vmem:[#allocation4 + $0x30] sm:$0xf] %v688
    %705 = vst [vmem:[#allocation4 + $0x34] sm:$0xf] %v689
    %706 = vst [vmem:[#allocation4 + $0x38] sm:$0xf] %v690
    %707 = vst [vmem:[#allocation4 + $0x3c] sm:$0xf] %v691
    %s708 = smul.u32 4, 16
    %s709 = smul.u32 %s708, 1
    %s710 = sshll.u32 %s709, 4
    %711 = dma.done [#allocation7], %s710
    %v712 = vld [vmem:[#allocation5] sm:$0xf]
    %v713 = vld [vmem:[#allocation5 + $0x4] sm:$0xf]
    %v714 = vld [vmem:[#allocation5 + $0x8] sm:$0xf]
    %v715 = vld [vmem:[#allocation5 + $0xc] sm:$0xf]
    %v716 = vld [vmem:[#allocation5 + $0x10] sm:$0xf]
    %v717 = vld [vmem:[#allocation5 + $0x14] sm:$0xf]
    %v718 = vld [vmem:[#allocation5 + $0x18] sm:$0xf]
    %v719 = vld [vmem:[#allocation5 + $0x1c] sm:$0xf]
    %v720 = vld [vmem:[#allocation5 + $0x20] sm:$0xf]
    %v721 = vld [vmem:[#allocation5 + $0x24] sm:$0xf]
    %v722 = vld [vmem:[#allocation5 + $0x28] sm:$0xf]
    %v723 = vld [vmem:[#allocation5 + $0x2c] sm:$0xf]
    %v724 = vld [vmem:[#allocation5 + $0x30] sm:$0xf]
    %v725 = vld [vmem:[#allocation5 + $0x34] sm:$0xf]
    %v726 = vld [vmem:[#allocation5 + $0x38] sm:$0xf]
    %v727 = vld [vmem:[#allocation5 + $0x3c] sm:$0xf]
    %v728 = vld [vmem:[#allocation4] sm:$0xf]
    %v729 = vld [vmem:[#allocation4 + $0x4] sm:$0xf]
    %v730 = vld [vmem:[#allocation4 + $0x8] sm:$0xf]
    %v731 = vld [vmem:[#allocation4 + $0xc] sm:$0xf]
    %v732 = vld [vmem:[#allocation4 + $0x10] sm:$0xf]
    %v733 = vld [vmem:[#allocation4 + $0x14] sm:$0xf]
    %v734 = vld [vmem:[#allocation4 + $0x18] sm:$0xf]
    %v735 = vld [vmem:[#allocation4 + $0x1c] sm:$0xf]
    %v736 = vld [vmem:[#allocation4 + $0x20] sm:$0xf]
    %v737 = vld [vmem:[#allocation4 + $0x24] sm:$0xf]
    %v738 = vld [vmem:[#allocation4 + $0x28] sm:$0xf]
    %v739 = vld [vmem:[#allocation4 + $0x2c] sm:$0xf]
    %v740 = vld [vmem:[#allocation4 + $0x30] sm:$0xf]
    %v741 = vld [vmem:[#allocation4 + $0x34] sm:$0xf]
    %v742 = vld [vmem:[#allocation4 + $0x38] sm:$0xf]
    %v743 = vld [vmem:[#allocation4 + $0x3c] sm:$0xf]
    %v760 = vunpack.c.l.b16 %v712
    %v761 = vunpack.c.l.b16 %v713
    %v762 = vunpack.c.l.b16 %v714
    %v763 = vunpack.c.l.b16 %v715
    %v764 = vunpack.c.l.b16 %v716
    %v765 = vunpack.c.l.b16 %v717
    %v766 = vunpack.c.l.b16 %v718
    %v767 = vunpack.c.l.b16 %v719
    %v768 = vunpack.c.l.b16 %v720
    %v769 = vunpack.c.l.b16 %v721
    %v770 = vunpack.c.l.b16 %v722
    %v771 = vunpack.c.l.b16 %v723
    %v772 = vunpack.c.l.b16 %v724
    %v773 = vunpack.c.l.b16 %v725
    %v774 = vunpack.c.l.b16 %v726
    %v775 = vunpack.c.l.b16 %v727
    %v776 = vpack.c.b16 %v761, %v760
    %v777 = vpack.c.b16 %v763, %v762
    %v778 = vpack.c.b16 %v765, %v764
    %v779 = vpack.c.b16 %v767, %v766
    %v780 = vpack.c.b16 %v769, %v768
    %v781 = vpack.c.b16 %v771, %v770
    %v782 = vpack.c.b16 %v773, %v772
    %v783 = vpack.c.b16 %v775, %v774
    %v808 = vunpack.c.l.b16 %v728
    %v809 = vunpack.c.l.b16 %v729
    %v810 = vunpack.c.l.b16 %v730
    %v811 = vunpack.c.l.b16 %v731
    %v812 = vunpack.c.l.b16 %v732
    %v813 = vunpack.c.l.b16 %v733
    %v814 = vunpack.c.l.b16 %v734
    %v815 = vunpack.c.l.b16 %v735
    %v816 = vunpack.c.l.b16 %v736
    %v817 = vunpack.c.l.b16 %v737
    %v818 = vunpack.c.l.b16 %v738
    %v819 = vunpack.c.l.b16 %v739
    %v820 = vunpack.c.l.b16 %v740
    %v821 = vunpack.c.l.b16 %v741
    %v822 = vunpack.c.l.b16 %v742
    %v823 = vunpack.c.l.b16 %v743
    %v824 = vpack.c.b16 %v809, %v808
    %v825 = vpack.c.b16 %v811, %v810
    %v826 = vpack.c.b16 %v813, %v812
    %v827 = vpack.c.b16 %v815, %v814
    %v828 = vpack.c.b16 %v817, %v816
    %v829 = vpack.c.b16 %v819, %v818
    %v830 = vpack.c.b16 %v821, %v820
    %v831 = vpack.c.b16 %v823, %v822
    %840 = vmatpush.bf16.msra.mxu0 %v831
    %841 = vmatpush.bf16.msra.mxu0 %v830
    %842 = vmatpush.bf16.msra.mxu0 %v829
    %843 = vmatpush.bf16.msra.mxu0 %v828
    %844 = vmatpush.bf16.msra.mxu0 %v827
    %845 = vmatpush.bf16.msra.mxu0 %v826
    %846 = vmatpush.bf16.msra.mxu0 %v825
    %847 = vmatpush.bf16.msra.mxu0 %v824
    %848 = vmatmul.bf16.gmra.mxu0 %v776
    %v849 = vpop.f32.mrf.mxu0
    %v850 = vadd.f32 0.0, %v849
    %v851 = vpop.f32.mrf.mxu0
    %v852 = vadd.f32 0.0, %v851
    %853 = vmatmul.bf16.gmra.mxu0 %v777
    %v854 = vpop.f32.mrf.mxu0
    %v855 = vadd.f32 0.0, %v854
    %v856 = vpop.f32.mrf.mxu0
    %v857 = vadd.f32 0.0, %v856
    %858 = vmatmul.bf16.gmra.mxu0 %v778
    %v859 = vpop.f32.mrf.mxu0
    %v860 = vadd.f32 0.0, %v859
    %v861 = vpop.f32.mrf.mxu0
    %v862 = vadd.f32 0.0, %v861
    %863 = vmatmul.bf16.gmra.mxu0 %v779
    %v864 = vpop.f32.mrf.mxu0
    %v865 = vadd.f32 0.0, %v864
    %v866 = vpop.f32.mrf.mxu0
    %v867 = vadd.f32 0.0, %v866
    %868 = vmatmul.bf16.gmra.mxu0 %v780
    %v869 = vpop.f32.mrf.mxu0
    %v870 = vadd.f32 0.0, %v869
    %v871 = vpop.f32.mrf.mxu0
    %v872 = vadd.f32 0.0, %v871
    %873 = vmatmul.bf16.gmra.mxu0 %v781
    %v874 = vpop.f32.mrf.mxu0
    %v875 = vadd.f32 0.0, %v874
    %v876 = vpop.f32.mrf.mxu0
    %v877 = vadd.f32 0.0, %v876
    %878 = vmatmul.bf16.gmra.mxu0 %v782
    %v879 = vpop.f32.mrf.mxu0
    %v880 = vadd.f32 0.0, %v879
    %v881 = vpop.f32.mrf.mxu0
    %v882 = vadd.f32 0.0, %v881
    %883 = vmatmul.bf16.gmra.mxu0 %v783
    %v884 = vpop.f32.mrf.mxu0
    %v885 = vadd.f32 0.0, %v884
    %v886 = vpop.f32.mrf.mxu0
    %v887 = vadd.f32 0.0, %v886
    %888 = vdwg.mxu0
    %v889 = vpack.c.bf16 %v852, %v850
    %v890 = vpack.c.bf16 %v857, %v855
    %v891 = vpack.c.bf16 %v862, %v860
    %v892 = vpack.c.bf16 %v867, %v865
    %v893 = vpack.c.bf16 %v872, %v870
    %v894 = vpack.c.bf16 %v877, %v875
    %v895 = vpack.c.bf16 %v882, %v880
    %v896 = vpack.c.bf16 %v887, %v885
    %v897 = vld [vmem:[#allocation16] sm:$0xf]
    %v898 = vld [vmem:[#allocation16 + $0x4] sm:$0xf]
    %v899 = vld [vmem:[#allocation16 + $0x8] sm:$0xf]
    %v900 = vld [vmem:[#allocation16 + $0xc] sm:$0xf]
    %v901 = vld [vmem:[#allocation16 + $0x10] sm:$0xf]
    %v902 = vld [vmem:[#allocation16 + $0x14] sm:$0xf]
    %v903 = vld [vmem:[#allocation16 + $0x18] sm:$0xf]
    %v904 = vld [vmem:[#allocation16 + $0x1c] sm:$0xf]
    %v905 = vld [vmem:[#allocation16 + $0x20] sm:$0xf]
    %v906 = vld [vmem:[#allocation16 + $0x24] sm:$0xf]
    %v907 = vld [vmem:[#allocation16 + $0x28] sm:$0xf]
    %v908 = vld [vmem:[#allocation16 + $0x2c] sm:$0xf]
    %v909 = vld [vmem:[#allocation16 + $0x30] sm:$0xf]
    %v910 = vld [vmem:[#allocation16 + $0x34] sm:$0xf]
    %v911 = vld [vmem:[#allocation16 + $0x38] sm:$0xf]
    %v912 = vld [vmem:[#allocation16 + $0x3c] sm:$0xf]
    %v913 = vld [vmem:[#allocation2] sm:$0xf]
    %v914 = vld [vmem:[#allocation2 + $0x4] sm:$0xf]
    %v915 = vld [vmem:[#allocation2 + $0x8] sm:$0xf]
    %v916 = vld [vmem:[#allocation2 + $0xc] sm:$0xf]
    %v917 = vld [vmem:[#allocation2 + $0x10] sm:$0xf]
    %v918 = vld [vmem:[#allocation2 + $0x14] sm:$0xf]
    %v919 = vld [vmem:[#allocation2 + $0x18] sm:$0xf]
    %v920 = vld [vmem:[#allocation2 + $0x1c] sm:$0xf]
    %v921 = vld [vmem:[#allocation2 + $0x20] sm:$0xf]
    %v922 = vld [vmem:[#allocation2 + $0x24] sm:$0xf]
    %v923 = vld [vmem:[#allocation2 + $0x28] sm:$0xf]
    %v924 = vld [vmem:[#allocation2 + $0x2c] sm:$0xf]
    %v925 = vld [vmem:[#allocation2 + $0x30] sm:$0xf]
    %v926 = vld [vmem:[#allocation2 + $0x34] sm:$0xf]
    %v927 = vld [vmem:[#allocation2 + $0x38] sm:$0xf]
    %v928 = vld [vmem:[#allocation2 + $0x3c] sm:$0xf]
    %v929 = vld [vmem:[#allocation17] sm:$0xf]
    %v930 = vld [vmem:[#allocation17 + $0x4] sm:$0xf]
    %v931 = vld [vmem:[#allocation17 + $0x8] sm:$0xf]
    %v932 = vld [vmem:[#allocation17 + $0xc] sm:$0xf]
    %v933 = vld [vmem:[#allocation17 + $0x10] sm:$0xf]
    %v934 = vld [vmem:[#allocation17 + $0x14] sm:$0xf]
    %v935 = vld [vmem:[#allocation17 + $0x18] sm:$0xf]
    %v936 = vld [vmem:[#allocation17 + $0x1c] sm:$0xf]
    %v937 = vld [vmem:[#allocation17 + $0x20] sm:$0xf]
    %v938 = vld [vmem:[#allocation17 + $0x24] sm:$0xf]
    %v939 = vld [vmem:[#allocation17 + $0x28] sm:$0xf]
    %v940 = vld [vmem:[#allocation17 + $0x2c] sm:$0xf]
    %v941 = vld [vmem:[#allocation17 + $0x30] sm:$0xf]
    %v942 = vld [vmem:[#allocation17 + $0x34] sm:$0xf]
    %v943 = vld [vmem:[#allocation17 + $0x38] sm:$0xf]
    %v944 = vld [vmem:[#allocation17 + $0x3c] sm:$0xf]
    %v961 = vunpack.c.l.b16 %v913
    %v962 = vunpack.c.l.b16 %v914
    %v963 = vunpack.c.l.b16 %v915
    %v964 = vunpack.c.l.b16 %v916
    %v965 = vunpack.c.l.b16 %v917
    %v966 = vunpack.c.l.b16 %v918
    %v967 = vunpack.c.l.b16 %v919
    %v968 = vunpack.c.l.b16 %v920
    %v969 = vunpack.c.l.b16 %v921
    %v970 = vunpack.c.l.b16 %v922
    %v971 = vunpack.c.l.b16 %v923
    %v972 = vunpack.c.l.b16 %v924
    %v973 = vunpack.c.l.b16 %v925
    %v974 = vunpack.c.l.b16 %v926
    %v975 = vunpack.c.l.b16 %v927
    %v976 = vunpack.c.l.b16 %v928
    %v977 = vpack.c.b16 %v962, %v961
    %v978 = vpack.c.b16 %v964, %v963
    %v979 = vpack.c.b16 %v966, %v965
    %v980 = vpack.c.b16 %v968, %v967
    %v981 = vpack.c.b16 %v970, %v969
    %v982 = vpack.c.b16 %v972, %v971
    %v983 = vpack.c.b16 %v974, %v973
    %v984 = vpack.c.b16 %v976, %v975
    %v1009 = vunpack.c.l.b16 %v929
    %v1010 = vunpack.c.l.b16 %v930
    %v1011 = vunpack.c.l.b16 %v931
    %v1012 = vunpack.c.l.b16 %v932
    %v1013 = vunpack.c.l.b16 %v933
    %v1014 = vunpack.c.l.b16 %v934
    %v1015 = vunpack.c.l.b16 %v935
    %v1016 = vunpack.c.l.b16 %v936
    %v1017 = vunpack.c.l.b16 %v937
    %v1018 = vunpack.c.l.b16 %v938
    %v1019 = vunpack.c.l.b16 %v939
    %v1020 = vunpack.c.l.b16 %v940
    %v1021 = vunpack.c.l.b16 %v941
    %v1022 = vunpack.c.l.b16 %v942
    %v1023 = vunpack.c.l.b16 %v943
    %v1024 = vunpack.c.l.b16 %v944
    %v1025 = vpack.c.b16 %v1010, %v1009
    %v1026 = vpack.c.b16 %v1012, %v1011
    %v1027 = vpack.c.b16 %v1014, %v1013
    %v1028 = vpack.c.b16 %v1016, %v1015
    %v1029 = vpack.c.b16 %v1018, %v1017
    %v1030 = vpack.c.b16 %v1020, %v1019
    %v1031 = vpack.c.b16 %v1022, %v1021
    %v1032 = vpack.c.b16 %v1024, %v1023
    %1041 = vmatpush.bf16.msra.mxu0 %v1032
    %1042 = vmatpush.bf16.msra.mxu0 %v1031
    %1043 = vmatpush.bf16.msra.mxu0 %v1030
    %1044 = vmatpush.bf16.msra.mxu0 %v1029
    %1045 = vmatpush.bf16.msra.mxu0 %v1028
    %1046 = vmatpush.bf16.msra.mxu0 %v1027
    %1047 = vmatpush.bf16.msra.mxu0 %v1026
    %1048 = vmatpush.bf16.msra.mxu0 %v1025
    %1049 = vmatmul.bf16.gmra.mxu0 %v977
    %v1050 = vpop.f32.mrf.mxu0
    %v1051 = vadd.f32 0.0, %v1050
    %v1052 = vpop.f32.mrf.mxu0
    %v1053 = vadd.f32 0.0, %v1052
    %1054 = vmatmul.bf16.gmra.mxu0 %v978
    %v1055 = vpop.f32.mrf.mxu0
    %v1056 = vadd.f32 0.0, %v1055
    %v1057 = vpop.f32.mrf.mxu0
    %v1058 = vadd.f32 0.0, %v1057
    %1059 = vmatmul.bf16.gmra.mxu0 %v979
    %v1060 = vpop.f32.mrf.mxu0
    %v1061 = vadd.f32 0.0, %v1060
    %v1062 = vpop.f32.mrf.mxu0
    %v1063 = vadd.f32 0.0, %v1062
    %1064 = vmatmul.bf16.gmra.mxu0 %v980
    %v1065 = vpop.f32.mrf.mxu0
    %v1066 = vadd.f32 0.0, %v1065
    %v1067 = vpop.f32.mrf.mxu0
    %v1068 = vadd.f32 0.0, %v1067
    %1069 = vmatmul.bf16.gmra.mxu0 %v981
    %v1070 = vpop.f32.mrf.mxu0
    %v1071 = vadd.f32 0.0, %v1070
    %v1072 = vpop.f32.mrf.mxu0
    %v1073 = vadd.f32 0.0, %v1072
    %1074 = vmatmul.bf16.gmra.mxu0 %v982
    %v1075 = vpop.f32.mrf.mxu0
    %v1076 = vadd.f32 0.0, %v1075
    %v1077 = vpop.f32.mrf.mxu0
    %v1078 = vadd.f32 0.0, %v1077
    %1079 = vmatmul.bf16.gmra.mxu0 %v983
    %v1080 = vpop.f32.mrf.mxu0
    %v1081 = vadd.f32 0.0, %v1080
    %v1082 = vpop.f32.mrf.mxu0
    %v1083 = vadd.f32 0.0, %v1082
    %1084 = vmatmul.bf16.gmra.mxu0 %v984
    %v1085 = vpop.f32.mrf.mxu0
    %v1086 = vadd.f32 0.0, %v1085
    %v1087 = vpop.f32.mrf.mxu0
    %v1088 = vadd.f32 0.0, %v1087
    %1089 = vdwg.mxu0
    %v1106 = vunpack.c.l.b16 %v897
    %v1107 = vunpack.c.l.b16 %v898
    %v1108 = vunpack.c.l.b16 %v899
    %v1109 = vunpack.c.l.b16 %v900
    %v1110 = vunpack.c.l.b16 %v901
    %v1111 = vunpack.c.l.b16 %v902
    %v1112 = vunpack.c.l.b16 %v903
    %v1113 = vunpack.c.l.b16 %v904
    %v1114 = vunpack.c.l.b16 %v905
    %v1115 = vunpack.c.l.b16 %v906
    %v1116 = vunpack.c.l.b16 %v907
    %v1117 = vunpack.c.l.b16 %v908
    %v1118 = vunpack.c.l.b16 %v909
    %v1119 = vunpack.c.l.b16 %v910
    %v1120 = vunpack.c.l.b16 %v911
    %v1121 = vunpack.c.l.b16 %v912
    %v1122 = vpack.c.b16 %v1107, %v1106
    %v1123 = vpack.c.b16 %v1109, %v1108
    %v1124 = vpack.c.b16 %v1111, %v1110
    %v1125 = vpack.c.b16 %v1113, %v1112
    %v1126 = vpack.c.b16 %v1115, %v1114
    %v1127 = vpack.c.b16 %v1117, %v1116
    %v1128 = vpack.c.b16 %v1119, %v1118
    %v1129 = vpack.c.b16 %v1121, %v1120
    %1138 = vmatpush.bf16.msra.mxu0 %v1129
    %1139 = vmatpush.bf16.msra.mxu0 %v1128
    %1140 = vmatpush.bf16.msra.mxu0 %v1127
    %1141 = vmatpush.bf16.msra.mxu0 %v1126
    %1142 = vmatpush.bf16.msra.mxu0 %v1125
    %1143 = vmatpush.bf16.msra.mxu0 %v1124
    %1144 = vmatpush.bf16.msra.mxu0 %v1123
    %1145 = vmatpush.bf16.msra.mxu0 %v1122
    %1146 = vmatmul.bf16.gmra.mxu0 %v889
    %v1147 = vpop.f32.mrf.mxu0
    %v1148 = vadd.f32 %v1051, %v1147
    %v1149 = vpop.f32.mrf.mxu0
    %v1150 = vadd.f32 %v1053, %v1149
    %1151 = vmatmul.bf16.gmra.mxu0 %v890
    %v1152 = vpop.f32.mrf.mxu0
    %v1153 = vadd.f32 %v1056, %v1152
    %v1154 = vpop.f32.mrf.mxu0
    %v1155 = vadd.f32 %v1058, %v1154
    %1156 = vmatmul.bf16.gmra.mxu0 %v891
    %v1157 = vpop.f32.mrf.mxu0
    %v1158 = vadd.f32 %v1061, %v1157
    %v1159 = vpop.f32.mrf.mxu0
    %v1160 = vadd.f32 %v1063, %v1159
    %1161 = vmatmul.bf16.gmra.mxu0 %v892
    %v1162 = vpop.f32.mrf.mxu0
    %v1163 = vadd.f32 %v1066, %v1162
    %v1164 = vpop.f32.mrf.mxu0
    %v1165 = vadd.f32 %v1068, %v1164
    %1166 = vmatmul.bf16.gmra.mxu0 %v893
    %v1167 = vpop.f32.mrf.mxu0
    %v1168 = vadd.f32 %v1071, %v1167
    %v1169 = vpop.f32.mrf.mxu0
    %v1170 = vadd.f32 %v1073, %v1169
    %1171 = vmatmul.bf16.gmra.mxu0 %v894
    %v1172 = vpop.f32.mrf.mxu0
    %v1173 = vadd.f32 %v1076, %v1172
    %v1174 = vpop.f32.mrf.mxu0
    %v1175 = vadd.f32 %v1078, %v1174
    %1176 = vmatmul.bf16.gmra.mxu0 %v895
    %v1177 = vpop.f32.mrf.mxu0
    %v1178 = vadd.f32 %v1081, %v1177
    %v1179 = vpop.f32.mrf.mxu0
    %v1180 = vadd.f32 %v1083, %v1179
    %1181 = vmatmul.bf16.gmra.mxu0 %v896
    %v1182 = vpop.f32.mrf.mxu0
    %v1183 = vadd.f32 %v1086, %v1182
    %v1184 = vpop.f32.mrf.mxu0
    %v1185 = vadd.f32 %v1088, %v1184
    %1186 = vdwg.mxu0
    %v1187 = vld [vmem:[%s8] sm:$0x1]
    %v1189 = vperm.slane %v1187, 0
    %v1191 = vadd.f32 %v1148, %v1189
    %v1192 = vadd.f32 %v1150, %v1189
    %v1193 = vadd.f32 %v1153, %v1189
    %v1194 = vadd.f32 %v1155, %v1189
    %v1195 = vadd.f32 %v1158, %v1189
    %v1196 = vadd.f32 %v1160, %v1189
    %v1197 = vadd.f32 %v1163, %v1189
    %v1198 = vadd.f32 %v1165, %v1189
    %v1199 = vadd.f32 %v1168, %v1189
    %v1200 = vadd.f32 %v1170, %v1189
    %v1201 = vadd.f32 %v1173, %v1189
    %v1202 = vadd.f32 %v1175, %v1189
    %v1203 = vadd.f32 %v1178, %v1189
    %v1204 = vadd.f32 %v1180, %v1189
    %v1205 = vadd.f32 %v1183, %v1189
    %v1206 = vadd.f32 %v1185, %v1189
    %v1207 = vmax.f32 %v1191, 0.0
    %v1208 = vmax.f32 %v1192, 0.0
    %v1209 = vmax.f32 %v1193, 0.0
    %v1210 = vmax.f32 %v1194, 0.0
    %v1211 = vmax.f32 %v1195, 0.0
    %v1212 = vmax.f32 %v1196, 0.0
    %v1213 = vmax.f32 %v1197, 0.0
    %v1214 = vmax.f32 %v1198, 0.0
    %v1215 = vmax.f32 %v1199, 0.0
    %v1216 = vmax.f32 %v1200, 0.0
    %v1217 = vmax.f32 %v1201, 0.0
    %v1218 = vmax.f32 %v1202, 0.0
    %v1219 = vmax.f32 %v1203, 0.0
    %v1220 = vmax.f32 %v1204, 0.0
    %v1221 = vmax.f32 %v1205, 0.0
    %v1222 = vmax.f32 %v1206, 0.0
    %v1223 = vmul.f32 %v1207, %v1207
    %v1224 = vmul.f32 %v1208, %v1208
    %v1225 = vmul.f32 %v1209, %v1209
    %v1226 = vmul.f32 %v1210, %v1210
    %v1227 = vmul.f32 %v1211, %v1211
    %v1228 = vmul.f32 %v1212, %v1212
    %v1229 = vmul.f32 %v1213, %v1213
    %v1230 = vmul.f32 %v1214, %v1214
    %v1231 = vmul.f32 %v1215, %v1215
    %v1232 = vmul.f32 %v1216, %v1216
    %v1233 = vmul.f32 %v1217, %v1217
    %v1234 = vmul.f32 %v1218, %v1218
    %v1235 = vmul.f32 %v1219, %v1219
    %v1236 = vmul.f32 %v1220, %v1220
    %v1237 = vmul.f32 %v1221, %v1221
    %v1238 = vmul.f32 %v1222, %v1222
    %1239 = vadd.xlane.f32.xlu0 %v1223
    %v1240 = vpop.xlane.xlu0 %1239
    %1241 = vadd.xlane.f32.xlu0 %v1224
    %v1242 = vpop.xlane.xlu0 %1241
    %1243 = vadd.xlane.f32.xlu0 %v1225
    %v1244 = vpop.xlane.xlu0 %1243
    %1245 = vadd.xlane.f32.xlu0 %v1226
    %v1246 = vpop.xlane.xlu0 %1245
    %1247 = vadd.xlane.f32.xlu0 %v1227
    %v1248 = vpop.xlane.xlu0 %1247
    %1249 = vadd.xlane.f32.xlu0 %v1228
    %v1250 = vpop.xlane.xlu0 %1249
    %1251 = vadd.xlane.f32.xlu0 %v1229
    %v1252 = vpop.xlane.xlu0 %1251
    %1253 = vadd.xlane.f32.xlu0 %v1230
    %v1254 = vpop.xlane.xlu0 %1253
    %1255 = vadd.xlane.f32.xlu0 %v1231
    %v1256 = vpop.xlane.xlu0 %1255
    %1257 = vadd.xlane.f32.xlu0 %v1232
    %v1258 = vpop.xlane.xlu0 %1257
    %1259 = vadd.xlane.f32.xlu0 %v1233
    %v1260 = vpop.xlane.xlu0 %1259
    %1261 = vadd.xlane.f32.xlu0 %v1234
    %v1262 = vpop.xlane.xlu0 %1261
    %1263 = vadd.xlane.f32.xlu0 %v1235
    %v1264 = vpop.xlane.xlu0 %1263
    %1265 = vadd.xlane.f32.xlu0 %v1236
    %v1266 = vpop.xlane.xlu0 %1265
    %1267 = vadd.xlane.f32.xlu0 %v1237
    %v1268 = vpop.xlane.xlu0 %1267
    %1269 = vadd.xlane.f32.xlu0 %v1238
    %v1270 = vpop.xlane.xlu0 %1269
    %v1271 = vadd.f32 %v1240, 1e-12
    %v1272 = vadd.f32 %v1242, 1e-12
    %v1273 = vadd.f32 %v1244, 1e-12
    %v1274 = vadd.f32 %v1246, 1e-12
    %v1275 = vadd.f32 %v1248, 1e-12
    %v1276 = vadd.f32 %v1250, 1e-12
    %v1277 = vadd.f32 %v1252, 1e-12
    %v1278 = vadd.f32 %v1254, 1e-12
    %v1279 = vadd.f32 %v1256, 1e-12
    %v1280 = vadd.f32 %v1258, 1e-12
    %v1281 = vadd.f32 %v1260, 1e-12
    %v1282 = vadd.f32 %v1262, 1e-12
    %v1283 = vadd.f32 %v1264, 1e-12
    %v1284 = vadd.f32 %v1266, 1e-12
    %v1285 = vadd.f32 %v1268, 1e-12
    %v1286 = vadd.f32 %v1270, 1e-12
    %v1287 = vrsqrt.pop %v1271
    %v1288 = vmul.f32 %v1287, %v1271
    %v1289 = vmul.f32 %v1288, %v1287
    %v1290 = vmul.f32 0.5, %v1289
    %v1291 = vsub.f32 1.5, %v1290
    %v1292 = vmul.f32 %v1287, %v1291
    %vm1293 = vweird.f32 %v1271
    %vm1294 = vweird.f32 %v1287
    %vm1295 = vmor %vm1293, %vm1294
    %v1296 = vsel %vm1295, %v1287, %v1292
    %v1297 = vrsqrt.pop %v1272
    %v1298 = vmul.f32 %v1297, %v1272
    %v1299 = vmul.f32 %v1298, %v1297
    %v1300 = vmul.f32 0.5, %v1299
    %v1301 = vsub.f32 1.5, %v1300
    %v1302 = vmul.f32 %v1297, %v1301
    %vm1303 = vweird.f32 %v1272
    %vm1304 = vweird.f32 %v1297
    %vm1305 = vmor %vm1303, %vm1304
    %v1306 = vsel %vm1305, %v1297, %v1302
    %v1307 = vrsqrt.pop %v1273
    %v1308 = vmul.f32 %v1307, %v1273
    %v1309 = vmul.f32 %v1308, %v1307
    %v1310 = vmul.f32 0.5, %v1309
    %v1311 = vsub.f32 1.5, %v1310
    %v1312 = vmul.f32 %v1307, %v1311
    %vm1313 = vweird.f32 %v1273
    %vm1314 = vweird.f32 %v1307
    %vm1315 = vmor %vm1313, %vm1314
    %v1316 = vsel %vm1315, %v1307, %v1312
    %v1317 = vrsqrt.pop %v1274
    %v1318 = vmul.f32 %v1317, %v1274
    %v1319 = vmul.f32 %v1318, %v1317
    %v1320 = vmul.f32 0.5, %v1319
    %v1321 = vsub.f32 1.5, %v1320
    %v1322 = vmul.f32 %v1317, %v1321
    %vm1323 = vweird.f32 %v1274
    %vm1324 = vweird.f32 %v1317
    %vm1325 = vmor %vm1323, %vm1324
    %v1326 = vsel %vm1325, %v1317, %v1322
    %v1327 = vrsqrt.pop %v1275
    %v1328 = vmul.f32 %v1327, %v1275
    %v1329 = vmul.f32 %v1328, %v1327
    %v1330 = vmul.f32 0.5, %v1329
    %v1331 = vsub.f32 1.5, %v1330
    %v1332 = vmul.f32 %v1327, %v1331
    %vm1333 = vweird.f32 %v1275
    %vm1334 = vweird.f32 %v1327
    %vm1335 = vmor %vm1333, %vm1334
    %v1336 = vsel %vm1335, %v1327, %v1332
    %v1337 = vrsqrt.pop %v1276
    %v1338 = vmul.f32 %v1337, %v1276
    %v1339 = vmul.f32 %v1338, %v1337
    %v1340 = vmul.f32 0.5, %v1339
    %v1341 = vsub.f32 1.5, %v1340
    %v1342 = vmul.f32 %v1337, %v1341
    %vm1343 = vweird.f32 %v1276
    %vm1344 = vweird.f32 %v1337
    %vm1345 = vmor %vm1343, %vm1344
    %v1346 = vsel %vm1345, %v1337, %v1342
    %v1347 = vrsqrt.pop %v1277
    %v1348 = vmul.f32 %v1347, %v1277
    %v1349 = vmul.f32 %v1348, %v1347
    %v1350 = vmul.f32 0.5, %v1349
    %v1351 = vsub.f32 1.5, %v1350
    %v1352 = vmul.f32 %v1347, %v1351
    %vm1353 = vweird.f32 %v1277
    %vm1354 = vweird.f32 %v1347
    %vm1355 = vmor %vm1353, %vm1354
    %v1356 = vsel %vm1355, %v1347, %v1352
    %v1357 = vrsqrt.pop %v1278
    %v1358 = vmul.f32 %v1357, %v1278
    %v1359 = vmul.f32 %v1358, %v1357
    %v1360 = vmul.f32 0.5, %v1359
    %v1361 = vsub.f32 1.5, %v1360
    %v1362 = vmul.f32 %v1357, %v1361
    %vm1363 = vweird.f32 %v1278
    %vm1364 = vweird.f32 %v1357
    %vm1365 = vmor %vm1363, %vm1364
    %v1366 = vsel %vm1365, %v1357, %v1362
    %v1367 = vrsqrt.pop %v1279
    %v1368 = vmul.f32 %v1367, %v1279
    %v1369 = vmul.f32 %v1368, %v1367
    %v1370 = vmul.f32 0.5, %v1369
    %v1371 = vsub.f32 1.5, %v1370
    %v1372 = vmul.f32 %v1367, %v1371
    %vm1373 = vweird.f32 %v1279
    %vm1374 = vweird.f32 %v1367
    %vm1375 = vmor %vm1373, %vm1374
    %v1376 = vsel %vm1375, %v1367, %v1372
    %v1377 = vrsqrt.pop %v1280
    %v1378 = vmul.f32 %v1377, %v1280
    %v1379 = vmul.f32 %v1378, %v1377
    %v1380 = vmul.f32 0.5, %v1379
    %v1381 = vsub.f32 1.5, %v1380
    %v1382 = vmul.f32 %v1377, %v1381
    %vm1383 = vweird.f32 %v1280
    %vm1384 = vweird.f32 %v1377
    %vm1385 = vmor %vm1383, %vm1384
    %v1386 = vsel %vm1385, %v1377, %v1382
    %v1387 = vrsqrt.pop %v1281
    %v1388 = vmul.f32 %v1387, %v1281
    %v1389 = vmul.f32 %v1388, %v1387
    %v1390 = vmul.f32 0.5, %v1389
    %v1391 = vsub.f32 1.5, %v1390
    %v1392 = vmul.f32 %v1387, %v1391
    %vm1393 = vweird.f32 %v1281
    %vm1394 = vweird.f32 %v1387
    %vm1395 = vmor %vm1393, %vm1394
    %v1396 = vsel %vm1395, %v1387, %v1392
    %v1397 = vrsqrt.pop %v1282
    %v1398 = vmul.f32 %v1397, %v1282
    %v1399 = vmul.f32 %v1398, %v1397
    %v1400 = vmul.f32 0.5, %v1399
    %v1401 = vsub.f32 1.5, %v1400
    %v1402 = vmul.f32 %v1397, %v1401
    %vm1403 = vweird.f32 %v1282
    %vm1404 = vweird.f32 %v1397
    %vm1405 = vmor %vm1403, %vm1404
    %v1406 = vsel %vm1405, %v1397, %v1402
    %v1407 = vrsqrt.pop %v1283
    %v1408 = vmul.f32 %v1407, %v1283
    %v1409 = vmul.f32 %v1408, %v1407
    %v1410 = vmul.f32 0.5, %v1409
    %v1411 = vsub.f32 1.5, %v1410
    %v1412 = vmul.f32 %v1407, %v1411
    %vm1413 = vweird.f32 %v1283
    %vm1414 = vweird.f32 %v1407
    %vm1415 = vmor %vm1413, %vm1414
    %v1416 = vsel %vm1415, %v1407, %v1412
    %v1417 = vrsqrt.pop %v1284
    %v1418 = vmul.f32 %v1417, %v1284
    %v1419 = vmul.f32 %v1418, %v1417
    %v1420 = vmul.f32 0.5, %v1419
    %v1421 = vsub.f32 1.5, %v1420
    %v1422 = vmul.f32 %v1417, %v1421
    %vm1423 = vweird.f32 %v1284
    %vm1424 = vweird.f32 %v1417
    %vm1425 = vmor %vm1423, %vm1424
    %v1426 = vsel %vm1425, %v1417, %v1422
    %v1427 = vrsqrt.pop %v1285
    %v1428 = vmul.f32 %v1427, %v1285
    %v1429 = vmul.f32 %v1428, %v1427
    %v1430 = vmul.f32 0.5, %v1429
    %v1431 = vsub.f32 1.5, %v1430
    %v1432 = vmul.f32 %v1427, %v1431
    %vm1433 = vweird.f32 %v1285
    %vm1434 = vweird.f32 %v1427
    %vm1435 = vmor %vm1433, %vm1434
    %v1436 = vsel %vm1435, %v1427, %v1432
    %v1437 = vrsqrt.pop %v1286
    %v1438 = vmul.f32 %v1437, %v1286
    %v1439 = vmul.f32 %v1438, %v1437
    %v1440 = vmul.f32 0.5, %v1439
    %v1441 = vsub.f32 1.5, %v1440
    %v1442 = vmul.f32 %v1437, %v1441
    %vm1443 = vweird.f32 %v1286
    %vm1444 = vweird.f32 %v1437
    %vm1445 = vmor %vm1443, %vm1444
    %v1446 = vsel %vm1445, %v1437, %v1442
    %v1447 = vmul.f32 %v1207, %v1296
    %v1448 = vmul.f32 %v1208, %v1306
    %v1449 = vmul.f32 %v1209, %v1316
    %v1450 = vmul.f32 %v1210, %v1326
    %v1451 = vmul.f32 %v1211, %v1336
    %v1452 = vmul.f32 %v1212, %v1346
    %v1453 = vmul.f32 %v1213, %v1356
    %v1454 = vmul.f32 %v1214, %v1366
    %v1455 = vmul.f32 %v1215, %v1376
    %v1456 = vmul.f32 %v1216, %v1386
    %v1457 = vmul.f32 %v1217, %v1396
    %v1458 = vmul.f32 %v1218, %v1406
    %v1459 = vmul.f32 %v1219, %v1416
    %v1460 = vmul.f32 %v1220, %v1426
    %v1461 = vmul.f32 %v1221, %v1436
    %v1462 = vmul.f32 %v1222, %v1446
    %v1463 = vpack.c.bf16 %v1447, %v1447
    %v1464 = vpack.c.bf16 %v1448, %v1448
    %v1465 = vpack.c.bf16 %v1449, %v1449
    %v1466 = vpack.c.bf16 %v1450, %v1450
    %v1467 = vpack.c.bf16 %v1451, %v1451
    %v1468 = vpack.c.bf16 %v1452, %v1452
    %v1469 = vpack.c.bf16 %v1453, %v1453
    %v1470 = vpack.c.bf16 %v1454, %v1454
    %v1471 = vpack.c.bf16 %v1455, %v1455
    %v1472 = vpack.c.bf16 %v1456, %v1456
    %v1473 = vpack.c.bf16 %v1457, %v1457
    %v1474 = vpack.c.bf16 %v1458, %v1458
    %v1475 = vpack.c.bf16 %v1459, %v1459
    %v1476 = vpack.c.bf16 %v1460, %v1460
    %v1477 = vpack.c.bf16 %v1461, %v1461
    %v1478 = vpack.c.bf16 %v1462, %v1462
    %1479 = vst [vmem:[#allocation2] sm:$0xf] %v1463
    %1480 = vst [vmem:[#allocation2 + $0x4] sm:$0xf] %v1464
    %1481 = vst [vmem:[#allocation2 + $0x8] sm:$0xf] %v1465
    %1482 = vst [vmem:[#allocation2 + $0xc] sm:$0xf] %v1466
    %1483 = vst [vmem:[#allocation2 + $0x10] sm:$0xf] %v1467
    %1484 = vst [vmem:[#allocation2 + $0x14] sm:$0xf] %v1468
    %1485 = vst [vmem:[#allocation2 + $0x18] sm:$0xf] %v1469
    %1486 = vst [vmem:[#allocation2 + $0x1c] sm:$0xf] %v1470
    %1487 = vst [vmem:[#allocation2 + $0x20] sm:$0xf] %v1471
    %1488 = vst [vmem:[#allocation2 + $0x24] sm:$0xf] %v1472
    %1489 = vst [vmem:[#allocation2 + $0x28] sm:$0xf] %v1473
    %1490 = vst [vmem:[#allocation2 + $0x2c] sm:$0xf] %v1474
    %1491 = vst [vmem:[#allocation2 + $0x30] sm:$0xf] %v1475
    %1492 = vst [vmem:[#allocation2 + $0x34] sm:$0xf] %v1476
    %1493 = vst [vmem:[#allocation2 + $0x38] sm:$0xf] %v1477
    %1494 = vst [vmem:[#allocation2 + $0x3c] sm:$0xf] %v1478
    %s1495 = scalar_lea.sflag [#allocation7], 2
    // Predicated region
    $region106: #{tpu_custom_call.1} parent=1 // pred_check
      _
    $region107: #{tpu_custom_call.1} parent=1 // pred_check_branch
      %1497 = sbr.rel target = $region109
    $region108: #{tpu_custom_call.1} parent=1 // pred_region
      %1498 = sst [smem:[#allocation28]] [#allocation31]
      %1499 = sst [smem:[#allocation29]] [#allocation30]
    $region109: #{tpu_custom_call.1} parent=1 // pred_fallthru
      _
    %1501 = shalt.err (0)
    %s1503 = sshll.u32 %s9, 4
    %s1504 = int_to_ptr.hbm [resolvable:$true] %s1503
    %s1505 = sshll.u32 [#allocation6], 4
    %s1506 = int_to_ptr.vmem [resolvable:$true] %s1505
    %1508 = dma.hbm_to_vmem [thread:$0]  %s1504, 1024, %s1506, %s1495
    %v1509 = vld [vmem:[#allocation2] sm:$0xf]
    %v1510 = vld [vmem:[#allocation2 + $0x4] sm:$0xf]
    %v1511 = vld [vmem:[#allocation2 + $0x8] sm:$0xf]
    %v1512 = vld [vmem:[#allocation2 + $0xc] sm:$0xf]
    %v1513 = vld [vmem:[#allocation2 + $0x10] sm:$0xf]
    %v1514 = vld [vmem:[#allocation2 + $0x14] sm:$0xf]
    %v1515 = vld [vmem:[#allocation2 + $0x18] sm:$0xf]
    %v1516 = vld [vmem:[#allocation2 + $0x1c] sm:$0xf]
    %v1517 = vld [vmem:[#allocation2 + $0x20] sm:$0xf]
    %v1518 = vld [vmem:[#allocation2 + $0x24] sm:$0xf]
    %v1519 = vld [vmem:[#allocation2 + $0x28] sm:$0xf]
    %v1520 = vld [vmem:[#allocation2 + $0x2c] sm:$0xf]
    %v1521 = vld [vmem:[#allocation2 + $0x30] sm:$0xf]
    %v1522 = vld [vmem:[#allocation2 + $0x34] sm:$0xf]
    %v1523 = vld [vmem:[#allocation2 + $0x38] sm:$0xf]
    %v1524 = vld [vmem:[#allocation2 + $0x3c] sm:$0xf]
    %v1525 = vld [vmem:[#allocation19] sm:$0xf]
    %v1526 = vld [vmem:[#allocation19 + $0x4] sm:$0xf]
    %v1527 = vld [vmem:[#allocation19 + $0x8] sm:$0xf]
    %v1528 = vld [vmem:[#allocation19 + $0xc] sm:$0xf]
    %v1529 = vld [vmem:[#allocation19 + $0x10] sm:$0xf]
    %v1530 = vld [vmem:[#allocation19 + $0x14] sm:$0xf]
    %v1531 = vld [vmem:[#allocation19 + $0x18] sm:$0xf]
    %v1532 = vld [vmem:[#allocation19 + $0x1c] sm:$0xf]
    %v1533 = vld [vmem:[#allocation19 + $0x20] sm:$0xf]
    %v1534 = vld [vmem:[#allocation19 + $0x24] sm:$0xf]
    %v1535 = vld [vmem:[#allocation19 + $0x28] sm:$0xf]
    %v1536 = vld [vmem:[#allocation19 + $0x2c] sm:$0xf]
    %v1537 = vld [vmem:[#allocation19 + $0x30] sm:$0xf]
    %v1538 = vld [vmem:[#allocation19 + $0x34] sm:$0xf]
    %v1539 = vld [vmem:[#allocation19 + $0x38] sm:$0xf]
    %v1540 = vld [vmem:[#allocation19 + $0x3c] sm:$0xf]
    %v1541 = vld [vmem:[%s11] sm:$0x1]
    %v1543 = vperm.slane %v1541, 0
    %v1561 = vunpack.c.l.b16 %v1509
    %v1562 = vunpack.c.l.b16 %v1510
    %v1563 = vunpack.c.l.b16 %v1511
    %v1564 = vunpack.c.l.b16 %v1512
    %v1565 = vunpack.c.l.b16 %v1513
    %v1566 = vunpack.c.l.b16 %v1514
    %v1567 = vunpack.c.l.b16 %v1515
    %v1568 = vunpack.c.l.b16 %v1516
    %v1569 = vunpack.c.l.b16 %v1517
    %v1570 = vunpack.c.l.b16 %v1518
    %v1571 = vunpack.c.l.b16 %v1519
    %v1572 = vunpack.c.l.b16 %v1520
    %v1573 = vunpack.c.l.b16 %v1521
    %v1574 = vunpack.c.l.b16 %v1522
    %v1575 = vunpack.c.l.b16 %v1523
    %v1576 = vunpack.c.l.b16 %v1524
    %v1577 = vpack.c.b16 %v1562, %v1561
    %v1578 = vpack.c.b16 %v1564, %v1563
    %v1579 = vpack.c.b16 %v1566, %v1565
    %v1580 = vpack.c.b16 %v1568, %v1567
    %v1581 = vpack.c.b16 %v1570, %v1569
    %v1582 = vpack.c.b16 %v1572, %v1571
    %v1583 = vpack.c.b16 %v1574, %v1573
    %v1584 = vpack.c.b16 %v1576, %v1575
    %v1609 = vunpack.c.l.b16 %v1525
    %v1610 = vunpack.c.l.b16 %v1526
    %v1611 = vunpack.c.l.b16 %v1527
    %v1612 = vunpack.c.l.b16 %v1528
    %v1613 = vunpack.c.l.b16 %v1529
    %v1614 = vunpack.c.l.b16 %v1530
    %v1615 = vunpack.c.l.b16 %v1531
    %v1616 = vunpack.c.l.b16 %v1532
    %v1617 = vunpack.c.l.b16 %v1533
    %v1618 = vunpack.c.l.b16 %v1534
    %v1619 = vunpack.c.l.b16 %v1535
    %v1620 = vunpack.c.l.b16 %v1536
    %v1621 = vunpack.c.l.b16 %v1537
    %v1622 = vunpack.c.l.b16 %v1538
    %v1623 = vunpack.c.l.b16 %v1539
    %v1624 = vunpack.c.l.b16 %v1540
    %v1625 = vpack.c.b16 %v1610, %v1609
    %v1626 = vpack.c.b16 %v1612, %v1611
    %v1627 = vpack.c.b16 %v1614, %v1613
    %v1628 = vpack.c.b16 %v1616, %v1615
    %v1629 = vpack.c.b16 %v1618, %v1617
    %v1630 = vpack.c.b16 %v1620, %v1619
    %v1631 = vpack.c.b16 %v1622, %v1621
    %v1632 = vpack.c.b16 %v1624, %v1623
    %1641 = vmatpush.bf16.msra.mxu0 %v1632
    %1642 = vmatpush.bf16.msra.mxu0 %v1631
    %1643 = vmatpush.bf16.msra.mxu0 %v1630
    %1644 = vmatpush.bf16.msra.mxu0 %v1629
    %1645 = vmatpush.bf16.msra.mxu0 %v1628
    %1646 = vmatpush.bf16.msra.mxu0 %v1627
    %1647 = vmatpush.bf16.msra.mxu0 %v1626
    %1648 = vmatpush.bf16.msra.mxu0 %v1625
    %1649 = vmatmul.bf16.gmra.mxu0 %v1577
    %v1650 = vpop.f32.mrf.mxu0
    %v1651 = vadd.f32 %v1543, %v1650
    %v1652 = vpop.f32.mrf.mxu0
    %v1653 = vadd.f32 %v1543, %v1652
    %1654 = vmatmul.bf16.gmra.mxu0 %v1578
    %v1655 = vpop.f32.mrf.mxu0
    %v1656 = vadd.f32 %v1543, %v1655
    %v1657 = vpop.f32.mrf.mxu0
    %v1658 = vadd.f32 %v1543, %v1657
    %1659 = vmatmul.bf16.gmra.mxu0 %v1579
    %v1660 = vpop.f32.mrf.mxu0
    %v1661 = vadd.f32 %v1543, %v1660
    %v1662 = vpop.f32.mrf.mxu0
    %v1663 = vadd.f32 %v1543, %v1662
    %1664 = vmatmul.bf16.gmra.mxu0 %v1580
    %v1665 = vpop.f32.mrf.mxu0
    %v1666 = vadd.f32 %v1543, %v1665
    %v1667 = vpop.f32.mrf.mxu0
    %v1668 = vadd.f32 %v1543, %v1667
    %1669 = vmatmul.bf16.gmra.mxu0 %v1581
    %v1670 = vpop.f32.mrf.mxu0
    %v1671 = vadd.f32 %v1543, %v1670
    %v1672 = vpop.f32.mrf.mxu0
    %v1673 = vadd.f32 %v1543, %v1672
    %1674 = vmatmul.bf16.gmra.mxu0 %v1582
    %v1675 = vpop.f32.mrf.mxu0
    %v1676 = vadd.f32 %v1543, %v1675
    %v1677 = vpop.f32.mrf.mxu0
    %v1678 = vadd.f32 %v1543, %v1677
    %1679 = vmatmul.bf16.gmra.mxu0 %v1583
    %v1680 = vpop.f32.mrf.mxu0
    %v1681 = vadd.f32 %v1543, %v1680
    %v1682 = vpop.f32.mrf.mxu0
    %v1683 = vadd.f32 %v1543, %v1682
    %1684 = vmatmul.bf16.gmra.mxu0 %v1584
    %v1685 = vpop.f32.mrf.mxu0
    %v1686 = vadd.f32 %v1543, %v1685
    %v1687 = vpop.f32.mrf.mxu0
    %v1688 = vadd.f32 %v1543, %v1687
    %1689 = vdwg.mxu0
    %v1690 = vmax.f32 %v1651, 0.0
    %v1691 = vmax.f32 %v1653, 0.0
    %v1692 = vmax.f32 %v1656, 0.0
    %v1693 = vmax.f32 %v1658, 0.0
    %v1694 = vmax.f32 %v1661, 0.0
    %v1695 = vmax.f32 %v1663, 0.0
    %v1696 = vmax.f32 %v1666, 0.0
    %v1697 = vmax.f32 %v1668, 0.0
    %v1698 = vmax.f32 %v1671, 0.0
    %v1699 = vmax.f32 %v1673, 0.0
    %v1700 = vmax.f32 %v1676, 0.0
    %v1701 = vmax.f32 %v1678, 0.0
    %v1702 = vmax.f32 %v1681, 0.0
    %v1703 = vmax.f32 %v1683, 0.0
    %v1704 = vmax.f32 %v1686, 0.0
    %v1705 = vmax.f32 %v1688, 0.0
    %v1706 = vpack.c.bf16 %v1690, %v1690
    %v1707 = vpack.c.bf16 %v1691, %v1691
    %v1708 = vpack.c.bf16 %v1692, %v1692
    %v1709 = vpack.c.bf16 %v1693, %v1693
    %v1710 = vpack.c.bf16 %v1694, %v1694
    %v1711 = vpack.c.bf16 %v1695, %v1695
    %v1712 = vpack.c.bf16 %v1696, %v1696
    %v1713 = vpack.c.bf16 %v1697, %v1697
    %v1714 = vpack.c.bf16 %v1698, %v1698
    %v1715 = vpack.c.bf16 %v1699, %v1699
    %v1716 = vpack.c.bf16 %v1700, %v1700
    %v1717 = vpack.c.bf16 %v1701, %v1701
    %v1718 = vpack.c.bf16 %v1702, %v1702
    %v1719 = vpack.c.bf16 %v1703, %v1703
    %v1720 = vpack.c.bf16 %v1704, %v1704
    %v1721 = vpack.c.bf16 %v1705, %v1705
    %1722 = vst [vmem:[#allocation4] sm:$0xf] %v1706
    %1723 = vst [vmem:[#allocation4 + $0x4] sm:$0xf] %v1707
    %1724 = vst [vmem:[#allocation4 + $0x8] sm:$0xf] %v1708
    %1725 = vst [vmem:[#allocation4 + $0xc] sm:$0xf] %v1709
    %1726 = vst [vmem:[#allocation4 + $0x10] sm:$0xf] %v1710
    %1727 = vst [vmem:[#allocation4 + $0x14] sm:$0xf] %v1711
    %1728 = vst [vmem:[#allocation4 + $0x18] sm:$0xf] %v1712
    %1729 = vst [vmem:[#allocation4 + $0x1c] sm:$0xf] %v1713
    %1730 = vst [vmem:[#allocation4 + $0x20] sm:$0xf] %v1714
    %1731 = vst [vmem:[#allocation4 + $0x24] sm:$0xf] %v1715
    %1732 = vst [vmem:[#allocation4 + $0x28] sm:$0xf] %v1716
    %1733 = vst [vmem:[#allocation4 + $0x2c] sm:$0xf] %v1717
    %1734 = vst [vmem:[#allocation4 + $0x30] sm:$0xf] %v1718
    %1735 = vst [vmem:[#allocation4 + $0x34] sm:$0xf] %v1719
    %1736 = vst [vmem:[#allocation4 + $0x38] sm:$0xf] %v1720
    %1737 = vst [vmem:[#allocation4 + $0x3c] sm:$0xf] %v1721
    %s1738 = sshll.u32 %s709, 4
    %1739 = dma.done %s1495, %s1738
    %v1740 = vld [vmem:[#allocation6] sm:$0xf]
    %v1741 = vld [vmem:[#allocation6 + $0x4] sm:$0xf]
    %v1742 = vld [vmem:[#allocation6 + $0x8] sm:$0xf]
    %v1743 = vld [vmem:[#allocation6 + $0xc] sm:$0xf]
    %v1744 = vld [vmem:[#allocation6 + $0x10] sm:$0xf]
    %v1745 = vld [vmem:[#allocation6 + $0x14] sm:$0xf]
    %v1746 = vld [vmem:[#allocation6 + $0x18] sm:$0xf]
    %v1747 = vld [vmem:[#allocation6 + $0x1c] sm:$0xf]
    %v1748 = vld [vmem:[#allocation6 + $0x20] sm:$0xf]
    %v1749 = vld [vmem:[#allocation6 + $0x24] sm:$0xf]
    %v1750 = vld [vmem:[#allocation6 + $0x28] sm:$0xf]
    %v1751 = vld [vmem:[#allocation6 + $0x2c] sm:$0xf]
    %v1752 = vld [vmem:[#allocation6 + $0x30] sm:$0xf]
    %v1753 = vld [vmem:[#allocation6 + $0x34] sm:$0xf]
    %v1754 = vld [vmem:[#allocation6 + $0x38] sm:$0xf]
    %v1755 = vld [vmem:[#allocation6 + $0x3c] sm:$0xf]
    %v1756 = vld [vmem:[#allocation4] sm:$0xf]
    %v1757 = vld [vmem:[#allocation4 + $0x4] sm:$0xf]
    %v1758 = vld [vmem:[#allocation4 + $0x8] sm:$0xf]
    %v1759 = vld [vmem:[#allocation4 + $0xc] sm:$0xf]
    %v1760 = vld [vmem:[#allocation4 + $0x10] sm:$0xf]
    %v1761 = vld [vmem:[#allocation4 + $0x14] sm:$0xf]
    %v1762 = vld [vmem:[#allocation4 + $0x18] sm:$0xf]
    %v1763 = vld [vmem:[#allocation4 + $0x1c] sm:$0xf]
    %v1764 = vld [vmem:[#allocation4 + $0x20] sm:$0xf]
    %v1765 = vld [vmem:[#allocation4 + $0x24] sm:$0xf]
    %v1766 = vld [vmem:[#allocation4 + $0x28] sm:$0xf]
    %v1767 = vld [vmem:[#allocation4 + $0x2c] sm:$0xf]
    %v1768 = vld [vmem:[#allocation4 + $0x30] sm:$0xf]
    %v1769 = vld [vmem:[#allocation4 + $0x34] sm:$0xf]
    %v1770 = vld [vmem:[#allocation4 + $0x38] sm:$0xf]
    %v1771 = vld [vmem:[#allocation4 + $0x3c] sm:$0xf]
    %v1788 = vunpack.c.l.b16 %v1740
    %v1789 = vunpack.c.l.b16 %v1741
    %v1790 = vunpack.c.l.b16 %v1742
    %v1791 = vunpack.c.l.b16 %v1743
    %v1792 = vunpack.c.l.b16 %v1744
    %v1793 = vunpack.c.l.b16 %v1745
    %v1794 = vunpack.c.l.b16 %v1746
    %v1795 = vunpack.c.l.b16 %v1747
    %v1796 = vunpack.c.l.b16 %v1748
    %v1797 = vunpack.c.l.b16 %v1749
    %v1798 = vunpack.c.l.b16 %v1750
    %v1799 = vunpack.c.l.b16 %v1751
    %v1800 = vunpack.c.l.b16 %v1752
    %v1801 = vunpack.c.l.b16 %v1753
    %v1802 = vunpack.c.l.b16 %v1754
    %v1803 = vunpack.c.l.b16 %v1755
    %v1804 = vpack.c.b16 %v1789, %v1788
    %v1805 = vpack.c.b16 %v1791, %v1790
    %v1806 = vpack.c.b16 %v1793, %v1792
    %v1807 = vpack.c.b16 %v1795, %v1794
    %v1808 = vpack.c.b16 %v1797, %v1796
    %v1809 = vpack.c.b16 %v1799, %v1798
    %v1810 = vpack.c.b16 %v1801, %v1800
    %v1811 = vpack.c.b16 %v1803, %v1802
    %v1836 = vunpack.c.l.b16 %v1756
    %v1837 = vunpack.c.l.b16 %v1757
    %v1838 = vunpack.c.l.b16 %v1758
    %v1839 = vunpack.c.l.b16 %v1759
    %v1840 = vunpack.c.l.b16 %v1760
    %v1841 = vunpack.c.l.b16 %v1761
    %v1842 = vunpack.c.l.b16 %v1762
    %v1843 = vunpack.c.l.b16 %v1763
    %v1844 = vunpack.c.l.b16 %v1764
    %v1845 = vunpack.c.l.b16 %v1765
    %v1846 = vunpack.c.l.b16 %v1766
    %v1847 = vunpack.c.l.b16 %v1767
    %v1848 = vunpack.c.l.b16 %v1768
    %v1849 = vunpack.c.l.b16 %v1769
    %v1850 = vunpack.c.l.b16 %v1770
    %v1851 = vunpack.c.l.b16 %v1771
    %v1852 = vpack.c.b16 %v1837, %v1836
    %v1853 = vpack.c.b16 %v1839, %v1838
    %v1854 = vpack.c.b16 %v1841, %v1840
    %v1855 = vpack.c.b16 %v1843, %v1842
    %v1856 = vpack.c.b16 %v1845, %v1844
    %v1857 = vpack.c.b16 %v1847, %v1846
    %v1858 = vpack.c.b16 %v1849, %v1848
    %v1859 = vpack.c.b16 %v1851, %v1850
    %1868 = vmatpush.bf16.msra.mxu0 %v1859
    %1869 = vmatpush.bf16.msra.mxu0 %v1858
    %1870 = vmatpush.bf16.msra.mxu0 %v1857
    %1871 = vmatpush.bf16.msra.mxu0 %v1856
    %1872 = vmatpush.bf16.msra.mxu0 %v1855
    %1873 = vmatpush.bf16.msra.mxu0 %v1854
    %1874 = vmatpush.bf16.msra.mxu0 %v1853
    %1875 = vmatpush.bf16.msra.mxu0 %v1852
    %1876 = vmatmul.bf16.gmra.mxu0 %v1804
    %v1877 = vpop.f32.mrf.mxu0
    %v1878 = vadd.f32 0.0, %v1877
    %v1879 = vpop.f32.mrf.mxu0
    %v1880 = vadd.f32 0.0, %v1879
    %1881 = vmatmul.bf16.gmra.mxu0 %v1805
    %v1882 = vpop.f32.mrf.mxu0
    %v1883 = vadd.f32 0.0, %v1882
    %v1884 = vpop.f32.mrf.mxu0
    %v1885 = vadd.f32 0.0, %v1884
    %1886 = vmatmul.bf16.gmra.mxu0 %v1806
    %v1887 = vpop.f32.mrf.mxu0
    %v1888 = vadd.f32 0.0, %v1887
    %v1889 = vpop.f32.mrf.mxu0
    %v1890 = vadd.f32 0.0, %v1889
    %1891 = vmatmul.bf16.gmra.mxu0 %v1807
    %v1892 = vpop.f32.mrf.mxu0
    %v1893 = vadd.f32 0.0, %v1892
    %v1894 = vpop.f32.mrf.mxu0
    %v1895 = vadd.f32 0.0, %v1894
    %1896 = vmatmul.bf16.gmra.mxu0 %v1808
    %v1897 = vpop.f32.mrf.mxu0
    %v1898 = vadd.f32 0.0, %v1897
    %v1899 = vpop.f32.mrf.mxu0
    %v1900 = vadd.f32 0.0, %v1899
    %1901 = vmatmul.bf16.gmra.mxu0 %v1809
    %v1902 = vpop.f32.mrf.mxu0
    %v1903 = vadd.f32 0.0, %v1902
    %v1904 = vpop.f32.mrf.mxu0
    %v1905 = vadd.f32 0.0, %v1904
    %1906 = vmatmul.bf16.gmra.mxu0 %v1810
    %v1907 = vpop.f32.mrf.mxu0
    %v1908 = vadd.f32 0.0, %v1907
    %v1909 = vpop.f32.mrf.mxu0
    %v1910 = vadd.f32 0.0, %v1909
    %1911 = vmatmul.bf16.gmra.mxu0 %v1811
    %v1912 = vpop.f32.mrf.mxu0
    %v1913 = vadd.f32 0.0, %v1912
    %v1914 = vpop.f32.mrf.mxu0
    %v1915 = vadd.f32 0.0, %v1914
    %1916 = vdwg.mxu0
    %v1917 = vpack.c.bf16 %v1880, %v1878
    %v1918 = vpack.c.bf16 %v1885, %v1883
    %v1919 = vpack.c.bf16 %v1890, %v1888
    %v1920 = vpack.c.bf16 %v1895, %v1893
    %v1921 = vpack.c.bf16 %v1900, %v1898
    %v1922 = vpack.c.bf16 %v1905, %v1903
    %v1923 = vpack.c.bf16 %v1910, %v1908
    %v1924 = vpack.c.bf16 %v1915, %v1913
    %v1925 = vld [vmem:[#allocation20] sm:$0xf]
    %v1926 = vld [vmem:[#allocation20 + $0x4] sm:$0xf]
    %v1927 = vld [vmem:[#allocation20 + $0x8] sm:$0xf]
    %v1928 = vld [vmem:[#allocation20 + $0xc] sm:$0xf]
    %v1929 = vld [vmem:[#allocation20 + $0x10] sm:$0xf]
    %v1930 = vld [vmem:[#allocation20 + $0x14] sm:$0xf]
    %v1931 = vld [vmem:[#allocation20 + $0x18] sm:$0xf]
    %v1932 = vld [vmem:[#allocation20 + $0x1c] sm:$0xf]
    %v1933 = vld [vmem:[#allocation20 + $0x20] sm:$0xf]
    %v1934 = vld [vmem:[#allocation20 + $0x24] sm:$0xf]
    %v1935 = vld [vmem:[#allocation20 + $0x28] sm:$0xf]
    %v1936 = vld [vmem:[#allocation20 + $0x2c] sm:$0xf]
    %v1937 = vld [vmem:[#allocation20 + $0x30] sm:$0xf]
    %v1938 = vld [vmem:[#allocation20 + $0x34] sm:$0xf]
    %v1939 = vld [vmem:[#allocation20 + $0x38] sm:$0xf]
    %v1940 = vld [vmem:[#allocation20 + $0x3c] sm:$0xf]
    %v1941 = vld [vmem:[#allocation2] sm:$0xf]
    %v1942 = vld [vmem:[#allocation2 + $0x4] sm:$0xf]
    %v1943 = vld [vmem:[#allocation2 + $0x8] sm:$0xf]
    %v1944 = vld [vmem:[#allocation2 + $0xc] sm:$0xf]
    %v1945 = vld [vmem:[#allocation2 + $0x10] sm:$0xf]
    %v1946 = vld [vmem:[#allocation2 + $0x14] sm:$0xf]
    %v1947 = vld [vmem:[#allocation2 + $0x18] sm:$0xf]
    %v1948 = vld [vmem:[#allocation2 + $0x1c] sm:$0xf]
    %v1949 = vld [vmem:[#allocation2 + $0x20] sm:$0xf]
    %v1950 = vld [vmem:[#allocation2 + $0x24] sm:$0xf]
    %v1951 = vld [vmem:[#allocation2 + $0x28] sm:$0xf]
    %v1952 = vld [vmem:[#allocation2 + $0x2c] sm:$0xf]
    %v1953 = vld [vmem:[#allocation2 + $0x30] sm:$0xf]
    %v1954 = vld [vmem:[#allocation2 + $0x34] sm:$0xf]
    %v1955 = vld [vmem:[#allocation2 + $0x38] sm:$0xf]
    %v1956 = vld [vmem:[#allocation2 + $0x3c] sm:$0xf]
    %v1957 = vld [vmem:[#allocation22] sm:$0xf]
    %v1958 = vld [vmem:[#allocation22 + $0x4] sm:$0xf]
    %v1959 = vld [vmem:[#allocation22 + $0x8] sm:$0xf]
    %v1960 = vld [vmem:[#allocation22 + $0xc] sm:$0xf]
    %v1961 = vld [vmem:[#allocation22 + $0x10] sm:$0xf]
    %v1962 = vld [vmem:[#allocation22 + $0x14] sm:$0xf]
    %v1963 = vld [vmem:[#allocation22 + $0x18] sm:$0xf]
    %v1964 = vld [vmem:[#allocation22 + $0x1c] sm:$0xf]
    %v1965 = vld [vmem:[#allocation22 + $0x20] sm:$0xf]
    %v1966 = vld [vmem:[#allocation22 + $0x24] sm:$0xf]
    %v1967 = vld [vmem:[#allocation22 + $0x28] sm:$0xf]
    %v1968 = vld [vmem:[#allocation22 + $0x2c] sm:$0xf]
    %v1969 = vld [vmem:[#allocation22 + $0x30] sm:$0xf]
    %v1970 = vld [vmem:[#allocation22 + $0x34] sm:$0xf]
    %v1971 = vld [vmem:[#allocation22 + $0x38] sm:$0xf]
    %v1972 = vld [vmem:[#allocation22 + $0x3c] sm:$0xf]
    %v1989 = vunpack.c.l.b16 %v1941
    %v1990 = vunpack.c.l.b16 %v1942
    %v1991 = vunpack.c.l.b16 %v1943
    %v1992 = vunpack.c.l.b16 %v1944
    %v1993 = vunpack.c.l.b16 %v1945
    %v1994 = vunpack.c.l.b16 %v1946
    %v1995 = vunpack.c.l.b16 %v1947
    %v1996 = vunpack.c.l.b16 %v1948
    %v1997 = vunpack.c.l.b16 %v1949
    %v1998 = vunpack.c.l.b16 %v1950
    %v1999 = vunpack.c.l.b16 %v1951
    %v2000 = vunpack.c.l.b16 %v1952
    %v2001 = vunpack.c.l.b16 %v1953
    %v2002 = vunpack.c.l.b16 %v1954
    %v2003 = vunpack.c.l.b16 %v1955
    %v2004 = vunpack.c.l.b16 %v1956
    %v2005 = vpack.c.b16 %v1990, %v1989
    %v2006 = vpack.c.b16 %v1992, %v1991
    %v2007 = vpack.c.b16 %v1994, %v1993
    %v2008 = vpack.c.b16 %v1996, %v1995
    %v2009 = vpack.c.b16 %v1998, %v1997
    %v2010 = vpack.c.b16 %v2000, %v1999
    %v2011 = vpack.c.b16 %v2002, %v2001
    %v2012 = vpack.c.b16 %v2004, %v2003
    %v2037 = vunpack.c.l.b16 %v1957
    %v2038 = vunpack.c.l.b16 %v1958
    %v2039 = vunpack.c.l.b16 %v1959
    %v2040 = vunpack.c.l.b16 %v1960
    %v2041 = vunpack.c.l.b16 %v1961
    %v2042 = vunpack.c.l.b16 %v1962
    %v2043 = vunpack.c.l.b16 %v1963
    %v2044 = vunpack.c.l.b16 %v1964
    %v2045 = vunpack.c.l.b16 %v1965
    %v2046 = vunpack.c.l.b16 %v1966
    %v2047 = vunpack.c.l.b16 %v1967
    %v2048 = vunpack.c.l.b16 %v1968
    %v2049 = vunpack.c.l.b16 %v1969
    %v2050 = vunpack.c.l.b16 %v1970
    %v2051 = vunpack.c.l.b16 %v1971
    %v2052 = vunpack.c.l.b16 %v1972
    %v2053 = vpack.c.b16 %v2038, %v2037
    %v2054 = vpack.c.b16 %v2040, %v2039
    %v2055 = vpack.c.b16 %v2042, %v2041
    %v2056 = vpack.c.b16 %v2044, %v2043
    %v2057 = vpack.c.b16 %v2046, %v2045
    %v2058 = vpack.c.b16 %v2048, %v2047
    %v2059 = vpack.c.b16 %v2050, %v2049
    %v2060 = vpack.c.b16 %v2052, %v2051
    %2069 = vmatpush.bf16.msra.mxu0 %v2060
    %2070 = vmatpush.bf16.msra.mxu0 %v2059
    %2071 = vmatpush.bf16.msra.mxu0 %v2058
    %2072 = vmatpush.bf16.msra.mxu0 %v2057
    %2073 = vmatpush.bf16.msra.mxu0 %v2056
    %2074 = vmatpush.bf16.msra.mxu0 %v2055
    %2075 = vmatpush.bf16.msra.mxu0 %v2054
    %2076 = vmatpush.bf16.msra.mxu0 %v2053
    %2077 = vmatmul.bf16.gmra.mxu0 %v2005
    %v2078 = vpop.f32.mrf.mxu0
    %v2079 = vadd.f32 0.0, %v2078
    %v2080 = vpop.f32.mrf.mxu0
    %v2081 = vadd.f32 0.0, %v2080
    %2082 = vmatmul.bf16.gmra.mxu0 %v2006
    %v2083 = vpop.f32.mrf.mxu0
    %v2084 = vadd.f32 0.0, %v2083
    %v2085 = vpop.f32.mrf.mxu0
    %v2086 = vadd.f32 0.0, %v2085
    %2087 = vmatmul.bf16.gmra.mxu0 %v2007
    %v2088 = vpop.f32.mrf.mxu0
    %v2089 = vadd.f32 0.0, %v2088
    %v2090 = vpop.f32.mrf.mxu0
    %v2091 = vadd.f32 0.0, %v2090
    %2092 = vmatmul.bf16.gmra.mxu0 %v2008
    %v2093 = vpop.f32.mrf.mxu0
    %v2094 = vadd.f32 0.0, %v2093
    %v2095 = vpop.f32.mrf.mxu0
    %v2096 = vadd.f32 0.0, %v2095
    %2097 = vmatmul.bf16.gmra.mxu0 %v2009
    %v2098 = vpop.f32.mrf.mxu0
    %v2099 = vadd.f32 0.0, %v2098
    %v2100 = vpop.f32.mrf.mxu0
    %v2101 = vadd.f32 0.0, %v2100
    %2102 = vmatmul.bf16.gmra.mxu0 %v2010
    %v2103 = vpop.f32.mrf.mxu0
    %v2104 = vadd.f32 0.0, %v2103
    %v2105 = vpop.f32.mrf.mxu0
    %v2106 = vadd.f32 0.0, %v2105
    %2107 = vmatmul.bf16.gmra.mxu0 %v2011
    %v2108 = vpop.f32.mrf.mxu0
    %v2109 = vadd.f32 0.0, %v2108
    %v2110 = vpop.f32.mrf.mxu0
    %v2111 = vadd.f32 0.0, %v2110
    %2112 = vmatmul.bf16.gmra.mxu0 %v2012
    %v2113 = vpop.f32.mrf.mxu0
    %v2114 = vadd.f32 0.0, %v2113
    %v2115 = vpop.f32.mrf.mxu0
    %v2116 = vadd.f32 0.0, %v2115
    %2117 = vdwg.mxu0
    %v2134 = vunpack.c.l.b16 %v1925
    %v2135 = vunpack.c.l.b16 %v1926
    %v2136 = vunpack.c.l.b16 %v1927
    %v2137 = vunpack.c.l.b16 %v1928
    %v2138 = vunpack.c.l.b16 %v1929
    %v2139 = vunpack.c.l.b16 %v1930
    %v2140 = vunpack.c.l.b16 %v1931
    %v2141 = vunpack.c.l.b16 %v1932
    %v2142 = vunpack.c.l.b16 %v1933
    %v2143 = vunpack.c.l.b16 %v1934
    %v2144 = vunpack.c.l.b16 %v1935
    %v2145 = vunpack.c.l.b16 %v1936
    %v2146 = vunpack.c.l.b16 %v1937
    %v2147 = vunpack.c.l.b16 %v1938
    %v2148 = vunpack.c.l.b16 %v1939
    %v2149 = vunpack.c.l.b16 %v1940
    %v2150 = vpack.c.b16 %v2135, %v2134
    %v2151 = vpack.c.b16 %v2137, %v2136
    %v2152 = vpack.c.b16 %v2139, %v2138
    %v2153 = vpack.c.b16 %v2141, %v2140
    %v2154 = vpack.c.b16 %v2143, %v2142
    %v2155 = vpack.c.b16 %v2145, %v2144
    %v2156 = vpack.c.b16 %v2147, %v2146
    %v2157 = vpack.c.b16 %v2149, %v2148
    %2166 = vmatpush.bf16.msra.mxu0 %v2157
    %2167 = vmatpush.bf16.msra.mxu0 %v2156
    %2168 = vmatpush.bf16.msra.mxu0 %v2155
    %2169 = vmatpush.bf16.msra.mxu0 %v2154
    %2170 = vmatpush.bf16.msra.mxu0 %v2153
    %2171 = vmatpush.bf16.msra.mxu0 %v2152
    %2172 = vmatpush.bf16.msra.mxu0 %v2151
    %2173 = vmatpush.bf16.msra.mxu0 %v2150
    %2174 = vmatmul.bf16.gmra.mxu0 %v1917
    %v2175 = vpop.f32.mrf.mxu0
    %v2176 = vadd.f32 %v2079, %v2175
    %v2177 = vpop.f32.mrf.mxu0
    %v2178 = vadd.f32 %v2081, %v2177
    %2179 = vmatmul.bf16.gmra.mxu0 %v1918
    %v2180 = vpop.f32.mrf.mxu0
    %v2181 = vadd.f32 %v2084, %v2180
    %v2182 = vpop.f32.mrf.mxu0
    %v2183 = vadd.f32 %v2086, %v2182
    %2184 = vmatmul.bf16.gmra.mxu0 %v1919
    %v2185 = vpop.f32.mrf.mxu0
    %v2186 = vadd.f32 %v2089, %v2185
    %v2187 = vpop.f32.mrf.mxu0
    %v2188 = vadd.f32 %v2091, %v2187
    %2189 = vmatmul.bf16.gmra.mxu0 %v1920
    %v2190 = vpop.f32.mrf.mxu0
    %v2191 = vadd.f32 %v2094, %v2190
    %v2192 = vpop.f32.mrf.mxu0
    %v2193 = vadd.f32 %v2096, %v2192
    %2194 = vmatmul.bf16.gmra.mxu0 %v1921
    %v2195 = vpop.f32.mrf.mxu0
    %v2196 = vadd.f32 %v2099, %v2195
    %v2197 = vpop.f32.mrf.mxu0
    %v2198 = vadd.f32 %v2101, %v2197
    %2199 = vmatmul.bf16.gmra.mxu0 %v1922
    %v2200 = vpop.f32.mrf.mxu0
    %v2201 = vadd.f32 %v2104, %v2200
    %v2202 = vpop.f32.mrf.mxu0
    %v2203 = vadd.f32 %v2106, %v2202
    %2204 = vmatmul.bf16.gmra.mxu0 %v1923
    %v2205 = vpop.f32.mrf.mxu0
    %v2206 = vadd.f32 %v2109, %v2205
    %v2207 = vpop.f32.mrf.mxu0
    %v2208 = vadd.f32 %v2111, %v2207
    %2209 = vmatmul.bf16.gmra.mxu0 %v1924
    %v2210 = vpop.f32.mrf.mxu0
    %v2211 = vadd.f32 %v2114, %v2210
    %v2212 = vpop.f32.mrf.mxu0
    %v2213 = vadd.f32 %v2116, %v2212
    %2214 = vdwg.mxu0
    %v2215 = vld [vmem:[%s14] sm:$0x1]
    %v2217 = vperm.slane %v2215, 0
    %v2219 = vadd.f32 %v2176, %v2217
    %v2220 = vadd.f32 %v2178, %v2217
    %v2221 = vadd.f32 %v2181, %v2217
    %v2222 = vadd.f32 %v2183, %v2217
    %v2223 = vadd.f32 %v2186, %v2217
    %v2224 = vadd.f32 %v2188, %v2217
    %v2225 = vadd.f32 %v2191, %v2217
    %v2226 = vadd.f32 %v2193, %v2217
    %v2227 = vadd.f32 %v2196, %v2217
    %v2228 = vadd.f32 %v2198, %v2217
    %v2229 = vadd.f32 %v2201, %v2217
    %v2230 = vadd.f32 %v2203, %v2217
    %v2231 = vadd.f32 %v2206, %v2217
    %v2232 = vadd.f32 %v2208, %v2217
    %v2233 = vadd.f32 %v2211, %v2217
    %v2234 = vadd.f32 %v2213, %v2217
    %v2235 = vmax.f32 %v2219, 0.0
    %v2236 = vmax.f32 %v2220, 0.0
    %v2237 = vmax.f32 %v2221, 0.0
    %v2238 = vmax.f32 %v2222, 0.0
    %v2239 = vmax.f32 %v2223, 0.0
    %v2240 = vmax.f32 %v2224, 0.0
    %v2241 = vmax.f32 %v2225, 0.0
    %v2242 = vmax.f32 %v2226, 0.0
    %v2243 = vmax.f32 %v2227, 0.0
    %v2244 = vmax.f32 %v2228, 0.0
    %v2245 = vmax.f32 %v2229, 0.0
    %v2246 = vmax.f32 %v2230, 0.0
    %v2247 = vmax.f32 %v2231, 0.0
    %v2248 = vmax.f32 %v2232, 0.0
    %v2249 = vmax.f32 %v2233, 0.0
    %v2250 = vmax.f32 %v2234, 0.0
    %v2251 = vmul.f32 %v2235, %v2235
    %v2252 = vmul.f32 %v2236, %v2236
    %v2253 = vmul.f32 %v2237, %v2237
    %v2254 = vmul.f32 %v2238, %v2238
    %v2255 = vmul.f32 %v2239, %v2239
    %v2256 = vmul.f32 %v2240, %v2240
    %v2257 = vmul.f32 %v2241, %v2241
    %v2258 = vmul.f32 %v2242, %v2242
    %v2259 = vmul.f32 %v2243, %v2243
    %v2260 = vmul.f32 %v2244, %v2244
    %v2261 = vmul.f32 %v2245, %v2245
    %v2262 = vmul.f32 %v2246, %v2246
    %v2263 = vmul.f32 %v2247, %v2247
    %v2264 = vmul.f32 %v2248, %v2248
    %v2265 = vmul.f32 %v2249, %v2249
    %v2266 = vmul.f32 %v2250, %v2250
    %2267 = vadd.xlane.f32.xlu0 %v2251
    %v2268 = vpop.xlane.xlu0 %2267
    %2269 = vadd.xlane.f32.xlu0 %v2252
    %v2270 = vpop.xlane.xlu0 %2269
    %2271 = vadd.xlane.f32.xlu0 %v2253
    %v2272 = vpop.xlane.xlu0 %2271
    %2273 = vadd.xlane.f32.xlu0 %v2254
    %v2274 = vpop.xlane.xlu0 %2273
    %2275 = vadd.xlane.f32.xlu0 %v2255
    %v2276 = vpop.xlane.xlu0 %2275
    %2277 = vadd.xlane.f32.xlu0 %v2256
    %v2278 = vpop.xlane.xlu0 %2277
    %2279 = vadd.xlane.f32.xlu0 %v2257
    %v2280 = vpop.xlane.xlu0 %2279
    %2281 = vadd.xlane.f32.xlu0 %v2258
    %v2282 = vpop.xlane.xlu0 %2281
    %2283 = vadd.xlane.f32.xlu0 %v2259
    %v2284 = vpop.xlane.xlu0 %2283
    %2285 = vadd.xlane.f32.xlu0 %v2260
    %v2286 = vpop.xlane.xlu0 %2285
    %2287 = vadd.xlane.f32.xlu0 %v2261
    %v2288 = vpop.xlane.xlu0 %2287
    %2289 = vadd.xlane.f32.xlu0 %v2262
    %v2290 = vpop.xlane.xlu0 %2289
    %2291 = vadd.xlane.f32.xlu0 %v2263
    %v2292 = vpop.xlane.xlu0 %2291
    %2293 = vadd.xlane.f32.xlu0 %v2264
    %v2294 = vpop.xlane.xlu0 %2293
    %2295 = vadd.xlane.f32.xlu0 %v2265
    %v2296 = vpop.xlane.xlu0 %2295
    %2297 = vadd.xlane.f32.xlu0 %v2266
    %v2298 = vpop.xlane.xlu0 %2297
    %v2299 = vadd.f32 %v2268, 1e-12
    %v2300 = vadd.f32 %v2270, 1e-12
    %v2301 = vadd.f32 %v2272, 1e-12
    %v2302 = vadd.f32 %v2274, 1e-12
    %v2303 = vadd.f32 %v2276, 1e-12
    %v2304 = vadd.f32 %v2278, 1e-12
    %v2305 = vadd.f32 %v2280, 1e-12
    %v2306 = vadd.f32 %v2282, 1e-12
    %v2307 = vadd.f32 %v2284, 1e-12
    %v2308 = vadd.f32 %v2286, 1e-12
    %v2309 = vadd.f32 %v2288, 1e-12
    %v2310 = vadd.f32 %v2290, 1e-12
    %v2311 = vadd.f32 %v2292, 1e-12
    %v2312 = vadd.f32 %v2294, 1e-12
    %v2313 = vadd.f32 %v2296, 1e-12
    %v2314 = vadd.f32 %v2298, 1e-12
    %v2315 = vrsqrt.pop %v2299
    %v2316 = vmul.f32 %v2315, %v2299
    %v2317 = vmul.f32 %v2316, %v2315
    %v2318 = vmul.f32 0.5, %v2317
    %v2319 = vsub.f32 1.5, %v2318
    %v2320 = vmul.f32 %v2315, %v2319
    %vm2321 = vweird.f32 %v2299
    %vm2322 = vweird.f32 %v2315
    %vm2323 = vmor %vm2321, %vm2322
    %v2324 = vsel %vm2323, %v2315, %v2320
    %v2325 = vrsqrt.pop %v2300
    %v2326 = vmul.f32 %v2325, %v2300
    %v2327 = vmul.f32 %v2326, %v2325
    %v2328 = vmul.f32 0.5, %v2327
    %v2329 = vsub.f32 1.5, %v2328
    %v2330 = vmul.f32 %v2325, %v2329
    %vm2331 = vweird.f32 %v2300
    %vm2332 = vweird.f32 %v2325
    %vm2333 = vmor %vm2331, %vm2332
    %v2334 = vsel %vm2333, %v2325, %v2330
    %v2335 = vrsqrt.pop %v2301
    %v2336 = vmul.f32 %v2335, %v2301
    %v2337 = vmul.f32 %v2336, %v2335
    %v2338 = vmul.f32 0.5, %v2337
    %v2339 = vsub.f32 1.5, %v2338
    %v2340 = vmul.f32 %v2335, %v2339
    %vm2341 = vweird.f32 %v2301
    %vm2342 = vweird.f32 %v2335
    %vm2343 = vmor %vm2341, %vm2342
    %v2344 = vsel %vm2343, %v2335, %v2340
    %v2345 = vrsqrt.pop %v2302
    %v2346 = vmul.f32 %v2345, %v2302
    %v2347 = vmul.f32 %v2346, %v2345
    %v2348 = vmul.f32 0.5, %v2347
    %v2349 = vsub.f32 1.5, %v2348
    %v2350 = vmul.f32 %v2345, %v2349
    %vm2351 = vweird.f32 %v2302
    %vm2352 = vweird.f32 %v2345
    %vm2353 = vmor %vm2351, %vm2352
    %v2354 = vsel %vm2353, %v2345, %v2350
    %v2355 = vrsqrt.pop %v2303
    %v2356 = vmul.f32 %v2355, %v2303
    %v2357 = vmul.f32 %v2356, %v2355
    %v2358 = vmul.f32 0.5, %v2357
    %v2359 = vsub.f32 1.5, %v2358
    %v2360 = vmul.f32 %v2355, %v2359
    %vm2361 = vweird.f32 %v2303
    %vm2362 = vweird.f32 %v2355
    %vm2363 = vmor %vm2361, %vm2362
    %v2364 = vsel %vm2363, %v2355, %v2360
    %v2365 = vrsqrt.pop %v2304
    %v2366 = vmul.f32 %v2365, %v2304
    %v2367 = vmul.f32 %v2366, %v2365
    %v2368 = vmul.f32 0.5, %v2367
    %v2369 = vsub.f32 1.5, %v2368
    %v2370 = vmul.f32 %v2365, %v2369
    %vm2371 = vweird.f32 %v2304
    %vm2372 = vweird.f32 %v2365
    %vm2373 = vmor %vm2371, %vm2372
    %v2374 = vsel %vm2373, %v2365, %v2370
    %v2375 = vrsqrt.pop %v2305
    %v2376 = vmul.f32 %v2375, %v2305
    %v2377 = vmul.f32 %v2376, %v2375
    %v2378 = vmul.f32 0.5, %v2377
    %v2379 = vsub.f32 1.5, %v2378
    %v2380 = vmul.f32 %v2375, %v2379
    %vm2381 = vweird.f32 %v2305
    %vm2382 = vweird.f32 %v2375
    %vm2383 = vmor %vm2381, %vm2382
    %v2384 = vsel %vm2383, %v2375, %v2380
    %v2385 = vrsqrt.pop %v2306
    %v2386 = vmul.f32 %v2385, %v2306
    %v2387 = vmul.f32 %v2386, %v2385
    %v2388 = vmul.f32 0.5, %v2387
    %v2389 = vsub.f32 1.5, %v2388
    %v2390 = vmul.f32 %v2385, %v2389
    %vm2391 = vweird.f32 %v2306
    %vm2392 = vweird.f32 %v2385
    %vm2393 = vmor %vm2391, %vm2392
    %v2394 = vsel %vm2393, %v2385, %v2390
    %v2395 = vrsqrt.pop %v2307
    %v2396 = vmul.f32 %v2395, %v2307
    %v2397 = vmul.f32 %v2396, %v2395
    %v2398 = vmul.f32 0.5, %v2397
    %v2399 = vsub.f32 1.5, %v2398
    %v2400 = vmul.f32 %v2395, %v2399
    %vm2401 = vweird.f32 %v2307
    %vm2402 = vweird.f32 %v2395
    %vm2403 = vmor %vm2401, %vm2402
    %v2404 = vsel %vm2403, %v2395, %v2400
    %v2405 = vrsqrt.pop %v2308
    %v2406 = vmul.f32 %v2405, %v2308
    %v2407 = vmul.f32 %v2406, %v2405
    %v2408 = vmul.f32 0.5, %v2407
    %v2409 = vsub.f32 1.5, %v2408
    %v2410 = vmul.f32 %v2405, %v2409
    %vm2411 = vweird.f32 %v2308
    %vm2412 = vweird.f32 %v2405
    %vm2413 = vmor %vm2411, %vm2412
    %v2414 = vsel %vm2413, %v2405, %v2410
    %v2415 = vrsqrt.pop %v2309
    %v2416 = vmul.f32 %v2415, %v2309
    %v2417 = vmul.f32 %v2416, %v2415
    %v2418 = vmul.f32 0.5, %v2417
    %v2419 = vsub.f32 1.5, %v2418
    %v2420 = vmul.f32 %v2415, %v2419
    %vm2421 = vweird.f32 %v2309
    %vm2422 = vweird.f32 %v2415
    %vm2423 = vmor %vm2421, %vm2422
    %v2424 = vsel %vm2423, %v2415, %v2420
    %v2425 = vrsqrt.pop %v2310
    %v2426 = vmul.f32 %v2425, %v2310
    %v2427 = vmul.f32 %v2426, %v2425
    %v2428 = vmul.f32 0.5, %v2427
    %v2429 = vsub.f32 1.5, %v2428
    %v2430 = vmul.f32 %v2425, %v2429
    %vm2431 = vweird.f32 %v2310
    %vm2432 = vweird.f32 %v2425
    %vm2433 = vmor %vm2431, %vm2432
    %v2434 = vsel %vm2433, %v2425, %v2430
    %v2435 = vrsqrt.pop %v2311
    %v2436 = vmul.f32 %v2435, %v2311
    %v2437 = vmul.f32 %v2436, %v2435
    %v2438 = vmul.f32 0.5, %v2437
    %v2439 = vsub.f32 1.5, %v2438
    %v2440 = vmul.f32 %v2435, %v2439
    %vm2441 = vweird.f32 %v2311
    %vm2442 = vweird.f32 %v2435
    %vm2443 = vmor %vm2441, %vm2442
    %v2444 = vsel %vm2443, %v2435, %v2440
    %v2445 = vrsqrt.pop %v2312
    %v2446 = vmul.f32 %v2445, %v2312
    %v2447 = vmul.f32 %v2446, %v2445
    %v2448 = vmul.f32 0.5, %v2447
    %v2449 = vsub.f32 1.5, %v2448
    %v2450 = vmul.f32 %v2445, %v2449
    %vm2451 = vweird.f32 %v2312
    %vm2452 = vweird.f32 %v2445
    %vm2453 = vmor %vm2451, %vm2452
    %v2454 = vsel %vm2453, %v2445, %v2450
    %v2455 = vrsqrt.pop %v2313
    %v2456 = vmul.f32 %v2455, %v2313
    %v2457 = vmul.f32 %v2456, %v2455
    %v2458 = vmul.f32 0.5, %v2457
    %v2459 = vsub.f32 1.5, %v2458
    %v2460 = vmul.f32 %v2455, %v2459
    %vm2461 = vweird.f32 %v2313
    %vm2462 = vweird.f32 %v2455
    %vm2463 = vmor %vm2461, %vm2462
    %v2464 = vsel %vm2463, %v2455, %v2460
    %v2465 = vrsqrt.pop %v2314
    %v2466 = vmul.f32 %v2465, %v2314
    %v2467 = vmul.f32 %v2466, %v2465
    %v2468 = vmul.f32 0.5, %v2467
    %v2469 = vsub.f32 1.5, %v2468
    %v2470 = vmul.f32 %v2465, %v2469
    %vm2471 = vweird.f32 %v2314
    %vm2472 = vweird.f32 %v2465
    %vm2473 = vmor %vm2471, %vm2472
    %v2474 = vsel %vm2473, %v2465, %v2470
    %v2475 = vmul.f32 %v2235, %v2324
    %v2476 = vmul.f32 %v2236, %v2334
    %v2477 = vmul.f32 %v2237, %v2344
    %v2478 = vmul.f32 %v2238, %v2354
    %v2479 = vmul.f32 %v2239, %v2364
    %v2480 = vmul.f32 %v2240, %v2374
    %v2481 = vmul.f32 %v2241, %v2384
    %v2482 = vmul.f32 %v2242, %v2394
    %v2483 = vmul.f32 %v2243, %v2404
    %v2484 = vmul.f32 %v2244, %v2414
    %v2485 = vmul.f32 %v2245, %v2424
    %v2486 = vmul.f32 %v2246, %v2434
    %v2487 = vmul.f32 %v2247, %v2444
    %v2488 = vmul.f32 %v2248, %v2454
    %v2489 = vmul.f32 %v2249, %v2464
    %v2490 = vmul.f32 %v2250, %v2474
    %v2491 = vpack.c.bf16 %v2475, %v2475
    %v2492 = vpack.c.bf16 %v2476, %v2476
    %v2493 = vpack.c.bf16 %v2477, %v2477
    %v2494 = vpack.c.bf16 %v2478, %v2478
    %v2495 = vpack.c.bf16 %v2479, %v2479
    %v2496 = vpack.c.bf16 %v2480, %v2480
    %v2497 = vpack.c.bf16 %v2481, %v2481
    %v2498 = vpack.c.bf16 %v2482, %v2482
    %v2499 = vpack.c.bf16 %v2483, %v2483
    %v2500 = vpack.c.bf16 %v2484, %v2484
    %v2501 = vpack.c.bf16 %v2485, %v2485
    %v2502 = vpack.c.bf16 %v2486, %v2486
    %v2503 = vpack.c.bf16 %v2487, %v2487
    %v2504 = vpack.c.bf16 %v2488, %v2488
    %v2505 = vpack.c.bf16 %v2489, %v2489
    %v2506 = vpack.c.bf16 %v2490, %v2490
    %2507 = vst [vmem:[#allocation2] sm:$0xf] %v2491
    %2508 = vst [vmem:[#allocation2 + $0x4] sm:$0xf] %v2492
    %2509 = vst [vmem:[#allocation2 + $0x8] sm:$0xf] %v2493
    %2510 = vst [vmem:[#allocation2 + $0xc] sm:$0xf] %v2494
    %2511 = vst [vmem:[#allocation2 + $0x10] sm:$0xf] %v2495
    %2512 = vst [vmem:[#allocation2 + $0x14] sm:$0xf] %v2496
    %2513 = vst [vmem:[#allocation2 + $0x18] sm:$0xf] %v2497
    %2514 = vst [vmem:[#allocation2 + $0x1c] sm:$0xf] %v2498
    %2515 = vst [vmem:[#allocation2 + $0x20] sm:$0xf] %v2499
    %2516 = vst [vmem:[#allocation2 + $0x24] sm:$0xf] %v2500
    %2517 = vst [vmem:[#allocation2 + $0x28] sm:$0xf] %v2501
    %2518 = vst [vmem:[#allocation2 + $0x2c] sm:$0xf] %v2502
    %2519 = vst [vmem:[#allocation2 + $0x30] sm:$0xf] %v2503
    %2520 = vst [vmem:[#allocation2 + $0x34] sm:$0xf] %v2504
    %2521 = vst [vmem:[#allocation2 + $0x38] sm:$0xf] %v2505
    %2522 = vst [vmem:[#allocation2 + $0x3c] sm:$0xf] %v2506
    %v2523 = vld [vmem:[#allocation3] sm:$0xf]
    %v2524 = vld [vmem:[#allocation3 + $0x4] sm:$0xf]
    %v2525 = vld [vmem:[#allocation3 + $0x8] sm:$0xf]
    %v2526 = vld [vmem:[#allocation3 + $0xc] sm:$0xf]
    %v2527 = vld [vmem:[#allocation3 + $0x10] sm:$0xf]
    %v2528 = vld [vmem:[#allocation3 + $0x14] sm:$0xf]
    %v2529 = vld [vmem:[#allocation3 + $0x18] sm:$0xf]
    %v2530 = vld [vmem:[#allocation3 + $0x1c] sm:$0xf]
    %v2531 = vld [vmem:[#allocation3 + $0x20] sm:$0xf]
    %v2532 = vld [vmem:[#allocation3 + $0x24] sm:$0xf]
    %v2533 = vld [vmem:[#allocation3 + $0x28] sm:$0xf]
    %v2534 = vld [vmem:[#allocation3 + $0x2c] sm:$0xf]
    %v2535 = vld [vmem:[#allocation3 + $0x30] sm:$0xf]
    %v2536 = vld [vmem:[#allocation3 + $0x34] sm:$0xf]
    %v2537 = vld [vmem:[#allocation3 + $0x38] sm:$0xf]
    %v2538 = vld [vmem:[#allocation3 + $0x3c] sm:$0xf]
    %v2539 = vunpack.c.l.bf16 %v2523
    %v2540 = vunpack.c.l.bf16 %v2524
    %v2541 = vunpack.c.l.bf16 %v2525
    %v2542 = vunpack.c.l.bf16 %v2526
    %v2543 = vunpack.c.l.bf16 %v2527
    %v2544 = vunpack.c.l.bf16 %v2528
    %v2545 = vunpack.c.l.bf16 %v2529
    %v2546 = vunpack.c.l.bf16 %v2530
    %v2547 = vunpack.c.l.bf16 %v2531
    %v2548 = vunpack.c.l.bf16 %v2532
    %v2549 = vunpack.c.l.bf16 %v2533
    %v2550 = vunpack.c.l.bf16 %v2534
    %v2551 = vunpack.c.l.bf16 %v2535
    %v2552 = vunpack.c.l.bf16 %v2536
    %v2553 = vunpack.c.l.bf16 %v2537
    %v2554 = vunpack.c.l.bf16 %v2538
    %v2555 = vld [vmem:[#allocation2] sm:$0xf]
    %v2556 = vld [vmem:[#allocation2 + $0x4] sm:$0xf]
    %v2557 = vld [vmem:[#allocation2 + $0x8] sm:$0xf]
    %v2558 = vld [vmem:[#allocation2 + $0xc] sm:$0xf]
    %v2559 = vld [vmem:[#allocation2 + $0x10] sm:$0xf]
    %v2560 = vld [vmem:[#allocation2 + $0x14] sm:$0xf]
    %v2561 = vld [vmem:[#allocation2 + $0x18] sm:$0xf]
    %v2562 = vld [vmem:[#allocation2 + $0x1c] sm:$0xf]
    %v2563 = vld [vmem:[#allocation2 + $0x20] sm:$0xf]
    %v2564 = vld [vmem:[#allocation2 + $0x24] sm:$0xf]
    %v2565 = vld [vmem:[#allocation2 + $0x28] sm:$0xf]
    %v2566 = vld [vmem:[#allocation2 + $0x2c] sm:$0xf]
    %v2567 = vld [vmem:[#allocation2 + $0x30] sm:$0xf]
    %v2568 = vld [vmem:[#allocation2 + $0x34] sm:$0xf]
    %v2569 = vld [vmem:[#allocation2 + $0x38] sm:$0xf]
    %v2570 = vld [vmem:[#allocation2 + $0x3c] sm:$0xf]
    %v2571 = vunpack.c.l.bf16 %v2555
    %v2572 = vunpack.c.l.bf16 %v2556
    %v2573 = vunpack.c.l.bf16 %v2557
    %v2574 = vunpack.c.l.bf16 %v2558
    %v2575 = vunpack.c.l.bf16 %v2559
    %v2576 = vunpack.c.l.bf16 %v2560
    %v2577 = vunpack.c.l.bf16 %v2561
    %v2578 = vunpack.c.l.bf16 %v2562
    %v2579 = vunpack.c.l.bf16 %v2563
    %v2580 = vunpack.c.l.bf16 %v2564
    %v2581 = vunpack.c.l.bf16 %v2565
    %v2582 = vunpack.c.l.bf16 %v2566
    %v2583 = vunpack.c.l.bf16 %v2567
    %v2584 = vunpack.c.l.bf16 %v2568
    %v2585 = vunpack.c.l.bf16 %v2569
    %v2586 = vunpack.c.l.bf16 %v2570
    %v2587 = vadd.f32 %v2539, %v2571
    %v2588 = vadd.f32 %v2540, %v2572
    %v2589 = vadd.f32 %v2541, %v2573
    %v2590 = vadd.f32 %v2542, %v2574
    %v2591 = vadd.f32 %v2543, %v2575
    %v2592 = vadd.f32 %v2544, %v2576
    %v2593 = vadd.f32 %v2545, %v2577
    %v2594 = vadd.f32 %v2546, %v2578
    %v2595 = vadd.f32 %v2547, %v2579
    %v2596 = vadd.f32 %v2548, %v2580
    %v2597 = vadd.f32 %v2549, %v2581
    %v2598 = vadd.f32 %v2550, %v2582
    %v2599 = vadd.f32 %v2551, %v2583
    %v2600 = vadd.f32 %v2552, %v2584
    %v2601 = vadd.f32 %v2553, %v2585
    %v2602 = vadd.f32 %v2554, %v2586
    %v2603 = vld [vmem:[#allocation23] sm:$0xf]
    %v2604 = vld [vmem:[#allocation23 + $0x4] sm:$0xf]
    %v2605 = vld [vmem:[#allocation23 + $0x8] sm:$0xf]
    %v2606 = vld [vmem:[#allocation23 + $0xc] sm:$0xf]
    %v2607 = vld [vmem:[#allocation23 + $0x10] sm:$0xf]
    %v2608 = vld [vmem:[#allocation23 + $0x14] sm:$0xf]
    %v2609 = vld [vmem:[#allocation23 + $0x18] sm:$0xf]
    %v2610 = vld [vmem:[#allocation23 + $0x1c] sm:$0xf]
    %v2611 = vld [vmem:[#allocation23 + $0x20] sm:$0xf]
    %v2612 = vld [vmem:[#allocation23 + $0x24] sm:$0xf]
    %v2613 = vld [vmem:[#allocation23 + $0x28] sm:$0xf]
    %v2614 = vld [vmem:[#allocation23 + $0x2c] sm:$0xf]
    %v2615 = vld [vmem:[#allocation23 + $0x30] sm:$0xf]
    %v2616 = vld [vmem:[#allocation23 + $0x34] sm:$0xf]
    %v2617 = vld [vmem:[#allocation23 + $0x38] sm:$0xf]
    %v2618 = vld [vmem:[#allocation23 + $0x3c] sm:$0xf]
    %v2619 = vld [vmem:[#allocation23 + $0x40] sm:$0xf]
    %v2620 = vld [vmem:[#allocation23 + $0x44] sm:$0xf]
    %v2621 = vld [vmem:[#allocation23 + $0x48] sm:$0xf]
    %v2622 = vld [vmem:[#allocation23 + $0x4c] sm:$0xf]
    %v2623 = vld [vmem:[#allocation23 + $0x50] sm:$0xf]
    %v2624 = vld [vmem:[#allocation23 + $0x54] sm:$0xf]
    %v2625 = vld [vmem:[#allocation23 + $0x58] sm:$0xf]
    %v2626 = vld [vmem:[#allocation23 + $0x5c] sm:$0xf]
    %v2627 = vld [vmem:[#allocation23 + $0x60] sm:$0xf]
    %v2628 = vld [vmem:[#allocation23 + $0x64] sm:$0xf]
    %v2629 = vld [vmem:[#allocation23 + $0x68] sm:$0xf]
    %v2630 = vld [vmem:[#allocation23 + $0x6c] sm:$0xf]
    %v2631 = vld [vmem:[#allocation23 + $0x70] sm:$0xf]
    %v2632 = vld [vmem:[#allocation23 + $0x74] sm:$0xf]
    %v2633 = vld [vmem:[#allocation23 + $0x78] sm:$0xf]
    %v2634 = vld [vmem:[#allocation23 + $0x7c] sm:$0xf]
    %v2635 = vld [vmem:[#allocation23 + $0x80] sm:$0xf]
    %v2636 = vld [vmem:[#allocation23 + $0x84] sm:$0xf]
    %v2637 = vld [vmem:[#allocation23 + $0x88] sm:$0xf]
    %v2638 = vld [vmem:[#allocation23 + $0x8c] sm:$0xf]
    %v2639 = vld [vmem:[#allocation23 + $0x90] sm:$0xf]
    %v2640 = vld [vmem:[#allocation23 + $0x94] sm:$0xf]
    %v2641 = vld [vmem:[#allocation23 + $0x98] sm:$0xf]
    %v2642 = vld [vmem:[#allocation23 + $0x9c] sm:$0xf]
    %v2643 = vld [vmem:[#allocation23 + $0xa0] sm:$0xf]
    %v2644 = vld [vmem:[#allocation23 + $0xa4] sm:$0xf]
    %v2645 = vld [vmem:[#allocation23 + $0xa8] sm:$0xf]
    %v2646 = vld [vmem:[#allocation23 + $0xac] sm:$0xf]
    %v2647 = vld [vmem:[#allocation23 + $0xb0] sm:$0xf]
    %v2648 = vld [vmem:[#allocation23 + $0xb4] sm:$0xf]
    %v2649 = vld [vmem:[#allocation23 + $0xb8] sm:$0xf]
    %v2650 = vld [vmem:[#allocation23 + $0xbc] sm:$0xf]
    %v2651 = vld [vmem:[#allocation23 + $0xc0] sm:$0xf]
    %v2652 = vld [vmem:[#allocation23 + $0xc4] sm:$0xf]
    %v2653 = vld [vmem:[#allocation23 + $0xc8] sm:$0xf]
    %v2654 = vld [vmem:[#allocation23 + $0xcc] sm:$0xf]
    %v2655 = vld [vmem:[#allocation23 + $0xd0] sm:$0xf]
    %v2656 = vld [vmem:[#allocation23 + $0xd4] sm:$0xf]
    %v2657 = vld [vmem:[#allocation23 + $0xd8] sm:$0xf]
    %v2658 = vld [vmem:[#allocation23 + $0xdc] sm:$0xf]
    %v2659 = vld [vmem:[#allocation23 + $0xe0] sm:$0xf]
    %v2660 = vld [vmem:[#allocation23 + $0xe4] sm:$0xf]
    %v2661 = vld [vmem:[#allocation23 + $0xe8] sm:$0xf]
    %v2662 = vld [vmem:[#allocation23 + $0xec] sm:$0xf]
    %v2663 = vld [vmem:[#allocation23 + $0xf0] sm:$0xf]
    %v2664 = vld [vmem:[#allocation23 + $0xf4] sm:$0xf]
    %v2665 = vld [vmem:[#allocation23 + $0xf8] sm:$0xf]
    %v2666 = vld [vmem:[#allocation23 + $0xfc] sm:$0xf]
    %v2667 = vpack.c.bf16 %v2588, %v2587
    %v2668 = vpack.c.bf16 %v2590, %v2589
    %v2669 = vpack.c.bf16 %v2592, %v2591
    %v2670 = vpack.c.bf16 %v2594, %v2593
    %v2671 = vpack.c.bf16 %v2596, %v2595
    %v2672 = vpack.c.bf16 %v2598, %v2597
    %v2673 = vpack.c.bf16 %v2600, %v2599
    %v2674 = vpack.c.bf16 %v2602, %v2601
    %v2739 = vunpack.c.l.b16 %v2603
    %v2740 = vunpack.c.l.b16 %v2604
    %v2741 = vunpack.c.l.b16 %v2605
    %v2742 = vunpack.c.l.b16 %v2606
    %v2743 = vunpack.c.l.b16 %v2607
    %v2744 = vunpack.c.l.b16 %v2608
    %v2745 = vunpack.c.l.b16 %v2609
    %v2746 = vunpack.c.l.b16 %v2610
    %v2747 = vunpack.c.l.b16 %v2611
    %v2748 = vunpack.c.l.b16 %v2612
    %v2749 = vunpack.c.l.b16 %v2613
    %v2750 = vunpack.c.l.b16 %v2614
    %v2751 = vunpack.c.l.b16 %v2615
    %v2752 = vunpack.c.l.b16 %v2616
    %v2753 = vunpack.c.l.b16 %v2617
    %v2754 = vunpack.c.l.b16 %v2618
    %v2755 = vunpack.c.l.b16 %v2619
    %v2756 = vunpack.c.l.b16 %v2620
    %v2757 = vunpack.c.l.b16 %v2621
    %v2758 = vunpack.c.l.b16 %v2622
    %v2759 = vunpack.c.l.b16 %v2623
    %v2760 = vunpack.c.l.b16 %v2624
    %v2761 = vunpack.c.l.b16 %v2625
    %v2762 = vunpack.c.l.b16 %v2626
    %v2763 = vunpack.c.l.b16 %v2627
    %v2764 = vunpack.c.l.b16 %v2628
    %v2765 = vunpack.c.l.b16 %v2629
    %v2766 = vunpack.c.l.b16 %v2630
    %v2767 = vunpack.c.l.b16 %v2631
    %v2768 = vunpack.c.l.b16 %v2632
    %v2769 = vunpack.c.l.b16 %v2633
    %v2770 = vunpack.c.l.b16 %v2634
    %v2771 = vunpack.c.l.b16 %v2635
    %v2772 = vunpack.c.l.b16 %v2636
    %v2773 = vunpack.c.l.b16 %v2637
    %v2774 = vunpack.c.l.b16 %v2638
    %v2775 = vunpack.c.l.b16 %v2639
    %v2776 = vunpack.c.l.b16 %v2640
    %v2777 = vunpack.c.l.b16 %v2641
    %v2778 = vunpack.c.l.b16 %v2642
    %v2779 = vunpack.c.l.b16 %v2643
    %v2780 = vunpack.c.l.b16 %v2644
    %v2781 = vunpack.c.l.b16 %v2645
    %v2782 = vunpack.c.l.b16 %v2646
    %v2783 = vunpack.c.l.b16 %v2647
    %v2784 = vunpack.c.l.b16 %v2648
    %v2785 = vunpack.c.l.b16 %v2649
    %v2786 = vunpack.c.l.b16 %v2650
    %v2787 = vunpack.c.l.b16 %v2651
    %v2788 = vunpack.c.l.b16 %v2652
    %v2789 = vunpack.c.l.b16 %v2653
    %v2790 = vunpack.c.l.b16 %v2654
    %v2791 = vunpack.c.l.b16 %v2655
    %v2792 = vunpack.c.l.b16 %v2656
    %v2793 = vunpack.c.l.b16 %v2657
    %v2794 = vunpack.c.l.b16 %v2658
    %v2795 = vunpack.c.l.b16 %v2659
    %v2796 = vunpack.c.l.b16 %v2660
    %v2797 = vunpack.c.l.b16 %v2661
    %v2798 = vunpack.c.l.b16 %v2662
    %v2799 = vunpack.c.l.b16 %v2663
    %v2800 = vunpack.c.l.b16 %v2664
    %v2801 = vunpack.c.l.b16 %v2665
    %v2802 = vunpack.c.l.b16 %v2666
    %v2803 = vpack.c.b16 %v2740, %v2739
    %v2804 = vpack.c.b16 %v2742, %v2741
    %v2805 = vpack.c.b16 %v2744, %v2743
    %v2806 = vpack.c.b16 %v2746, %v2745
    %v2807 = vpack.c.b16 %v2748, %v2747
    %v2808 = vpack.c.b16 %v2750, %v2749
    %v2809 = vpack.c.b16 %v2752, %v2751
    %v2810 = vpack.c.b16 %v2754, %v2753
    %v2811 = vpack.c.b16 %v2756, %v2755
    %v2812 = vpack.c.b16 %v2758, %v2757
    %v2813 = vpack.c.b16 %v2760, %v2759
    %v2814 = vpack.c.b16 %v2762, %v2761
    %v2815 = vpack.c.b16 %v2764, %v2763
    %v2816 = vpack.c.b16 %v2766, %v2765
    %v2817 = vpack.c.b16 %v2768, %v2767
    %v2818 = vpack.c.b16 %v2770, %v2769
    %v2819 = vpack.c.b16 %v2772, %v2771
    %v2820 = vpack.c.b16 %v2774, %v2773
    %v2821 = vpack.c.b16 %v2776, %v2775
    %v2822 = vpack.c.b16 %v2778, %v2777
    %v2823 = vpack.c.b16 %v2780, %v2779
    %v2824 = vpack.c.b16 %v2782, %v2781
    %v2825 = vpack.c.b16 %v2784, %v2783
    %v2826 = vpack.c.b16 %v2786, %v2785
    %v2827 = vpack.c.b16 %v2788, %v2787
    %v2828 = vpack.c.b16 %v2790, %v2789
    %v2829 = vpack.c.b16 %v2792, %v2791
    %v2830 = vpack.c.b16 %v2794, %v2793
    %v2831 = vpack.c.b16 %v2796, %v2795
    %v2832 = vpack.c.b16 %v2798, %v2797
    %v2833 = vpack.c.b16 %v2800, %v2799
    %v2834 = vpack.c.b16 %v2802, %v2801
    %2867 = vmatpush.bf16.msra.mxu0 %v2674
    %2868 = vmatpush.bf16.msra.mxu0 %v2673
    %2869 = vmatpush.bf16.msra.mxu0 %v2672
    %2870 = vmatpush.bf16.msra.mxu0 %v2671
    %2871 = vmatpush.bf16.msra.mxu0 %v2670
    %2872 = vmatpush.bf16.msra.mxu0 %v2669
    %2873 = vmatpush.bf16.msra.mxu0 %v2668
    %2874 = vmatpush.bf16.msra.mxu0 %v2667
    %2875 = vmatmul.bf16.gmra.mxu0 %v2803
    %v2876 = vpop.f32.mrf.mxu0
    %v2877 = vadd.f32 0.0, %v2876
    %v2878 = vpop.f32.mrf.mxu0
    %v2879 = vadd.f32 0.0, %v2878
    %2880 = vmatmul.bf16.gmra.mxu0 %v2804
    %v2881 = vpop.f32.mrf.mxu0
    %v2882 = vadd.f32 0.0, %v2881
    %v2883 = vpop.f32.mrf.mxu0
    %v2884 = vadd.f32 0.0, %v2883
    %2885 = vmatmul.bf16.gmra.mxu0 %v2805
    %v2886 = vpop.f32.mrf.mxu0
    %v2887 = vadd.f32 0.0, %v2886
    %v2888 = vpop.f32.mrf.mxu0
    %v2889 = vadd.f32 0.0, %v2888
    %2890 = vmatmul.bf16.gmra.mxu0 %v2806
    %v2891 = vpop.f32.mrf.mxu0
    %v2892 = vadd.f32 0.0, %v2891
    %v2893 = vpop.f32.mrf.mxu0
    %v2894 = vadd.f32 0.0, %v2893
    %2895 = vmatmul.bf16.gmra.mxu0 %v2807
    %v2896 = vpop.f32.mrf.mxu0
    %v2897 = vadd.f32 0.0, %v2896
    %v2898 = vpop.f32.mrf.mxu0
    %v2899 = vadd.f32 0.0, %v2898
    %2900 = vmatmul.bf16.gmra.mxu0 %v2808
    %v2901 = vpop.f32.mrf.mxu0
    %v2902 = vadd.f32 0.0, %v2901
    %v2903 = vpop.f32.mrf.mxu0
    %v2904 = vadd.f32 0.0, %v2903
    %2905 = vmatmul.bf16.gmra.mxu0 %v2809
    %v2906 = vpop.f32.mrf.mxu0
    %v2907 = vadd.f32 0.0, %v2906
    %v2908 = vpop.f32.mrf.mxu0
    %v2909 = vadd.f32 0.0, %v2908
    %2910 = vmatmul.bf16.gmra.mxu0 %v2810
    %v2911 = vpop.f32.mrf.mxu0
    %v2912 = vadd.f32 0.0, %v2911
    %v2913 = vpop.f32.mrf.mxu0
    %v2914 = vadd.f32 0.0, %v2913
    %2915 = vmatmul.bf16.gmra.mxu0 %v2811
    %v2916 = vpop.f32.mrf.mxu0
    %v2917 = vadd.f32 0.0, %v2916
    %v2918 = vpop.f32.mrf.mxu0
    %v2919 = vadd.f32 0.0, %v2918
    %2920 = vmatmul.bf16.gmra.mxu0 %v2812
    %v2921 = vpop.f32.mrf.mxu0
    %v2922 = vadd.f32 0.0, %v2921
    %v2923 = vpop.f32.mrf.mxu0
    %v2924 = vadd.f32 0.0, %v2923
    %2925 = vmatmul.bf16.gmra.mxu0 %v2813
    %v2926 = vpop.f32.mrf.mxu0
    %v2927 = vadd.f32 0.0, %v2926
    %v2928 = vpop.f32.mrf.mxu0
    %v2929 = vadd.f32 0.0, %v2928
    %2930 = vmatmul.bf16.gmra.mxu0 %v2814
    %v2931 = vpop.f32.mrf.mxu0
    %v2932 = vadd.f32 0.0, %v2931
    %v2933 = vpop.f32.mrf.mxu0
    %v2934 = vadd.f32 0.0, %v2933
    %2935 = vmatmul.bf16.gmra.mxu0 %v2815
    %v2936 = vpop.f32.mrf.mxu0
    %v2937 = vadd.f32 0.0, %v2936
    %v2938 = vpop.f32.mrf.mxu0
    %v2939 = vadd.f32 0.0, %v2938
    %2940 = vmatmul.bf16.gmra.mxu0 %v2816
    %v2941 = vpop.f32.mrf.mxu0
    %v2942 = vadd.f32 0.0, %v2941
    %v2943 = vpop.f32.mrf.mxu0
    %v2944 = vadd.f32 0.0, %v2943
    %2945 = vmatmul.bf16.gmra.mxu0 %v2817
    %v2946 = vpop.f32.mrf.mxu0
    %v2947 = vadd.f32 0.0, %v2946
    %v2948 = vpop.f32.mrf.mxu0
    %v2949 = vadd.f32 0.0, %v2948
    %2950 = vmatmul.bf16.gmra.mxu0 %v2818
    %v2951 = vpop.f32.mrf.mxu0
    %v2952 = vadd.f32 0.0, %v2951
    %v2953 = vpop.f32.mrf.mxu0
    %v2954 = vadd.f32 0.0, %v2953
    %2955 = vmatmul.bf16.gmra.mxu0 %v2819
    %v2956 = vpop.f32.mrf.mxu0
    %v2957 = vadd.f32 0.0, %v2956
    %v2958 = vpop.f32.mrf.mxu0
    %v2959 = vadd.f32 0.0, %v2958
    %2960 = vmatmul.bf16.gmra.mxu0 %v2820
    %v2961 = vpop.f32.mrf.mxu0
    %v2962 = vadd.f32 0.0, %v2961
    %v2963 = vpop.f32.mrf.mxu0
    %v2964 = vadd.f32 0.0, %v2963
    %2965 = vmatmul.bf16.gmra.mxu0 %v2821
    %v2966 = vpop.f32.mrf.mxu0
    %v2967 = vadd.f32 0.0, %v2966
    %v2968 = vpop.f32.mrf.mxu0
    %v2969 = vadd.f32 0.0, %v2968
    %2970 = vmatmul.bf16.gmra.mxu0 %v2822
    %v2971 = vpop.f32.mrf.mxu0
    %v2972 = vadd.f32 0.0, %v2971
    %v2973 = vpop.f32.mrf.mxu0
    %v2974 = vadd.f32 0.0, %v2973
    %2975 = vmatmul.bf16.gmra.mxu0 %v2823
    %v2976 = vpop.f32.mrf.mxu0
    %v2977 = vadd.f32 0.0, %v2976
    %v2978 = vpop.f32.mrf.mxu0
    %v2979 = vadd.f32 0.0, %v2978
    %2980 = vmatmul.bf16.gmra.mxu0 %v2824
    %v2981 = vpop.f32.mrf.mxu0
    %v2982 = vadd.f32 0.0, %v2981
    %v2983 = vpop.f32.mrf.mxu0
    %v2984 = vadd.f32 0.0, %v2983
    %2985 = vmatmul.bf16.gmra.mxu0 %v2825
    %v2986 = vpop.f32.mrf.mxu0
    %v2987 = vadd.f32 0.0, %v2986
    %v2988 = vpop.f32.mrf.mxu0
    %v2989 = vadd.f32 0.0, %v2988
    %2990 = vmatmul.bf16.gmra.mxu0 %v2826
    %v2991 = vpop.f32.mrf.mxu0
    %v2992 = vadd.f32 0.0, %v2991
    %v2993 = vpop.f32.mrf.mxu0
    %v2994 = vadd.f32 0.0, %v2993
    %2995 = vmatmul.bf16.gmra.mxu0 %v2827
    %v2996 = vpop.f32.mrf.mxu0
    %v2997 = vadd.f32 0.0, %v2996
    %v2998 = vpop.f32.mrf.mxu0
    %v2999 = vadd.f32 0.0, %v2998
    %3000 = vmatmul.bf16.gmra.mxu0 %v2828
    %v3001 = vpop.f32.mrf.mxu0
    %v3002 = vadd.f32 0.0, %v3001
    %v3003 = vpop.f32.mrf.mxu0
    %v3004 = vadd.f32 0.0, %v3003
    %3005 = vmatmul.bf16.gmra.mxu0 %v2829
    %v3006 = vpop.f32.mrf.mxu0
    %v3007 = vadd.f32 0.0, %v3006
    %v3008 = vpop.f32.mrf.mxu0
    %v3009 = vadd.f32 0.0, %v3008
    %3010 = vmatmul.bf16.gmra.mxu0 %v2830
    %v3011 = vpop.f32.mrf.mxu0
    %v3012 = vadd.f32 0.0, %v3011
    %v3013 = vpop.f32.mrf.mxu0
    %v3014 = vadd.f32 0.0, %v3013
    %3015 = vmatmul.bf16.gmra.mxu0 %v2831
    %v3016 = vpop.f32.mrf.mxu0
    %v3017 = vadd.f32 0.0, %v3016
    %v3018 = vpop.f32.mrf.mxu0
    %v3019 = vadd.f32 0.0, %v3018
    %3020 = vmatmul.bf16.gmra.mxu0 %v2832
    %v3021 = vpop.f32.mrf.mxu0
    %v3022 = vadd.f32 0.0, %v3021
    %v3023 = vpop.f32.mrf.mxu0
    %v3024 = vadd.f32 0.0, %v3023
    %3025 = vmatmul.bf16.gmra.mxu0 %v2833
    %v3026 = vpop.f32.mrf.mxu0
    %v3027 = vadd.f32 0.0, %v3026
    %v3028 = vpop.f32.mrf.mxu0
    %v3029 = vadd.f32 0.0, %v3028
    %3030 = vmatmul.bf16.gmra.mxu0 %v2834
    %v3031 = vpop.f32.mrf.mxu0
    %v3032 = vadd.f32 0.0, %v3031
    %v3033 = vpop.f32.mrf.mxu0
    %v3034 = vadd.f32 0.0, %v3033
    %3035 = vdwg.mxu0
    %v3036 = vmul.f32 %v2957, %v2997
    %v3037 = vmul.f32 %v2959, %v2999
    %v3038 = vmul.f32 %v2962, %v3002
    %v3039 = vmul.f32 %v2964, %v3004
    %v3040 = vmul.f32 %v2967, %v3007
    %v3041 = vmul.f32 %v2969, %v3009
    %v3042 = vmul.f32 %v2972, %v3012
    %v3043 = vmul.f32 %v2974, %v3014
    %v3044 = vmul.f32 %v2977, %v3017
    %v3045 = vmul.f32 %v2979, %v3019
    %v3046 = vmul.f32 %v2982, %v3022
    %v3047 = vmul.f32 %v2984, %v3024
    %v3048 = vmul.f32 %v2987, %v3027
    %v3049 = vmul.f32 %v2989, %v3029
    %v3050 = vmul.f32 %v2992, %v3032
    %v3051 = vmul.f32 %v2994, %v3034
    %v3052 = vmul.f32 %v2877, %v2917
    %v3053 = vmul.f32 %v2879, %v2919
    %v3054 = vmul.f32 %v2882, %v2922
    %v3055 = vmul.f32 %v2884, %v2924
    %v3056 = vmul.f32 %v2887, %v2927
    %v3057 = vmul.f32 %v2889, %v2929
    %v3058 = vmul.f32 %v2892, %v2932
    %v3059 = vmul.f32 %v2894, %v2934
    %v3060 = vmul.f32 %v2897, %v2937
    %v3061 = vmul.f32 %v2899, %v2939
    %v3062 = vmul.f32 %v2902, %v2942
    %v3063 = vmul.f32 %v2904, %v2944
    %v3064 = vmul.f32 %v2907, %v2947
    %v3065 = vmul.f32 %v2909, %v2949
    %v3066 = vmul.f32 %v2912, %v2952
    %v3067 = vmul.f32 %v2914, %v2954
    %v3068 = vsub.f32 %v3036, %v3052
    %v3069 = vsub.f32 %v3037, %v3053
    %v3070 = vsub.f32 %v3038, %v3054
    %v3071 = vsub.f32 %v3039, %v3055
    %v3072 = vsub.f32 %v3040, %v3056
    %v3073 = vsub.f32 %v3041, %v3057
    %v3074 = vsub.f32 %v3042, %v3058
    %v3075 = vsub.f32 %v3043, %v3059
    %v3076 = vsub.f32 %v3044, %v3060
    %v3077 = vsub.f32 %v3045, %v3061
    %v3078 = vsub.f32 %v3046, %v3062
    %v3079 = vsub.f32 %v3047, %v3063
    %v3080 = vsub.f32 %v3048, %v3064
    %v3081 = vsub.f32 %v3049, %v3065
    %v3082 = vsub.f32 %v3050, %v3066
    %v3083 = vsub.f32 %v3051, %v3067
    %v3084 = vld [vmem:[%s16] sm:$0x1]
    %3085 = vmatpush.xpose.msra.mxu0 %v3083
    %3086 = vmatpush.xpose.msra.mxu0 %v3082
    %3087 = vmatpush.xpose.msra.mxu0 %v3081
    %3088 = vmatpush.xpose.msra.mxu0 %v3080
    %3089 = vmatpush.xpose.msra.mxu0 %v3079
    %3090 = vmatpush.xpose.msra.mxu0 %v3078
    %3091 = vmatpush.xpose.msra.mxu0 %v3077
    %3092 = vmatpush.xpose.msra.mxu0 %v3076
    %3093 = vmatpush.xpose.msra.mxu0 %v3075
    %3094 = vmatpush.xpose.msra.mxu0 %v3074
    %3095 = vmatpush.xpose.msra.mxu0 %v3073
    %3096 = vmatpush.xpose.msra.mxu0 %v3072
    %3097 = vmatpush.xpose.msra.mxu0 %v3071
    %3098 = vmatpush.xpose.msra.mxu0 %v3070
    %3099 = vmatpush.xpose.msra.mxu0 %v3069
    %3100 = vmatpush.xpose.msra.mxu0 %v3068
    %3101 = vmatmul.f32.gmra.mxu0 1.0
    %v3102 = vpop.f32.mrf.mxu0
    %v3103 = vadd.f32 %v3084, %v3102
    %3104 = vdwg.mxu0
    %v3105 = vadd.f32 %v3103, 1.0
    %v3106 = vmax.f32 %v3105, 0.0
    %3107 = vst [vmem:[#allocation25] sm:$0x1] %v3106
    // Predicated region
    $region110: #{tpu_custom_call.1} parent=1 // pred_check
      _
    $region111: #{tpu_custom_call.1} parent=1 // pred_check_branch
      %3109 = sbr.rel (0) target = $region113
    $region112: #{tpu_custom_call.1} parent=1 // pred_region
      %3111 = vsyncadd [#allocation10], 0
      %s3113 = sshll.u32 [#allocation25], 4
      %s3114 = int_to_ptr.vmem [resolvable:$true] %s3113
      %s3115 = sshll.u32 %s17, 4
      %s3116 = int_to_ptr.hbm [resolvable:$true] %s3115
      %3118 = dma.vmem_to_hbm [thread:$0]  %s3114, 16, %s3116, [#allocation10]
    $region113: #{tpu_custom_call.1} parent=1 // pred_fallthru
      _
    // Predicated region
    $region114: #{tpu_custom_call.1} parent=1 // pred_check
      _
    $region115: #{tpu_custom_call.1} parent=1 // pred_check_branch
      %3120 = sbr.rel (0) target = $region117
    $region116: #{tpu_custom_call.1} parent=1 // pred_region
      %3122 = dma.done [#allocation10], 16
    $region117: #{tpu_custom_call.1} parent=1 // pred_fallthru
      _
    %3123 = vsyncpa [#allocation9], 1
    %3124 = vsyncpa [#allocation12], 1
    %3125 = vsyncpa [#allocation15], 1
    %3126 = vsyncpa [#allocation18], 1
    %3127 = vsyncpa [#allocation21], 1
    %3128 = vsyncpa [#allocation24], 1
    %3129 = vsyncpa [#allocation10], 1
  %3130 = vsyncmov [#allocation7]
  %s3131 = vpop.sfrf %3130
  %p3132 = scmp.eq.s32.totalorder %s3131, 0
  %p3133 = pneg %p3132
  %3135 = shalt.err (%p3133)
  %s3136 = scalar_lea.sflag [#allocation7], 1
  %3137 = vsyncmov %s3136
  %s3138 = vpop.sfrf %3137
  %p3139 = scmp.eq.s32.totalorder %s3138, 0
  %p3140 = pneg %p3139
  %3142 = shalt.err (%p3140)
  %s3143 = scalar_lea.sflag [#allocation7], 2
  %3144 = vsyncmov %s3143
  %s3145 = vpop.sfrf %3144
  %p3146 = scmp.eq.s32.totalorder %s3145, 0
  %p3147 = pneg %p3146
  %3149 = shalt.err (%p3147)
  %s3150 = scalar_lea.sflag [#allocation7], 3
  %3151 = vsyncmov %s3150
  %s3152 = vpop.sfrf %3151
  %p3153 = scmp.eq.s32.totalorder %s3152, 0
  %p3154 = pneg %p3153
  %3156 = shalt.err (%p3154)

</llo_original>
